<compile_context>
chip_gen: v7x
topology: tpu7x:2x2x1
jax: 0.10.0
libtpu: 0.0.40
codegen_flags: <defaults>
</compile_context>

<pallas_src>
import jax
import jax.numpy as jnp
import numpy as np
from jax import lax
from jax.experimental import pallas as pl
from jax.experimental.pallas import tpu as pltpu

PADA = 128           # lane-aligned halo on each side of the padded activation
MAX_LANES = 4096     # cap on B*hw lanes per grid step (bounds im2col scratch)


def _pick_batch(n, hw):
    """Images per grid step: amortize step overhead, keep >= 2 grid steps."""
    b = max(1, (n + 1) // 2)                 # cdiv(n, 2): >=2 steps when n>=2
    b = min(b, max(1, MAX_LANES // hw))
    return b


def _shift_masks(h, w, ksize, batch):
    """(k*k, batch*h*w) combined vertical+horizontal validity masks."""
    hw = h * w
    r = np.arange(hw) // w
    c = np.arange(hw) % w
    half = ksize // 2
    rows = []
    for dh in range(-half, half + 1):
        for dw in range(-half, half + 1):
            rows.append((r + dh >= 0) & (r + dh < h) &
                        (c + dw >= 0) & (c + dw < w))
    m = np.stack(rows).astype(np.float32)               # (k*k, hw)
    return jnp.asarray(np.tile(m, (1, batch)))          # (k*k, batch*hw)


def fsrcnn22_forward(x, params):
    """x: (N, 3, H, W) float32 NCHW.  Returns (N, 3, 2H, 2W) (FSRCNN22)."""
    (w1, b1, a1, w2, b2, a2, w3, b3, a3, w4, b4, a4, w6, b6) = params
    n, cin, h, w = x.shape
    assert cin == 3
    hw = h * w
    assert hw % 128 == 0, "lane-dense design assumes h*w % 128 == 0"
    assert 2 * w + 2 <= PADA, "5x5 halo must fit the 128-lane aligned pad"
    f32 = jnp.float32

    B = _pick_batch(n, hw)
    G = -(-n // B)                     # grid steps
    n_pad = G * B
    L = B * hw                         # lanes per grid step
    pw = PADA + L + PADA               # padded activation width

    # ---------------- wrapper-side parameter packing (weights only) --------
    # conv1 weights -> (32, 200): K ordered [kh][kw][cin padded 3->8].
    w1r = jnp.concatenate(
        [jnp.transpose(w1, (0, 2, 3, 1)).astype(f32),
         jnp.zeros((32, 5, 5, 5), f32)], axis=3).reshape(32, 200)
    w2r = w2.reshape(8, 32).astype(f32)
    # conv3 as 9 stacked (8_out, 8_in) matrices: rows [(kh*3+kw)*8 + out].
    w3r = jnp.transpose(w3, (2, 3, 0, 1)).astype(f32).reshape(72, 8)
    w4r = w4.reshape(64, 8).astype(f32)
    # conv6 (1x1, 16->3) folded through PixelShuffle(2):
    #   z[p*3 + o, s] = sum_c w6[o, c] * h4[4*c + p, s] + b6[o], p = 2*di + dj
    # padded 12 -> 16 output rows so the final store is unmasked.
    w6m = w6.reshape(3, 16).astype(f32)
    w6eff = (w6m[None, :, :, None] *
             jnp.eye(4, dtype=f32)[:, None, None, :]).reshape(12, 64)
    w6eff = jnp.concatenate([w6eff, jnp.zeros((4, 64), f32)], axis=0)  # (16,64)
    b6eff = jnp.concatenate([jnp.tile(b6.astype(f32), 4),
                             jnp.zeros((4,), f32)])                    # (16,)

    # One packed weight slab (all row offsets multiples of 8) + one bias slab.
    w_slab = jnp.zeros((192, 200), f32)
    w_slab = w_slab.at[0:32, 0:200].set(w1r)       # conv1
    w_slab = w_slab.at[32:40, 0:32].set(w2r)       # conv2
    w_slab = w_slab.at[40:112, 0:8].set(w3r)       # conv3 (9 x 8x8)
    w_slab = w_slab.at[112:176, 0:8].set(w4r)      # conv4
    w_slab = w_slab.at[176:192, 0:64].set(w6eff)   # conv6 folded (padded)
    b_slab = jnp.concatenate(
        [b1.astype(f32), b2.astype(f32), b3.astype(f32), b4.astype(f32),
         b6eff]).reshape(128, 1)
    alphas = jnp.stack([jnp.asarray(a, dtype=f32).reshape(())
                        for a in (a1, a2, a3, a4)])               # (4,)

    # Combined per-shift validity masks (also kill cross-image leakage).
    mask5 = _shift_masks(h, w, 5, B)               # (25, L)
    mask3 = _shift_masks(h, w, 3, B)               # (9, L)

    # Pack B images contiguously on the lane axis: lane = b*hw + (r*w + c).
    x_flat = x.reshape(n, 3, hw).astype(f32)
    if n_pad != n:
        x_flat = jnp.concatenate(
            [x_flat, jnp.zeros((n_pad - n, 3, hw), f32)], axis=0)
    x_packed = x_flat.reshape(G, B, 3, hw).transpose(0, 2, 1, 3).reshape(G, 3, L)

    # ------------------------------ fused kernel ---------------------------
    def kernel(x_ref, m5_ref, m3_ref, w_ref, b_ref, alpha_ref,
               o_ref, pad1_ref, p1_ref, pad3_ref):

        def prelu(y, a):
            return jnp.where(y >= 0.0, y, a * y)

        x_im = x_ref[0]                                            # (3, L)

        # ---- conv1: 5x5, 3->32, pad 2, PReLU (single K=200 im2col GEMM) ---
        # Re-zero the padded buffer every step: scratch persists across grid
        # steps and holds garbage on each core's first step (0 * NaN would
        # poison the GEMM), and with ("parallel",) only one core sees step 0.
        pad1_ref[...] = jnp.zeros(pad1_ref.shape, jnp.float32)
        pad1_ref[0:3, PADA:PADA + L] = x_im                # lane-aligned store

        idx = 0
        for dh in range(-2, 3):
            for dw in range(-2, 3):
                off = PADA + dh * w + dw                   # static python int
                p1_ref[idx * 8:(idx + 1) * 8, :] = (
                    pad1_ref[:, off:off + L] * m5_ref[idx:idx + 1, :])
                idx += 1
        h1 = jnp.dot(w_ref[0:32, 0:200], p1_ref[...],
                     preferred_element_type=jnp.float32)
        h1 = prelu(h1 + b_ref[0:32, :], alpha_ref[0])              # (32, L)

        # ---- conv2: 1x1, 32->8, PReLU --------------------------------------
        h2 = jnp.dot(w_ref[32:40, 0:32], h1,
                     preferred_element_type=jnp.float32)
        h2 = prelu(h2 + b_ref[32:40, :], alpha_ref[1])             # (8, L)

        # ---- conv3: 3x3, 8->8, pad 1, PReLU --------------------------------
        # 9 accumulating (8,8)@(8,L) GEMMs on masked shifted slices: no patch
        # buffer, no patch stores; the (8, L) accumulator stays small.
        pad3_ref[...] = jnp.zeros(pad3_ref.shape, jnp.float32)
        pad3_ref[:, PADA:PADA + L] = h2                    # lane-aligned store

        h3 = jnp.zeros((8, L), jnp.float32)
        idx = 0
        for dh in range(-1, 2):
            for dw in range(-1, 2):
                off = PADA + dh * w + dw
                piece = pad3_ref[:, off:off + L] * m3_ref[idx:idx + 1, :]
                h3 = h3 + jnp.dot(w_ref[40 + idx * 8:48 + idx * 8, 0:8],
                                  piece, preferred_element_type=jnp.float32)
                idx += 1
        h3 = prelu(h3 + b_ref[40:48, :], alpha_ref[2])             # (8, L)

        # ---- conv4: 1x1, 8->64, PReLU --------------------------------------
        h4 = jnp.dot(w_ref[112:176, 0:8], h3,
                     preferred_element_type=jnp.float32)
        h4 = prelu(h4 + b_ref[48:112, :], alpha_ref[3])            # (64, L)

        # ---- conv6 folded through PixelShuffle(2), + sigmoid ---------------
        # 16 output rows (12 real + 4 zero-weight pad) -> unmasked store.
        z = jnp.dot(w_ref[176:192, 0:64], h4,
                    preferred_element_type=jnp.float32)
        z = z + b_ref[112:128, :]                                  # (16, L)
        o_ref[0] = 1.0 / (1.0 + jnp.exp(-z))

    z = pl.pallas_call(
        kernel,
        out_shape=jax.ShapeDtypeStruct((G, 16, L), f32),
        grid_spec=pltpu.PrefetchScalarGridSpec(
            num_scalar_prefetch=0,
            grid=(G,),
            in_specs=[
                pl.BlockSpec((1, 3, L), lambda i: (i, 0, 0)),        # images
                pl.BlockSpec((25, L), lambda i: (0, 0)),             # 5x5 masks
                pl.BlockSpec((9, L), lambda i: (0, 0)),              # 3x3 masks
                pl.BlockSpec((192, 200), lambda i: (0, 0)),          # weights
                pl.BlockSpec((128, 1), lambda i: (0, 0)),            # biases
                pl.BlockSpec(memory_space=pltpu.MemorySpace.SMEM),   # alphas
            ],
            out_specs=pl.BlockSpec((1, 16, L), lambda i: (i, 0, 0)),
            scratch_shapes=[
                pltpu.VMEM((8, pw), f32),      # conv1 padded input (aligned)
                pltpu.VMEM((200, L), f32),     # conv1 im2col patches
                pltpu.VMEM((8, pw), f32),      # conv3 padded input (aligned)
            ]),
        compiler_params=pltpu.CompilerParams(
            dimension_semantics=("parallel",),
            vmem_limit_bytes=64 * 1024 * 1024),
    )(x_packed, mask5, mask3, w_slab, b_slab, alphas)

    # Unpack lane-batched, row-padded output; residual PixelShuffle
    # permutation is pure layout (tiny), done in the wrapper:
    #   z[n, (2*di+dj)*3 + o, i*W + j]  ->  out[n, o, 2*i+di, 2*j+dj]
    z = z.reshape(G, 16, B, hw).transpose(0, 2, 1, 3).reshape(n_pad, 16, hw)
    z = z[:n, :12]
    z = z.reshape(n, 2, 2, 3, h, w)                    # (n, di, dj, o, i, j)
    out = jnp.transpose(z, (0, 3, 4, 1, 5, 2)).reshape(n, 3, 2 * h, 2 * w)
    return out


def _reference(x, params):
    """Pure-JAX reference of the PyTorch FSRCNN22 forward."""
    (w1, b1, a1, w2, b2, a2, w3, b3, a3, w4, b4, a4, w6, b6) = params

    def pconv(t, wgt, bias, alpha, pad):
        y = lax.conv_general_dilated(
            t, wgt, window_strides=(1, 1),
            padding=[(pad, pad), (pad, pad)],
            dimension_numbers=("NCHW", "OIHW", "NCHW"))
        y = y + bias.reshape(1, -1, 1, 1)
        return jnp.where(y >= 0, y, alpha * y)

    y = pconv(x, w1, b1, a1, 2)
    y = pconv(y, w2, b2, a2, 0)
    y = pconv(y, w3, b3, a3, 1)
    y = pconv(y, w4, b4, a4, 0)
    # PixelShuffle(2)
    n, c, hh, ww = y.shape
    y = y.reshape(n, c // 4, 2, 2, hh, ww)
    y = jnp.transpose(y, (0, 1, 4, 2, 5, 3)).reshape(n, c // 4, 2 * hh, 2 * ww)
    # conv6 (1x1) + sigmoid
    y = lax.conv_general_dilated(
        y, w6, window_strides=(1, 1), padding=[(0, 0), (0, 0)],
        dimension_numbers=("NCHW", "OIHW", "NCHW"))
    y = y + b6.reshape(1, -1, 1, 1)
    return jax.nn.sigmoid(y)


if __name__ == "__main__":
    N, H, W = 2, 16, 16
    key = jax.random.PRNGKey(0)
    keys = jax.random.split(key, 6)

    def conv_init(k, cout, cin, ksz):
        kw_, kb_ = jax.random.split(k)
        bound = 1.0 / np.sqrt(cin * ksz * ksz)
        wgt = jax.random.uniform(kw_, (cout, cin, ksz, ksz), jnp.float32,
                                 -bound, bound)
        bias = jax.random.uniform(kb_, (cout,), jnp.float32, -bound, bound)
        return wgt, bias

    x = jax.random.normal(keys[0], (N, 3, H, W), dtype=jnp.float32)
    w1, b1 = conv_init(keys[1], 32, 3, 5)
    w2, b2 = conv_init(keys[2], 8, 32, 1)
    w3, b3 = conv_init(keys[3], 8, 8, 3)
    w4, b4 = conv_init(keys[4], 64, 8, 1)
    w6, b6 = conv_init(keys[5], 3, 16, 1)
    # PReLU slopes (distinct values make the test sensitive to alpha indexing).
    a1, a2, a3, a4 = (jnp.float32(0.25), jnp.float32(0.1),
                      jnp.float32(0.3), jnp.float32(0.05))

    params = (w1, b1, a1, w2, b2, a2, w3, b3, a3, w4, b4, a4, w6, b6)

    out = jax.block_until_ready(jax.jit(fsrcnn22_forward)(x, params))
    ref = _reference(x, params)

    assert out.shape == (N, 3, 2 * H, 2 * W)
    np.testing.assert_allclose(np.asarray(out), np.asarray(ref),
                               atol=5e-4, rtol=5e-4)
    print("KERNEL_OK")
</pallas_src>

<mosaic_0001>
module attributes {stable_mosaic.version = 11 : i64} {
  func.func @kernel(%arg0: i32, %arg1: memref<1x3x256xf32, #tpu.memory_space<vmem>>, %arg2: memref<25x256xf32, #tpu.memory_space<vmem>>, %arg3: memref<9x256xf32, #tpu.memory_space<vmem>>, %arg4: memref<192x200xf32, #tpu.memory_space<vmem>>, %arg5: memref<128x1xf32, #tpu.memory_space<vmem>>, %arg6: memref<4xf32, #tpu.memory_space<smem>>, %arg7: memref<1x16x256xf32, #tpu.memory_space<vmem>>, %arg8: memref<8x512xf32, #tpu.memory_space<vmem>>, %arg9: memref<200x256xf32, #tpu.memory_space<vmem>>, %arg10: memref<8x512xf32, #tpu.memory_space<vmem>>) attributes {dimension_semantics = [#tpu.dimension_semantics<parallel>], iteration_bounds = array<i64: 2>, scalar_prefetch = 0 : i64, scratch_operands = 3 : i64, tpu.core_type = #tpu.core_type<tc>, window_params = [{transform_indices = @transform_0, window_bounds = array<i64: 1, 3, 256>}, {pipeline_mode = #tpu.pipeline_mode<synchronous>, transform_indices = @transform_1, window_bounds = array<i64: 25, 256>}, {pipeline_mode = #tpu.pipeline_mode<synchronous>, transform_indices = @transform_2, window_bounds = array<i64: 9, 256>}, {pipeline_mode = #tpu.pipeline_mode<synchronous>, transform_indices = @transform_3, window_bounds = array<i64: 192, 200>}, {pipeline_mode = #tpu.pipeline_mode<synchronous>, transform_indices = @transform_4, window_bounds = array<i64: 128, 1>}, {transform_indices = @transform_5, window_bounds = array<i64: 4>}, {transform_indices = @transform_6, window_bounds = array<i64: 1, 16, 256>}]} {
    %c0 = arith.constant 0 : index
    %c0_0 = arith.constant 0 : index
    %c0_1 = arith.constant 0 : index
    %0 = vector.load %arg1[%c0, %c0_0, %c0_1] : memref<1x3x256xf32, #tpu.memory_space<vmem>>, vector<1x3x256xf32>
    %1 = vector.shape_cast %0 : vector<1x3x256xf32> to vector<3x256xf32>
    %cst = arith.constant 0.000000e+00 : f32
    %2 = vector.broadcast %cst : f32 to vector<8x512xf32>
    %c0_2 = arith.constant 0 : index
    %c0_3 = arith.constant 0 : index
    %3 = vector.load %arg8[%c0_2, %c0_3] : memref<8x512xf32, #tpu.memory_space<vmem>>, vector<8x512xf32>
    tpu.vector_store %arg8[%c0_2, %c0_3], %2 {strides = array<i32>} : memref<8x512xf32, #tpu.memory_space<vmem>>, vector<8x512xf32>,
    %c0_4 = arith.constant 0 : index
    %c128 = arith.constant 128 : index
    %4 = vector.load %arg8[%c0_4, %c128] : memref<8x512xf32, #tpu.memory_space<vmem>>, vector<3x256xf32>
    tpu.vector_store %arg8[%c0_4, %c128], %1 {strides = array<i32>} : memref<8x512xf32, #tpu.memory_space<vmem>>, vector<3x256xf32>,
    %c0_5 = arith.constant 0 : index
    %c94 = arith.constant 94 : index
    %5 = vector.load %arg8[%c0_5, %c94] : memref<8x512xf32, #tpu.memory_space<vmem>>, vector<8x256xf32>
    %c0_6 = arith.constant 0 : index
    %c0_7 = arith.constant 0 : index
    %6 = vector.load %arg2[%c0_6, %c0_7] : memref<25x256xf32, #tpu.memory_space<vmem>>, vector<1x256xf32>
    %7 = vector.broadcast %6 : vector<1x256xf32> to vector<8x256xf32>
    %8 = arith.mulf %5, %7 : vector<8x256xf32>
    %c0_8 = arith.constant 0 : index
    %c0_9 = arith.constant 0 : index
    %9 = vector.load %arg9[%c0_8, %c0_9] : memref<200x256xf32, #tpu.memory_space<vmem>>, vector<8x256xf32>
    tpu.vector_store %arg9[%c0_8, %c0_9], %8 {strides = array<i32>} : memref<200x256xf32, #tpu.memory_space<vmem>>, vector<8x256xf32>,
    %c0_10 = arith.constant 0 : index
    %c95 = arith.constant 95 : index
    %10 = vector.load %arg8[%c0_10, %c95] : memref<8x512xf32, #tpu.memory_space<vmem>>, vector<8x256xf32>
    %c1 = arith.constant 1 : index
    %c0_11 = arith.constant 0 : index
    %11 = vector.load %arg2[%c1, %c0_11] : memref<25x256xf32, #tpu.memory_space<vmem>>, vector<1x256xf32>
    %12 = vector.broadcast %11 : vector<1x256xf32> to vector<8x256xf32>
    %13 = arith.mulf %10, %12 : vector<8x256xf32>
    %c8 = arith.constant 8 : index
    %c0_12 = arith.constant 0 : index
    %14 = vector.load %arg9[%c8, %c0_12] : memref<200x256xf32, #tpu.memory_space<vmem>>, vector<8x256xf32>
    tpu.vector_store %arg9[%c8, %c0_12], %13 {strides = array<i32>} : memref<200x256xf32, #tpu.memory_space<vmem>>, vector<8x256xf32>,
    %c0_13 = arith.constant 0 : index
    %c96 = arith.constant 96 : index
    %15 = vector.load %arg8[%c0_13, %c96] : memref<8x512xf32, #tpu.memory_space<vmem>>, vector<8x256xf32>
    %c2 = arith.constant 2 : index
    %c0_14 = arith.constant 0 : index
    %16 = vector.load %arg2[%c2, %c0_14] : memref<25x256xf32, #tpu.memory_space<vmem>>, vector<1x256xf32>
    %17 = vector.broadcast %16 : vector<1x256xf32> to vector<8x256xf32>
    %18 = arith.mulf %15, %17 : vector<8x256xf32>
    %c16 = arith.constant 16 : index
    %c0_15 = arith.constant 0 : index
    %19 = vector.load %arg9[%c16, %c0_15] : memref<200x256xf32, #tpu.memory_space<vmem>>, vector<8x256xf32>
    tpu.vector_store %arg9[%c16, %c0_15], %18 {strides = array<i32>} : memref<200x256xf32, #tpu.memory_space<vmem>>, vector<8x256xf32>,
    %c0_16 = arith.constant 0 : index
    %c97 = arith.constant 97 : index
    %20 = vector.load %arg8[%c0_16, %c97] : memref<8x512xf32, #tpu.memory_space<vmem>>, vector<8x256xf32>
    %c3 = arith.constant 3 : index
    %c0_17 = arith.constant 0 : index
    %21 = vector.load %arg2[%c3, %c0_17] : memref<25x256xf32, #tpu.memory_space<vmem>>, vector<1x256xf32>
    %22 = vector.broadcast %21 : vector<1x256xf32> to vector<8x256xf32>
    %23 = arith.mulf %20, %22 : vector<8x256xf32>
    %c24 = arith.constant 24 : index
    %c0_18 = arith.constant 0 : index
    %24 = vector.load %arg9[%c24, %c0_18] : memref<200x256xf32, #tpu.memory_space<vmem>>, vector<8x256xf32>
    tpu.vector_store %arg9[%c24, %c0_18], %23 {strides = array<i32>} : memref<200x256xf32, #tpu.memory_space<vmem>>, vector<8x256xf32>,
    %c0_19 = arith.constant 0 : index
    %c98 = arith.constant 98 : index
    %25 = vector.load %arg8[%c0_19, %c98] : memref<8x512xf32, #tpu.memory_space<vmem>>, vector<8x256xf32>
    %c4 = arith.constant 4 : index
    %c0_20 = arith.constant 0 : index
    %26 = vector.load %arg2[%c4, %c0_20] : memref<25x256xf32, #tpu.memory_space<vmem>>, vector<1x256xf32>
    %27 = vector.broadcast %26 : vector<1x256xf32> to vector<8x256xf32>
    %28 = arith.mulf %25, %27 : vector<8x256xf32>
    %c32 = arith.constant 32 : index
    %c0_21 = arith.constant 0 : index
    %29 = vector.load %arg9[%c32, %c0_21] : memref<200x256xf32, #tpu.memory_space<vmem>>, vector<8x256xf32>
    tpu.vector_store %arg9[%c32, %c0_21], %28 {strides = array<i32>} : memref<200x256xf32, #tpu.memory_space<vmem>>, vector<8x256xf32>,
    %c0_22 = arith.constant 0 : index
    %c110 = arith.constant 110 : index
    %30 = vector.load %arg8[%c0_22, %c110] : memref<8x512xf32, #tpu.memory_space<vmem>>, vector<8x256xf32>
    %c5 = arith.constant 5 : index
    %c0_23 = arith.constant 0 : index
    %31 = vector.load %arg2[%c5, %c0_23] : memref<25x256xf32, #tpu.memory_space<vmem>>, vector<1x256xf32>
    %32 = vector.broadcast %31 : vector<1x256xf32> to vector<8x256xf32>
    %33 = arith.mulf %30, %32 : vector<8x256xf32>
    %c40 = arith.constant 40 : index
    %c0_24 = arith.constant 0 : index
    %34 = vector.load %arg9[%c40, %c0_24] : memref<200x256xf32, #tpu.memory_space<vmem>>, vector<8x256xf32>
    tpu.vector_store %arg9[%c40, %c0_24], %33 {strides = array<i32>} : memref<200x256xf32, #tpu.memory_space<vmem>>, vector<8x256xf32>,
    %c0_25 = arith.constant 0 : index
    %c111 = arith.constant 111 : index
    %35 = vector.load %arg8[%c0_25, %c111] : memref<8x512xf32, #tpu.memory_space<vmem>>, vector<8x256xf32>
    %c6 = arith.constant 6 : index
    %c0_26 = arith.constant 0 : index
    %36 = vector.load %arg2[%c6, %c0_26] : memref<25x256xf32, #tpu.memory_space<vmem>>, vector<1x256xf32>
    %37 = vector.broadcast %36 : vector<1x256xf32> to vector<8x256xf32>
    %38 = arith.mulf %35, %37 : vector<8x256xf32>
    %c48 = arith.constant 48 : index
    %c0_27 = arith.constant 0 : index
    %39 = vector.load %arg9[%c48, %c0_27] : memref<200x256xf32, #tpu.memory_space<vmem>>, vector<8x256xf32>
    tpu.vector_store %arg9[%c48, %c0_27], %38 {strides = array<i32>} : memref<200x256xf32, #tpu.memory_space<vmem>>, vector<8x256xf32>,
    %c0_28 = arith.constant 0 : index
    %c112 = arith.constant 112 : index
    %40 = vector.load %arg8[%c0_28, %c112] : memref<8x512xf32, #tpu.memory_space<vmem>>, vector<8x256xf32>
    %c7 = arith.constant 7 : index
    %c0_29 = arith.constant 0 : index
    %41 = vector.load %arg2[%c7, %c0_29] : memref<25x256xf32, #tpu.memory_space<vmem>>, vector<1x256xf32>
    %42 = vector.broadcast %41 : vector<1x256xf32> to vector<8x256xf32>
    %43 = arith.mulf %40, %42 : vector<8x256xf32>
    %c56 = arith.constant 56 : index
    %c0_30 = arith.constant 0 : index
    %44 = vector.load %arg9[%c56, %c0_30] : memref<200x256xf32, #tpu.memory_space<vmem>>, vector<8x256xf32>
    tpu.vector_store %arg9[%c56, %c0_30], %43 {strides = array<i32>} : memref<200x256xf32, #tpu.memory_space<vmem>>, vector<8x256xf32>,
    %c0_31 = arith.constant 0 : index
    %c113 = arith.constant 113 : index
    %45 = vector.load %arg8[%c0_31, %c113] : memref<8x512xf32, #tpu.memory_space<vmem>>, vector<8x256xf32>
    %c8_32 = arith.constant 8 : index
    %c0_33 = arith.constant 0 : index
    %46 = vector.load %arg2[%c8_32, %c0_33] : memref<25x256xf32, #tpu.memory_space<vmem>>, vector<1x256xf32>
    %47 = vector.broadcast %46 : vector<1x256xf32> to vector<8x256xf32>
    %48 = arith.mulf %45, %47 : vector<8x256xf32>
    %c64 = arith.constant 64 : index
    %c0_34 = arith.constant 0 : index
    %49 = vector.load %arg9[%c64, %c0_34] : memref<200x256xf32, #tpu.memory_space<vmem>>, vector<8x256xf32>
    tpu.vector_store %arg9[%c64, %c0_34], %48 {strides = array<i32>} : memref<200x256xf32, #tpu.memory_space<vmem>>, vector<8x256xf32>,
    %c0_35 = arith.constant 0 : index
    %c114 = arith.constant 114 : index
    %50 = vector.load %arg8[%c0_35, %c114] : memref<8x512xf32, #tpu.memory_space<vmem>>, vector<8x256xf32>
    %c9 = arith.constant 9 : index
    %c0_36 = arith.constant 0 : index
    %51 = vector.load %arg2[%c9, %c0_36] : memref<25x256xf32, #tpu.memory_space<vmem>>, vector<1x256xf32>
    %52 = vector.broadcast %51 : vector<1x256xf32> to vector<8x256xf32>
    %53 = arith.mulf %50, %52 : vector<8x256xf32>
    %c72 = arith.constant 72 : index
    %c0_37 = arith.constant 0 : index
    %54 = vector.load %arg9[%c72, %c0_37] : memref<200x256xf32, #tpu.memory_space<vmem>>, vector<8x256xf32>
    tpu.vector_store %arg9[%c72, %c0_37], %53 {strides = array<i32>} : memref<200x256xf32, #tpu.memory_space<vmem>>, vector<8x256xf32>,
    %c0_38 = arith.constant 0 : index
    %c126 = arith.constant 126 : index
    %55 = vector.load %arg8[%c0_38, %c126] : memref<8x512xf32, #tpu.memory_space<vmem>>, vector<8x256xf32>
    %c10 = arith.constant 10 : index
    %c0_39 = arith.constant 0 : index
    %56 = vector.load %arg2[%c10, %c0_39] : memref<25x256xf32, #tpu.memory_space<vmem>>, vector<1x256xf32>
    %57 = vector.broadcast %56 : vector<1x256xf32> to vector<8x256xf32>
    %58 = arith.mulf %55, %57 : vector<8x256xf32>
    %c80 = arith.constant 80 : index
    %c0_40 = arith.constant 0 : index
    %59 = vector.load %arg9[%c80, %c0_40] : memref<200x256xf32, #tpu.memory_space<vmem>>, vector<8x256xf32>
    tpu.vector_store %arg9[%c80, %c0_40], %58 {strides = array<i32>} : memref<200x256xf32, #tpu.memory_space<vmem>>, vector<8x256xf32>,
    %c0_41 = arith.constant 0 : index
    %c127 = arith.constant 127 : index
    %60 = vector.load %arg8[%c0_41, %c127] : memref<8x512xf32, #tpu.memory_space<vmem>>, vector<8x256xf32>
    %c11 = arith.constant 11 : index
    %c0_42 = arith.constant 0 : index
    %61 = vector.load %arg2[%c11, %c0_42] : memref<25x256xf32, #tpu.memory_space<vmem>>, vector<1x256xf32>
    %62 = vector.broadcast %61 : vector<1x256xf32> to vector<8x256xf32>
    %63 = arith.mulf %60, %62 : vector<8x256xf32>
    %c88 = arith.constant 88 : index
    %c0_43 = arith.constant 0 : index
    %64 = vector.load %arg9[%c88, %c0_43] : memref<200x256xf32, #tpu.memory_space<vmem>>, vector<8x256xf32>
    tpu.vector_store %arg9[%c88, %c0_43], %63 {strides = array<i32>} : memref<200x256xf32, #tpu.memory_space<vmem>>, vector<8x256xf32>,
    %c0_44 = arith.constant 0 : index
    %c128_45 = arith.constant 128 : index
    %65 = vector.load %arg8[%c0_44, %c128_45] : memref<8x512xf32, #tpu.memory_space<vmem>>, vector<8x256xf32>
    %c12 = arith.constant 12 : index
    %c0_46 = arith.constant 0 : index
    %66 = vector.load %arg2[%c12, %c0_46] : memref<25x256xf32, #tpu.memory_space<vmem>>, vector<1x256xf32>
    %67 = vector.broadcast %66 : vector<1x256xf32> to vector<8x256xf32>
    %68 = arith.mulf %65, %67 : vector<8x256xf32>
    %c96_47 = arith.constant 96 : index
    %c0_48 = arith.constant 0 : index
    %69 = vector.load %arg9[%c96_47, %c0_48] : memref<200x256xf32, #tpu.memory_space<vmem>>, vector<8x256xf32>
    tpu.vector_store %arg9[%c96_47, %c0_48], %68 {strides = array<i32>} : memref<200x256xf32, #tpu.memory_space<vmem>>, vector<8x256xf32>,
    %c0_49 = arith.constant 0 : index
    %c129 = arith.constant 129 : index
    %70 = vector.load %arg8[%c0_49, %c129] : memref<8x512xf32, #tpu.memory_space<vmem>>, vector<8x256xf32>
    %c13 = arith.constant 13 : index
    %c0_50 = arith.constant 0 : index
    %71 = vector.load %arg2[%c13, %c0_50] : memref<25x256xf32, #tpu.memory_space<vmem>>, vector<1x256xf32>
    %72 = vector.broadcast %71 : vector<1x256xf32> to vector<8x256xf32>
    %73 = arith.mulf %70, %72 : vector<8x256xf32>
    %c104 = arith.constant 104 : index
    %c0_51 = arith.constant 0 : index
    %74 = vector.load %arg9[%c104, %c0_51] : memref<200x256xf32, #tpu.memory_space<vmem>>, vector<8x256xf32>
    tpu.vector_store %arg9[%c104, %c0_51], %73 {strides = array<i32>} : memref<200x256xf32, #tpu.memory_space<vmem>>, vector<8x256xf32>,
    %c0_52 = arith.constant 0 : index
    %c130 = arith.constant 130 : index
    %75 = vector.load %arg8[%c0_52, %c130] : memref<8x512xf32, #tpu.memory_space<vmem>>, vector<8x256xf32>
    %c14 = arith.constant 14 : index
    %c0_53 = arith.constant 0 : index
    %76 = vector.load %arg2[%c14, %c0_53] : memref<25x256xf32, #tpu.memory_space<vmem>>, vector<1x256xf32>
    %77 = vector.broadcast %76 : vector<1x256xf32> to vector<8x256xf32>
    %78 = arith.mulf %75, %77 : vector<8x256xf32>
    %c112_54 = arith.constant 112 : index
    %c0_55 = arith.constant 0 : index
    %79 = vector.load %arg9[%c112_54, %c0_55] : memref<200x256xf32, #tpu.memory_space<vmem>>, vector<8x256xf32>
    tpu.vector_store %arg9[%c112_54, %c0_55], %78 {strides = array<i32>} : memref<200x256xf32, #tpu.memory_space<vmem>>, vector<8x256xf32>,
    %c0_56 = arith.constant 0 : index
    %c142 = arith.constant 142 : index
    %80 = vector.load %arg8[%c0_56, %c142] : memref<8x512xf32, #tpu.memory_space<vmem>>, vector<8x256xf32>
    %c15 = arith.constant 15 : index
    %c0_57 = arith.constant 0 : index
    %81 = vector.load %arg2[%c15, %c0_57] : memref<25x256xf32, #tpu.memory_space<vmem>>, vector<1x256xf32>
    %82 = vector.broadcast %81 : vector<1x256xf32> to vector<8x256xf32>
    %83 = arith.mulf %80, %82 : vector<8x256xf32>
    %c120 = arith.constant 120 : index
    %c0_58 = arith.constant 0 : index
    %84 = vector.load %arg9[%c120, %c0_58] : memref<200x256xf32, #tpu.memory_space<vmem>>, vector<8x256xf32>
    tpu.vector_store %arg9[%c120, %c0_58], %83 {strides = array<i32>} : memref<200x256xf32, #tpu.memory_space<vmem>>, vector<8x256xf32>,
    %c0_59 = arith.constant 0 : index
    %c143 = arith.constant 143 : index
    %85 = vector.load %arg8[%c0_59, %c143] : memref<8x512xf32, #tpu.memory_space<vmem>>, vector<8x256xf32>
    %c16_60 = arith.constant 16 : index
    %c0_61 = arith.constant 0 : index
    %86 = vector.load %arg2[%c16_60, %c0_61] : memref<25x256xf32, #tpu.memory_space<vmem>>, vector<1x256xf32>
    %87 = vector.broadcast %86 : vector<1x256xf32> to vector<8x256xf32>
    %88 = arith.mulf %85, %87 : vector<8x256xf32>
    %c128_62 = arith.constant 128 : index
    %c0_63 = arith.constant 0 : index
    %89 = vector.load %arg9[%c128_62, %c0_63] : memref<200x256xf32, #tpu.memory_space<vmem>>, vector<8x256xf32>
    tpu.vector_store %arg9[%c128_62, %c0_63], %88 {strides = array<i32>} : memref<200x256xf32, #tpu.memory_space<vmem>>, vector<8x256xf32>,
    %c0_64 = arith.constant 0 : index
    %c144 = arith.constant 144 : index
    %90 = vector.load %arg8[%c0_64, %c144] : memref<8x512xf32, #tpu.memory_space<vmem>>, vector<8x256xf32>
    %c17 = arith.constant 17 : index
    %c0_65 = arith.constant 0 : index
    %91 = vector.load %arg2[%c17, %c0_65] : memref<25x256xf32, #tpu.memory_space<vmem>>, vector<1x256xf32>
    %92 = vector.broadcast %91 : vector<1x256xf32> to vector<8x256xf32>
    %93 = arith.mulf %90, %92 : vector<8x256xf32>
    %c136 = arith.constant 136 : index
    %c0_66 = arith.constant 0 : index
    %94 = vector.load %arg9[%c136, %c0_66] : memref<200x256xf32, #tpu.memory_space<vmem>>, vector<8x256xf32>
    tpu.vector_store %arg9[%c136, %c0_66], %93 {strides = array<i32>} : memref<200x256xf32, #tpu.memory_space<vmem>>, vector<8x256xf32>,
    %c0_67 = arith.constant 0 : index
    %c145 = arith.constant 145 : index
    %95 = vector.load %arg8[%c0_67, %c145] : memref<8x512xf32, #tpu.memory_space<vmem>>, vector<8x256xf32>
    %c18 = arith.constant 18 : index
    %c0_68 = arith.constant 0 : index
    %96 = vector.load %arg2[%c18, %c0_68] : memref<25x256xf32, #tpu.memory_space<vmem>>, vector<1x256xf32>
    %97 = vector.broadcast %96 : vector<1x256xf32> to vector<8x256xf32>
    %98 = arith.mulf %95, %97 : vector<8x256xf32>
    %c144_69 = arith.constant 144 : index
    %c0_70 = arith.constant 0 : index
    %99 = vector.load %arg9[%c144_69, %c0_70] : memref<200x256xf32, #tpu.memory_space<vmem>>, vector<8x256xf32>
    tpu.vector_store %arg9[%c144_69, %c0_70], %98 {strides = array<i32>} : memref<200x256xf32, #tpu.memory_space<vmem>>, vector<8x256xf32>,
    %c0_71 = arith.constant 0 : index
    %c146 = arith.constant 146 : index
    %100 = vector.load %arg8[%c0_71, %c146] : memref<8x512xf32, #tpu.memory_space<vmem>>, vector<8x256xf32>
    %c19 = arith.constant 19 : index
    %c0_72 = arith.constant 0 : index
    %101 = vector.load %arg2[%c19, %c0_72] : memref<25x256xf32, #tpu.memory_space<vmem>>, vector<1x256xf32>
    %102 = vector.broadcast %101 : vector<1x256xf32> to vector<8x256xf32>
    %103 = arith.mulf %100, %102 : vector<8x256xf32>
    %c152 = arith.constant 152 : index
    %c0_73 = arith.constant 0 : index
    %104 = vector.load %arg9[%c152, %c0_73] : memref<200x256xf32, #tpu.memory_space<vmem>>, vector<8x256xf32>
    tpu.vector_store %arg9[%c152, %c0_73], %103 {strides = array<i32>} : memref<200x256xf32, #tpu.memory_space<vmem>>, vector<8x256xf32>,
    %c0_74 = arith.constant 0 : index
    %c158 = arith.constant 158 : index
    %105 = vector.load %arg8[%c0_74, %c158] : memref<8x512xf32, #tpu.memory_space<vmem>>, vector<8x256xf32>
    %c20 = arith.constant 20 : index
    %c0_75 = arith.constant 0 : index
    %106 = vector.load %arg2[%c20, %c0_75] : memref<25x256xf32, #tpu.memory_space<vmem>>, vector<1x256xf32>
    %107 = vector.broadcast %106 : vector<1x256xf32> to vector<8x256xf32>
    %108 = arith.mulf %105, %107 : vector<8x256xf32>
    %c160 = arith.constant 160 : index
    %c0_76 = arith.constant 0 : index
    %109 = vector.load %arg9[%c160, %c0_76] : memref<200x256xf32, #tpu.memory_space<vmem>>, vector<8x256xf32>
    tpu.vector_store %arg9[%c160, %c0_76], %108 {strides = array<i32>} : memref<200x256xf32, #tpu.memory_space<vmem>>, vector<8x256xf32>,
    %c0_77 = arith.constant 0 : index
    %c159 = arith.constant 159 : index
    %110 = vector.load %arg8[%c0_77, %c159] : memref<8x512xf32, #tpu.memory_space<vmem>>, vector<8x256xf32>
    %c21 = arith.constant 21 : index
    %c0_78 = arith.constant 0 : index
    %111 = vector.load %arg2[%c21, %c0_78] : memref<25x256xf32, #tpu.memory_space<vmem>>, vector<1x256xf32>
    %112 = vector.broadcast %111 : vector<1x256xf32> to vector<8x256xf32>
    %113 = arith.mulf %110, %112 : vector<8x256xf32>
    %c168 = arith.constant 168 : index
    %c0_79 = arith.constant 0 : index
    %114 = vector.load %arg9[%c168, %c0_79] : memref<200x256xf32, #tpu.memory_space<vmem>>, vector<8x256xf32>
    tpu.vector_store %arg9[%c168, %c0_79], %113 {strides = array<i32>} : memref<200x256xf32, #tpu.memory_space<vmem>>, vector<8x256xf32>,
    %c0_80 = arith.constant 0 : index
    %c160_81 = arith.constant 160 : index
    %115 = vector.load %arg8[%c0_80, %c160_81] : memref<8x512xf32, #tpu.memory_space<vmem>>, vector<8x256xf32>
    %c22 = arith.constant 22 : index
    %c0_82 = arith.constant 0 : index
    %116 = vector.load %arg2[%c22, %c0_82] : memref<25x256xf32, #tpu.memory_space<vmem>>, vector<1x256xf32>
    %117 = vector.broadcast %116 : vector<1x256xf32> to vector<8x256xf32>
    %118 = arith.mulf %115, %117 : vector<8x256xf32>
    %c176 = arith.constant 176 : index
    %c0_83 = arith.constant 0 : index
    %119 = vector.load %arg9[%c176, %c0_83] : memref<200x256xf32, #tpu.memory_space<vmem>>, vector<8x256xf32>
    tpu.vector_store %arg9[%c176, %c0_83], %118 {strides = array<i32>} : memref<200x256xf32, #tpu.memory_space<vmem>>, vector<8x256xf32>,
    %c0_84 = arith.constant 0 : index
    %c161 = arith.constant 161 : index
    %120 = vector.load %arg8[%c0_84, %c161] : memref<8x512xf32, #tpu.memory_space<vmem>>, vector<8x256xf32>
    %c23 = arith.constant 23 : index
    %c0_85 = arith.constant 0 : index
    %121 = vector.load %arg2[%c23, %c0_85] : memref<25x256xf32, #tpu.memory_space<vmem>>, vector<1x256xf32>
    %122 = vector.broadcast %121 : vector<1x256xf32> to vector<8x256xf32>
    %123 = arith.mulf %120, %122 : vector<8x256xf32>
    %c184 = arith.constant 184 : index
    %c0_86 = arith.constant 0 : index
    %124 = vector.load %arg9[%c184, %c0_86] : memref<200x256xf32, #tpu.memory_space<vmem>>, vector<8x256xf32>
    tpu.vector_store %arg9[%c184, %c0_86], %123 {strides = array<i32>} : memref<200x256xf32, #tpu.memory_space<vmem>>, vector<8x256xf32>,
    %c0_87 = arith.constant 0 : index
    %c162 = arith.constant 162 : index
    %125 = vector.load %arg8[%c0_87, %c162] : memref<8x512xf32, #tpu.memory_space<vmem>>, vector<8x256xf32>
    %c24_88 = arith.constant 24 : index
    %c0_89 = arith.constant 0 : index
    %126 = vector.load %arg2[%c24_88, %c0_89] : memref<25x256xf32, #tpu.memory_space<vmem>>, vector<1x256xf32>
    %127 = vector.broadcast %126 : vector<1x256xf32> to vector<8x256xf32>
    %128 = arith.mulf %125, %127 : vector<8x256xf32>
    %c192 = arith.constant 192 : index
    %c0_90 = arith.constant 0 : index
    %129 = vector.load %arg9[%c192, %c0_90] : memref<200x256xf32, #tpu.memory_space<vmem>>, vector<8x256xf32>
    tpu.vector_store %arg9[%c192, %c0_90], %128 {strides = array<i32>} : memref<200x256xf32, #tpu.memory_space<vmem>>, vector<8x256xf32>,
    %c0_91 = arith.constant 0 : index
    %c0_92 = arith.constant 0 : index
    %130 = vector.load %arg4[%c0_91, %c0_92] : memref<192x200xf32, #tpu.memory_space<vmem>>, vector<32x200xf32>
    %c0_93 = arith.constant 0 : index
    %c0_94 = arith.constant 0 : index
    %131 = vector.load %arg9[%c0_93, %c0_94] : memref<200x256xf32, #tpu.memory_space<vmem>>, vector<200x256xf32>
    %cst_95 = arith.constant dense<0.000000e+00> : vector<32x256xf32>
    %132 = tpu.matmul %130, %131, %cst_95 {dimension_numbers = #tpu.dot_dimension_numbers<[1], [0], [0], [1], [0, 0, 1, 1], [], []>} : vector<32x200xf32>, vector<200x256xf32>, vector<32x256xf32> -> vector<32x256xf32>
    %c0_96 = arith.constant 0 : index
    %c0_97 = arith.constant 0 : index
    %133 = vector.load %arg5[%c0_96, %c0_97] : memref<128x1xf32, #tpu.memory_space<vmem>>, vector<32x1xf32>
    %134 = vector.broadcast %133 : vector<32x1xf32> to vector<32x256xf32>
    %135 = arith.addf %132, %134 : vector<32x256xf32>
    %c0_98 = arith.constant 0 : index
    %136 = memref.load %arg6[%c0_98] : memref<4xf32, #tpu.memory_space<smem>>
    %cst_99 = arith.constant 0.000000e+00 : f32
    %137 = vector.broadcast %cst_99 : f32 to vector<32x256xf32>
    %138 = arith.cmpf oge, %135, %137 : vector<32x256xf32>
    %139 = vector.broadcast %136 : f32 to vector<32x256xf32>
    %140 = arith.mulf %139, %135 : vector<32x256xf32>
    %141 = arith.select %138, %135, %140 : vector<32x256xi1>, vector<32x256xf32>
    %c32_100 = arith.constant 32 : index
    %c0_101 = arith.constant 0 : index
    %142 = vector.load %arg4[%c32_100, %c0_101] : memref<192x200xf32, #tpu.memory_space<vmem>>, vector<8x32xf32>
    %cst_102 = arith.constant dense<0.000000e+00> : vector<8x256xf32>
    %143 = tpu.matmul %142, %141, %cst_102 {dimension_numbers = #tpu.dot_dimension_numbers<[1], [0], [0], [1], [0, 0, 1, 1], [], []>} : vector<8x32xf32>, vector<32x256xf32>, vector<8x256xf32> -> vector<8x256xf32>
    %c32_103 = arith.constant 32 : index
    %c0_104 = arith.constant 0 : index
    %144 = vector.load %arg5[%c32_103, %c0_104] : memref<128x1xf32, #tpu.memory_space<vmem>>, vector<8x1xf32>
    %145 = vector.broadcast %144 : vector<8x1xf32> to vector<8x256xf32>
    %146 = arith.addf %143, %145 : vector<8x256xf32>
    %c1_105 = arith.constant 1 : index
    %147 = memref.load %arg6[%c1_105] : memref<4xf32, #tpu.memory_space<smem>>
    %cst_106 = arith.constant 0.000000e+00 : f32
    %148 = vector.broadcast %cst_106 : f32 to vector<8x256xf32>
    %149 = arith.cmpf oge, %146, %148 : vector<8x256xf32>
    %150 = vector.broadcast %147 : f32 to vector<8x256xf32>
    %151 = arith.mulf %150, %146 : vector<8x256xf32>
    %152 = arith.select %149, %146, %151 : vector<8x256xi1>, vector<8x256xf32>
    %cst_107 = arith.constant 0.000000e+00 : f32
    %153 = vector.broadcast %cst_107 : f32 to vector<8x512xf32>
    %c0_108 = arith.constant 0 : index
    %c0_109 = arith.constant 0 : index
    %154 = vector.load %arg10[%c0_108, %c0_109] : memref<8x512xf32, #tpu.memory_space<vmem>>, vector<8x512xf32>
    tpu.vector_store %arg10[%c0_108, %c0_109], %153 {strides = array<i32>} : memref<8x512xf32, #tpu.memory_space<vmem>>, vector<8x512xf32>,
    %c0_110 = arith.constant 0 : index
    %c128_111 = arith.constant 128 : index
    %155 = vector.load %arg10[%c0_110, %c128_111] : memref<8x512xf32, #tpu.memory_space<vmem>>, vector<8x256xf32>
    tpu.vector_store %arg10[%c0_110, %c128_111], %152 {strides = array<i32>} : memref<8x512xf32, #tpu.memory_space<vmem>>, vector<8x256xf32>,
    %cst_112 = arith.constant 0.000000e+00 : f32
    %156 = vector.broadcast %cst_112 : f32 to vector<8x256xf32>
    %c0_113 = arith.constant 0 : index
    %c111_114 = arith.constant 111 : index
    %157 = vector.load %arg10[%c0_113, %c111_114] : memref<8x512xf32, #tpu.memory_space<vmem>>, vector<8x256xf32>
    %c0_115 = arith.constant 0 : index
    %c0_116 = arith.constant 0 : index
    %158 = vector.load %arg3[%c0_115, %c0_116] : memref<9x256xf32, #tpu.memory_space<vmem>>, vector<1x256xf32>
    %159 = vector.broadcast %158 : vector<1x256xf32> to vector<8x256xf32>
    %160 = arith.mulf %157, %159 : vector<8x256xf32>
    %c40_117 = arith.constant 40 : index
    %c0_118 = arith.constant 0 : index
    %161 = vector.load %arg4[%c40_117, %c0_118] : memref<192x200xf32, #tpu.memory_space<vmem>>, vector<8x8xf32>
    %cst_119 = arith.constant dense<0.000000e+00> : vector<8x256xf32>
    %162 = tpu.matmul %161, %160, %cst_119 {dimension_numbers = #tpu.dot_dimension_numbers<[1], [0], [0], [1], [0, 0, 1, 1], [], []>} : vector<8x8xf32>, vector<8x256xf32>, vector<8x256xf32> -> vector<8x256xf32>
    %163 = arith.addf %156, %162 : vector<8x256xf32>
    %c0_120 = arith.constant 0 : index
    %c112_121 = arith.constant 112 : index
    %164 = vector.load %arg10[%c0_120, %c112_121] : memref<8x512xf32, #tpu.memory_space<vmem>>, vector<8x256xf32>
    %c1_122 = arith.constant 1 : index
    %c0_123 = arith.constant 0 : index
    %165 = vector.load %arg3[%c1_122, %c0_123] : memref<9x256xf32, #tpu.memory_space<vmem>>, vector<1x256xf32>
    %166 = vector.broadcast %165 : vector<1x256xf32> to vector<8x256xf32>
    %167 = arith.mulf %164, %166 : vector<8x256xf32>
    %c48_124 = arith.constant 48 : index
    %c0_125 = arith.constant 0 : index
    %168 = vector.load %arg4[%c48_124, %c0_125] : memref<192x200xf32, #tpu.memory_space<vmem>>, vector<8x8xf32>
    %cst_126 = arith.constant dense<0.000000e+00> : vector<8x256xf32>
    %169 = tpu.matmul %168, %167, %cst_126 {dimension_numbers = #tpu.dot_dimension_numbers<[1], [0], [0], [1], [0, 0, 1, 1], [], []>} : vector<8x8xf32>, vector<8x256xf32>, vector<8x256xf32> -> vector<8x256xf32>
    %170 = arith.addf %163, %169 : vector<8x256xf32>
    %c0_127 = arith.constant 0 : index
    %c113_128 = arith.constant 113 : index
    %171 = vector.load %arg10[%c0_127, %c113_128] : memref<8x512xf32, #tpu.memory_space<vmem>>, vector<8x256xf32>
    %c2_129 = arith.constant 2 : index
    %c0_130 = arith.constant 0 : index
    %172 = vector.load %arg3[%c2_129, %c0_130] : memref<9x256xf32, #tpu.memory_space<vmem>>, vector<1x256xf32>
    %173 = vector.broadcast %172 : vector<1x256xf32> to vector<8x256xf32>
    %174 = arith.mulf %171, %173 : vector<8x256xf32>
    %c56_131 = arith.constant 56 : index
    %c0_132 = arith.constant 0 : index
    %175 = vector.load %arg4[%c56_131, %c0_132] : memref<192x200xf32, #tpu.memory_space<vmem>>, vector<8x8xf32>
    %cst_133 = arith.constant dense<0.000000e+00> : vector<8x256xf32>
    %176 = tpu.matmul %175, %174, %cst_133 {dimension_numbers = #tpu.dot_dimension_numbers<[1], [0], [0], [1], [0, 0, 1, 1], [], []>} : vector<8x8xf32>, vector<8x256xf32>, vector<8x256xf32> -> vector<8x256xf32>
    %177 = arith.addf %170, %176 : vector<8x256xf32>
    %c0_134 = arith.constant 0 : index
    %c127_135 = arith.constant 127 : index
    %178 = vector.load %arg10[%c0_134, %c127_135] : memref<8x512xf32, #tpu.memory_space<vmem>>, vector<8x256xf32>
    %c3_136 = arith.constant 3 : index
    %c0_137 = arith.constant 0 : index
    %179 = vector.load %arg3[%c3_136, %c0_137] : memref<9x256xf32, #tpu.memory_space<vmem>>, vector<1x256xf32>
    %180 = vector.broadcast %179 : vector<1x256xf32> to vector<8x256xf32>
    %181 = arith.mulf %178, %180 : vector<8x256xf32>
    %c64_138 = arith.constant 64 : index
    %c0_139 = arith.constant 0 : index
    %182 = vector.load %arg4[%c64_138, %c0_139] : memref<192x200xf32, #tpu.memory_space<vmem>>, vector<8x8xf32>
    %cst_140 = arith.constant dense<0.000000e+00> : vector<8x256xf32>
    %183 = tpu.matmul %182, %181, %cst_140 {dimension_numbers = #tpu.dot_dimension_numbers<[1], [0], [0], [1], [0, 0, 1, 1], [], []>} : vector<8x8xf32>, vector<8x256xf32>, vector<8x256xf32> -> vector<8x256xf32>
    %184 = arith.addf %177, %183 : vector<8x256xf32>
    %c0_141 = arith.constant 0 : index
    %c128_142 = arith.constant 128 : index
    %185 = vector.load %arg10[%c0_141, %c128_142] : memref<8x512xf32, #tpu.memory_space<vmem>>, vector<8x256xf32>
    %c4_143 = arith.constant 4 : index
    %c0_144 = arith.constant 0 : index
    %186 = vector.load %arg3[%c4_143, %c0_144] : memref<9x256xf32, #tpu.memory_space<vmem>>, vector<1x256xf32>
    %187 = vector.broadcast %186 : vector<1x256xf32> to vector<8x256xf32>
    %188 = arith.mulf %185, %187 : vector<8x256xf32>
    %c72_145 = arith.constant 72 : index
    %c0_146 = arith.constant 0 : index
    %189 = vector.load %arg4[%c72_145, %c0_146] : memref<192x200xf32, #tpu.memory_space<vmem>>, vector<8x8xf32>
    %cst_147 = arith.constant dense<0.000000e+00> : vector<8x256xf32>
    %190 = tpu.matmul %189, %188, %cst_147 {dimension_numbers = #tpu.dot_dimension_numbers<[1], [0], [0], [1], [0, 0, 1, 1], [], []>} : vector<8x8xf32>, vector<8x256xf32>, vector<8x256xf32> -> vector<8x256xf32>
    %191 = arith.addf %184, %190 : vector<8x256xf32>
    %c0_148 = arith.constant 0 : index
    %c129_149 = arith.constant 129 : index
    %192 = vector.load %arg10[%c0_148, %c129_149] : memref<8x512xf32, #tpu.memory_space<vmem>>, vector<8x256xf32>
    %c5_150 = arith.constant 5 : index
    %c0_151 = arith.constant 0 : index
    %193 = vector.load %arg3[%c5_150, %c0_151] : memref<9x256xf32, #tpu.memory_space<vmem>>, vector<1x256xf32>
    %194 = vector.broadcast %193 : vector<1x256xf32> to vector<8x256xf32>
    %195 = arith.mulf %192, %194 : vector<8x256xf32>
    %c80_152 = arith.constant 80 : index
    %c0_153 = arith.constant 0 : index
    %196 = vector.load %arg4[%c80_152, %c0_153] : memref<192x200xf32, #tpu.memory_space<vmem>>, vector<8x8xf32>
    %cst_154 = arith.constant dense<0.000000e+00> : vector<8x256xf32>
    %197 = tpu.matmul %196, %195, %cst_154 {dimension_numbers = #tpu.dot_dimension_numbers<[1], [0], [0], [1], [0, 0, 1, 1], [], []>} : vector<8x8xf32>, vector<8x256xf32>, vector<8x256xf32> -> vector<8x256xf32>
    %198 = arith.addf %191, %197 : vector<8x256xf32>
    %c0_155 = arith.constant 0 : index
    %c143_156 = arith.constant 143 : index
    %199 = vector.load %arg10[%c0_155, %c143_156] : memref<8x512xf32, #tpu.memory_space<vmem>>, vector<8x256xf32>
    %c6_157 = arith.constant 6 : index
    %c0_158 = arith.constant 0 : index
    %200 = vector.load %arg3[%c6_157, %c0_158] : memref<9x256xf32, #tpu.memory_space<vmem>>, vector<1x256xf32>
    %201 = vector.broadcast %200 : vector<1x256xf32> to vector<8x256xf32>
    %202 = arith.mulf %199, %201 : vector<8x256xf32>
    %c88_159 = arith.constant 88 : index
    %c0_160 = arith.constant 0 : index
    %203 = vector.load %arg4[%c88_159, %c0_160] : memref<192x200xf32, #tpu.memory_space<vmem>>, vector<8x8xf32>
    %cst_161 = arith.constant dense<0.000000e+00> : vector<8x256xf32>
    %204 = tpu.matmul %203, %202, %cst_161 {dimension_numbers = #tpu.dot_dimension_numbers<[1], [0], [0], [1], [0, 0, 1, 1], [], []>} : vector<8x8xf32>, vector<8x256xf32>, vector<8x256xf32> -> vector<8x256xf32>
    %205 = arith.addf %198, %204 : vector<8x256xf32>
    %c0_162 = arith.constant 0 : index
    %c144_163 = arith.constant 144 : index
    %206 = vector.load %arg10[%c0_162, %c144_163] : memref<8x512xf32, #tpu.memory_space<vmem>>, vector<8x256xf32>
    %c7_164 = arith.constant 7 : index
    %c0_165 = arith.constant 0 : index
    %207 = vector.load %arg3[%c7_164, %c0_165] : memref<9x256xf32, #tpu.memory_space<vmem>>, vector<1x256xf32>
    %208 = vector.broadcast %207 : vector<1x256xf32> to vector<8x256xf32>
    %209 = arith.mulf %206, %208 : vector<8x256xf32>
    %c96_166 = arith.constant 96 : index
    %c0_167 = arith.constant 0 : index
    %210 = vector.load %arg4[%c96_166, %c0_167] : memref<192x200xf32, #tpu.memory_space<vmem>>, vector<8x8xf32>
    %cst_168 = arith.constant dense<0.000000e+00> : vector<8x256xf32>
    %211 = tpu.matmul %210, %209, %cst_168 {dimension_numbers = #tpu.dot_dimension_numbers<[1], [0], [0], [1], [0, 0, 1, 1], [], []>} : vector<8x8xf32>, vector<8x256xf32>, vector<8x256xf32> -> vector<8x256xf32>
    %212 = arith.addf %205, %211 : vector<8x256xf32>
    %c0_169 = arith.constant 0 : index
    %c145_170 = arith.constant 145 : index
    %213 = vector.load %arg10[%c0_169, %c145_170] : memref<8x512xf32, #tpu.memory_space<vmem>>, vector<8x256xf32>
    %c8_171 = arith.constant 8 : index
    %c0_172 = arith.constant 0 : index
    %214 = vector.load %arg3[%c8_171, %c0_172] : memref<9x256xf32, #tpu.memory_space<vmem>>, vector<1x256xf32>
    %215 = vector.broadcast %214 : vector<1x256xf32> to vector<8x256xf32>
    %216 = arith.mulf %213, %215 : vector<8x256xf32>
    %c104_173 = arith.constant 104 : index
    %c0_174 = arith.constant 0 : index
    %217 = vector.load %arg4[%c104_173, %c0_174] : memref<192x200xf32, #tpu.memory_space<vmem>>, vector<8x8xf32>
    %cst_175 = arith.constant dense<0.000000e+00> : vector<8x256xf32>
    %218 = tpu.matmul %217, %216, %cst_175 {dimension_numbers = #tpu.dot_dimension_numbers<[1], [0], [0], [1], [0, 0, 1, 1], [], []>} : vector<8x8xf32>, vector<8x256xf32>, vector<8x256xf32> -> vector<8x256xf32>
    %219 = arith.addf %212, %218 : vector<8x256xf32>
    %c40_176 = arith.constant 40 : index
    %c0_177 = arith.constant 0 : index
    %220 = vector.load %arg5[%c40_176, %c0_177] : memref<128x1xf32, #tpu.memory_space<vmem>>, vector<8x1xf32>
    %221 = vector.broadcast %220 : vector<8x1xf32> to vector<8x256xf32>
    %222 = arith.addf %219, %221 : vector<8x256xf32>
    %c2_178 = arith.constant 2 : index
    %223 = memref.load %arg6[%c2_178] : memref<4xf32, #tpu.memory_space<smem>>
    %cst_179 = arith.constant 0.000000e+00 : f32
    %224 = vector.broadcast %cst_179 : f32 to vector<8x256xf32>
    %225 = arith.cmpf oge, %222, %224 : vector<8x256xf32>
    %226 = vector.broadcast %223 : f32 to vector<8x256xf32>
    %227 = arith.mulf %226, %222 : vector<8x256xf32>
    %228 = arith.select %225, %222, %227 : vector<8x256xi1>, vector<8x256xf32>
    %c112_180 = arith.constant 112 : index
    %c0_181 = arith.constant 0 : index
    %229 = vector.load %arg4[%c112_180, %c0_181] : memref<192x200xf32, #tpu.memory_space<vmem>>, vector<64x8xf32>
    %cst_182 = arith.constant dense<0.000000e+00> : vector<64x256xf32>
    %230 = tpu.matmul %229, %228, %cst_182 {dimension_numbers = #tpu.dot_dimension_numbers<[1], [0], [0], [1], [0, 0, 1, 1], [], []>} : vector<64x8xf32>, vector<8x256xf32>, vector<64x256xf32> -> vector<64x256xf32>
    %c48_183 = arith.constant 48 : index
    %c0_184 = arith.constant 0 : index
    %231 = vector.load %arg5[%c48_183, %c0_184] : memref<128x1xf32, #tpu.memory_space<vmem>>, vector<64x1xf32>
    %232 = vector.broadcast %231 : vector<64x1xf32> to vector<64x256xf32>
    %233 = arith.addf %230, %232 : vector<64x256xf32>
    %c3_185 = arith.constant 3 : index
    %234 = memref.load %arg6[%c3_185] : memref<4xf32, #tpu.memory_space<smem>>
    %cst_186 = arith.constant 0.000000e+00 : f32
    %235 = vector.broadcast %cst_186 : f32 to vector<64x256xf32>
    %236 = arith.cmpf oge, %233, %235 : vector<64x256xf32>
    %237 = vector.broadcast %234 : f32 to vector<64x256xf32>
    %238 = arith.mulf %237, %233 : vector<64x256xf32>
    %239 = arith.select %236, %233, %238 : vector<64x256xi1>, vector<64x256xf32>
    %c176_187 = arith.constant 176 : index
    %c0_188 = arith.constant 0 : index
    %240 = vector.load %arg4[%c176_187, %c0_188] : memref<192x200xf32, #tpu.memory_space<vmem>>, vector<16x64xf32>
    %cst_189 = arith.constant dense<0.000000e+00> : vector<16x256xf32>
    %241 = tpu.matmul %240, %239, %cst_189 {dimension_numbers = #tpu.dot_dimension_numbers<[1], [0], [0], [1], [0, 0, 1, 1], [], []>} : vector<16x64xf32>, vector<64x256xf32>, vector<16x256xf32> -> vector<16x256xf32>
    %c112_190 = arith.constant 112 : index
    %c0_191 = arith.constant 0 : index
    %242 = vector.load %arg5[%c112_190, %c0_191] : memref<128x1xf32, #tpu.memory_space<vmem>>, vector<16x1xf32>
    %243 = vector.broadcast %242 : vector<16x1xf32> to vector<16x256xf32>
    %244 = arith.addf %241, %243 : vector<16x256xf32>
    %cst_192 = arith.constant 0.000000e+00 : f32
    %245 = vector.broadcast %cst_192 : f32 to vector<16x256xf32>
    %246 = arith.subf %245, %244 : vector<16x256xf32>
    %247 = math.exp %246 : vector<16x256xf32>
    %cst_193 = arith.constant 1.000000e+00 : f32
    %248 = vector.broadcast %cst_193 : f32 to vector<16x256xf32>
    %249 = arith.addf %248, %247 : vector<16x256xf32>
    %cst_194 = arith.constant 1.000000e+00 : f32
    %250 = vector.broadcast %cst_194 : f32 to vector<16x256xf32>
    %251 = arith.divf %250, %249 : vector<16x256xf32>
    %c0_195 = arith.constant 0 : index
    %c0_196 = arith.constant 0 : index
    %c0_197 = arith.constant 0 : index
    %252 = vector.load %arg7[%c0_195, %c0_196, %c0_197] : memref<1x16x256xf32, #tpu.memory_space<vmem>>, vector<1x16x256xf32>
    %253 = vector.shape_cast %252 : vector<1x16x256xf32> to vector<16x256xf32>
    %254 = vector.shape_cast %251 : vector<16x256xf32> to vector<1x16x256xf32>
    tpu.vector_store %arg7[%c0_195, %c0_196, %c0_197], %254 {strides = array<i32>} : memref<1x16x256xf32, #tpu.memory_space<vmem>>, vector<1x16x256xf32>,
    return
  }
  func.func @transform_0(%arg0: i32) -> (i32, i32, i32) {
    %c0_i32 = arith.constant 0 : i32
    %c0_i32_0 = arith.constant 0 : i32
    %c0_i32_1 = arith.constant 0 : i32
    return %arg0, %c0_i32, %c0_i32_0 : i32, i32, i32
  }
  func.func @transform_1(%arg0: i32) -> (i32, i32) {
    %c0_i32 = arith.constant 0 : i32
    %c0_i32_0 = arith.constant 0 : i32
    %c0_i32_1 = arith.constant 0 : i32
    return %c0_i32, %c0_i32_0 : i32, i32
  }
  func.func @transform_2(%arg0: i32) -> (i32, i32) {
    %c0_i32 = arith.constant 0 : i32
    %c0_i32_0 = arith.constant 0 : i32
    %c0_i32_1 = arith.constant 0 : i32
    return %c0_i32, %c0_i32_0 : i32, i32
  }
  func.func @transform_3(%arg0: i32) -> (i32, i32) {
    %c0_i32 = arith.constant 0 : i32
    %c0_i32_0 = arith.constant 0 : i32
    %c0_i32_1 = arith.constant 0 : i32
    return %c0_i32, %c0_i32_0 : i32, i32
  }
  func.func @transform_4(%arg0: i32) -> (i32, i32) {
    %c0_i32 = arith.constant 0 : i32
    %c0_i32_0 = arith.constant 0 : i32
    %c0_i32_1 = arith.constant 0 : i32
    return %c0_i32, %c0_i32_0 : i32, i32
  }
  func.func @transform_5(%arg0: i32) -> i32 {
    %c0_i32 = arith.constant 0 : i32
    %c0_i32_0 = arith.constant 0 : i32
    return %c0_i32 : i32
  }
  func.func @transform_6(%arg0: i32) -> (i32, i32, i32) {
    %c0_i32 = arith.constant 0 : i32
    %c0_i32_0 = arith.constant 0 : i32
    %c0_i32_1 = arith.constant 0 : i32
    return %arg0, %c0_i32, %c0_i32_0 : i32, i32, i32
  }
}

</mosaic_0001>

<llo_original>
// kernel: tile.9
$region0: #{tile.9}
  %s0 = inlined_call_operand.vmem [shape: f32[4,3], index: 0, kind: input, shape index: {}]
  %s1 = inlined_call_operand.vmem [shape: f32[12], index: 1, kind: output, shape index: {}]
  $region1: #{tile.9} parent=0
    #allocation0 [shape = 'u8[4096]{0}', space=vmem, size = 0x1000, scoped, tag = 'scoped mem for output reshape']
    #allocation1 [shape = 'u8[4096]{0}', space=vmem, size = 0x1000, scoped, tag = 'scoped mem for input reshape']
    %s3 = sshllo.u32 0, 4
    %v4 = vld [vmem:[%s0] sm:%s3]
    %5 = vst [vmem:[#allocation1] sm:%s3] %v4
    %v6 = vld [vmem:[#allocation1] sm:$0x1]
    %vm7 = vcmask 23552
    %8 = vst.msk [vmem:[#allocation0] sm:$0x1] %vm7, %v6
    %s9 = scalar_lea.vmem [#allocation1], 3
    %v10 = vld [vmem:[%s9] sm:$0x1]
    %11 = vrot.lane.b32.xlu0 %v10, 9
    %v12 = vpop.permute.xlu0 %11
    %vm13 = vcmask 97352
    %14 = vst.msk [vmem:[#allocation0] sm:$0x1] %vm13, %v12
    %s15 = scalar_lea.vmem [#allocation1], 2
    %v16 = vld [vmem:[%s15] sm:$0x1]
    %17 = vrot.lane.b32.xlu0 %v16, 6
    %v18 = vpop.permute.xlu0 %17
    %vm19 = vcmask 72752
    %20 = vst.msk [vmem:[#allocation0] sm:$0x1] %vm19, %v18
    %s21 = scalar_lea.vmem [#allocation1], 1
    %v22 = vld [vmem:[%s21] sm:$0x1]
    %23 = vrot.lane.b32.xlu0 %v22, 3
    %v24 = vpop.permute.xlu0 %23
    %vm25 = vcmask 48152
    %26 = vst.msk [vmem:[#allocation0] sm:$0x1] %vm25, %v24
    %s28 = sshllo.u32 0, 1
    %v30 = vld [vmem:[#allocation0] sm:%s28]
    %s31 = sshllo.u32 0, 1
    %32 = vst [vmem:[%s1] sm:%s31] %v30

// kernel: tile.8
$region0: #{tile.8}
  #allocation2 [shape = 's32[1]{0}', space=sflag, size = 0x4, scoped, tag = 'scoped memory for tile.8']
  %s0 = inlined_call_operand.hbm [shape: f32[3], index: 0, kind: input, shape index: {}]
  %s1 = inlined_call_operand.vmem [shape: f32[4,3], index: 1, kind: output, shape index: {}]
  $region1: #{tile.8} parent=0
    #allocation0 [shape = 'u8[512]{0}', space=vmem, size = 0x400, scoped, tag = 'operand span for operand 0']
    #allocation1 [shape = 's32[1]{0}', space=sflag, size = 0x4, scoped, tag = 'scoped memory for tile.8']
    %2 = vsyncpa [#allocation1], 0
    // Predicated region
    $region2: #{tile.8} parent=1 // pred_check
      _
    $region3: #{tile.8} parent=1 // pred_check_branch
      %4 = sbr.rel (0) target = $region5
    $region4: #{tile.8} parent=1 // pred_region
      %s6 = ssub.s32 16, 16
      %7 = vsyncadd [#allocation1], %s6
      %s9 = sshll.u32 [#allocation0], 4
      %s10 = int_to_ptr.vmem [resolvable:$true] %s9
      %12 = dma.hbm_to_vmem [thread:$0]  %s0, 16, %s10, [#allocation1]
    $region5: #{tile.8} parent=1 // pred_fallthru
      _
    // Predicated region
    $region6: #{tile.8} parent=1 // pred_check
      _
    $region7: #{tile.8} parent=1 // pred_check_branch
      %14 = sbr.rel (0) target = $region9
    $region8: #{tile.8} parent=1 // pred_region
      %15 = dma.done [#allocation1], 16
    $region9: #{tile.8} parent=1 // pred_fallthru
      _
    %v16 = vld [vmem:[#allocation0] ss:$0 sm:$0xff]
    %17 = vst [vmem:[%s1] sm:$0xf] %v16
    %18 = vsyncpa [#allocation1], 1

// kernel: fsrcnn22_forward.1
$region0: #{fsrcnn22_forward.1}
  #allocation0 [shape = 'u32[]', space=smem, size = 0x4, offset = 0x4, fixed_abs, tag = 'smem constant byte address 0x4 - core index']
  #allocation1 [shape = 'u32[144,128]{1,0:T(1,128)}', space=vmem, size = 0x12000, scoped, tag = 'internal scratch']
  #allocation2 [shape = 'f32[8,512]{1,0:T(8,128)}', space=vmem, size = 0x4000, scoped, tag = 'scratch operand']
  #allocation3 [shape = 'f32[200,256]{1,0:T(8,128)}', space=vmem, size = 0x32000, scoped, tag = 'scratch operand']
  #allocation4 [shape = 'f32[8,512]{1,0:T(8,128)}', space=vmem, size = 0x4000, scoped, tag = 'scratch operand']
  %s0 = inlined_call_operand.hbm [shape: f32[2,3,256], index: 0, kind: input, shape index: {}]
  %s1 = inlined_call_operand.hbm [shape: f32[25,256], index: 1, kind: input, shape index: {}]
  %s2 = inlined_call_operand.hbm [shape: f32[9,256], index: 2, kind: input, shape index: {}]
  %s3 = inlined_call_operand.hbm [shape: f32[192,200], index: 3, kind: input, shape index: {}]
  %s4 = inlined_call_operand.hbm [shape: f32[128,1], index: 4, kind: input, shape index: {}]
  %s5 = inlined_call_operand.hbm [shape: f32[4], index: 5, kind: input, shape index: {}]
  %s6 = inlined_call_operand.hbm [shape: f32[2,16,256], index: 6, kind: output, shape index: {}]
  %s7 = sld [smem:[#allocation0]]
  $region81: #{fsrcnn22_forward.1} parent=0
    _
  %s9 = ssub.s32 1, %s7
  %s10 = scalar_select 0, %s9, %s7
  $region1: #{fsrcnn22_forward.1} parent=0
    #allocation5 [shape = 'u8[8192]{0}', space=vmem, size = 0x2000, scoped, tag = 'input window, operand 0']
    #allocation6 [shape = 's32[2]{0}', space=sflag, size = 0x8, scoped, tag = 'scoped memory for fsrcnn22_forward.1']
    #allocation7 [shape = 's32[2]{0}', space=sflag, size = 0x8, scoped, tag = 'scoped memory for fsrcnn22_forward.1']
    #allocation8 [shape = 's32[2]{0}', space=sflag, size = 0x8, scoped, tag = 'scoped memory for fsrcnn22_forward.1']
    #allocation9 [shape = 'u8[32768]{0}', space=vmem, size = 0x8000, scoped, tag = 'input window, operand 1, single buffered']
    #allocation10 [shape = 's32[1]{0}', space=sflag, size = 0x4, scoped, tag = 'scoped memory for fsrcnn22_forward.1']
    #allocation11 [shape = 'u8[16384]{0}', space=vmem, size = 0x4000, scoped, tag = 'input window, operand 2, single buffered']
    #allocation12 [shape = 'u8[196608]{0}', space=vmem, size = 0x30000, scoped, tag = 'input window, operand 3, single buffered']
    #allocation13 [shape = 's32[1]{0}', space=sflag, size = 0x4, scoped, tag = 'scoped memory for fsrcnn22_forward.1']
    #allocation14 [shape = 'u8[65536]{0}', space=vmem, size = 0x10000, scoped, tag = 'input window, operand 4, single buffered']
    #allocation15 [shape = 'u8[512]{0}', space=smem, size = 0x200, scoped, tag = 'input window, operand 5, single buffered']
    #allocation16 [shape = 'u8[32768]{0}', space=vmem, size = 0x8000, scoped, tag = 'output window, operand 0']
    %11 = vsyncpa [#allocation6], 0
    %s12 = scalar_lea.sflag [#allocation6], 1
    %13 = vsyncpa %s12, 0
    %14 = vsyncpa [#allocation10], 0
    %15 = vsyncpa [#allocation13], 0
    %16 = vsyncpa [#allocation8], 0
    %17 = vsyncpa [#allocation7], 0
    %s18 = scalar_lea.sflag [#allocation7], 1
    %19 = vsyncpa %s18, 0
    loop: start=0, step=1, limit=4
    $region2: #{fsrcnn22_forward.1} parent=1 // loop_pre_header
      _
    $region3: #{fsrcnn22_forward.1} parent=1 // loop_header
      %s21 = sphi 0, %s25
      %p22 = scmp.ge.s32.totalorder %s21, 4
      %s31 = sphi 0, %s33
      %s34 = sphi 0, %s31
      %s35 = sphi 0, %s34
      %s51 = sphi 0, %s35
      %s55 = sphi 0, %s55
      %s57 = sphi 0, %s55
      %s58 = sphi 0, %s57
      %s72 = sphi 0, %s58
      %s76 = sphi 0, %s76
      %s78 = sphi 0, %s76
      %s79 = sphi 0, %s78
      %s93 = sphi 0, %s79
      %s97 = sphi 0, %s97
      %s99 = sphi 0, %s97
      %s100 = sphi 0, %s99
      %s114 = sphi 0, %s100
      %s118 = sphi 0, %s118
      %s120 = sphi 0, %s118
      %s121 = sphi 0, %s120
      %s135 = sphi 0, %s121
      %s139 = sphi 0, %s139
      %s141 = sphi 0, %s139
      %s142 = sphi 0, %s141
      %s156 = sphi 0, %s142
      %s162 = sphi 0, %s164
      %s165 = sphi 0, %s162
      %s166 = sphi 0, %s165
      %s182 = sphi 0, %s166
    $region4: #{fsrcnn22_forward.1} parent=1 // loop_header_branch
      %24 = sbr.rel (%p22) target = $region8
    $region5: #{fsrcnn22_forward.1} parent=1 // loop_body
      %s26 = ssub.s32 %s21, 1
      %s27 = ssub.s32 %s21, 2
      %s28 = sadd.s32 %s21, 1
      %s29 = ssub.s32 %s21, %s28
      %p30 = scmp.eq.s32.totalorder %s29, 0
      %s32 = sadd.s32 %s31, 1
      %s33 = scalar_select %p30, %s31, %s32
      %p36 = pneg %p30
      %p37 = scmp.eq.s32.totalorder %s21, 1
      %p38 = por %p36, %p37
      %p39 = scmp.ne.s32.totalorder %s31, %s34
      %p40 = scmp.eq.s32.totalorder %s21, 0
      %p41 = por %p39, %p40
      %p42 = scmp.ne.s32.totalorder %s31, %s34
      %p43 = scmp.eq.s32.totalorder %s26, 1
      %p44 = por %p42, %p43
      %p45 = scmp.ne.s32.totalorder %s34, %s35
      %p46 = scmp.eq.s32.totalorder %s26, 0
      %p47 = por %p45, %p46
      %p48 = scmp.ne.s32.totalorder %s34, %s35
      %p49 = scmp.eq.s32.totalorder %s27, 1
      %p50 = por %p48, %p49
      %p52 = scmp.ne.s32.totalorder %s35, %s51
      %p53 = scmp.eq.s32.totalorder %s27, 0
      %p54 = por %p52, %p53
      %s56 = sadd.s32 %s55, 1
      %p59 = scmp.eq.s32.totalorder %s21, 1
      %p60 = scmp.ne.s32.totalorder %s55, %s57
      %p61 = scmp.eq.s32.totalorder %s21, 0
      %p62 = por %p60, %p61
      %p63 = scmp.ne.s32.totalorder %s55, %s57
      %p64 = scmp.eq.s32.totalorder %s26, 1
      %p65 = por %p63, %p64
      %p66 = scmp.ne.s32.totalorder %s57, %s58
      %p67 = scmp.eq.s32.totalorder %s26, 0
      %p68 = por %p66, %p67
      %p69 = scmp.ne.s32.totalorder %s57, %s58
      %p70 = scmp.eq.s32.totalorder %s27, 1
      %p71 = por %p69, %p70
      %p73 = scmp.ne.s32.totalorder %s58, %s72
      %p74 = scmp.eq.s32.totalorder %s27, 0
      %p75 = por %p73, %p74
      %s77 = sadd.s32 %s76, 1
      %p80 = scmp.eq.s32.totalorder %s21, 1
      %p81 = scmp.ne.s32.totalorder %s76, %s78
      %p82 = scmp.eq.s32.totalorder %s21, 0
      %p83 = por %p81, %p82
      %p84 = scmp.ne.s32.totalorder %s76, %s78
      %p85 = scmp.eq.s32.totalorder %s26, 1
      %p86 = por %p84, %p85
      %p87 = scmp.ne.s32.totalorder %s78, %s79
      %p88 = scmp.eq.s32.totalorder %s26, 0
      %p89 = por %p87, %p88
      %p90 = scmp.ne.s32.totalorder %s78, %s79
      %p91 = scmp.eq.s32.totalorder %s27, 1
      %p92 = por %p90, %p91
      %p94 = scmp.ne.s32.totalorder %s79, %s93
      %p95 = scmp.eq.s32.totalorder %s27, 0
      %p96 = por %p94, %p95
      %s98 = sadd.s32 %s97, 1
      %p101 = scmp.eq.s32.totalorder %s21, 1
      %p102 = scmp.ne.s32.totalorder %s97, %s99
      %p103 = scmp.eq.s32.totalorder %s21, 0
      %p104 = por %p102, %p103
      %p105 = scmp.ne.s32.totalorder %s97, %s99
      %p106 = scmp.eq.s32.totalorder %s26, 1
      %p107 = por %p105, %p106
      %p108 = scmp.ne.s32.totalorder %s99, %s100
      %p109 = scmp.eq.s32.totalorder %s26, 0
      %p110 = por %p108, %p109
      %p111 = scmp.ne.s32.totalorder %s99, %s100
      %p112 = scmp.eq.s32.totalorder %s27, 1
      %p113 = por %p111, %p112
      %p115 = scmp.ne.s32.totalorder %s100, %s114
      %p116 = scmp.eq.s32.totalorder %s27, 0
      %p117 = por %p115, %p116
      %s119 = sadd.s32 %s118, 1
      %p122 = scmp.eq.s32.totalorder %s21, 1
      %p123 = scmp.ne.s32.totalorder %s118, %s120
      %p124 = scmp.eq.s32.totalorder %s21, 0
      %p125 = por %p123, %p124
      %p126 = scmp.ne.s32.totalorder %s118, %s120
      %p127 = scmp.eq.s32.totalorder %s26, 1
      %p128 = por %p126, %p127
      %p129 = scmp.ne.s32.totalorder %s120, %s121
      %p130 = scmp.eq.s32.totalorder %s26, 0
      %p131 = por %p129, %p130
      %p132 = scmp.ne.s32.totalorder %s120, %s121
      %p133 = scmp.eq.s32.totalorder %s27, 1
      %p134 = por %p132, %p133
      %p136 = scmp.ne.s32.totalorder %s121, %s135
      %p137 = scmp.eq.s32.totalorder %s27, 0
      %p138 = por %p136, %p137
      %s140 = sadd.s32 %s139, 1
      %p143 = scmp.eq.s32.totalorder %s21, 1
      %p144 = scmp.ne.s32.totalorder %s139, %s141
      %p145 = scmp.eq.s32.totalorder %s21, 0
      %p146 = por %p144, %p145
      %p147 = scmp.ne.s32.totalorder %s139, %s141
      %p148 = scmp.eq.s32.totalorder %s26, 1
      %p149 = por %p147, %p148
      %p150 = scmp.ne.s32.totalorder %s141, %s142
      %p151 = scmp.eq.s32.totalorder %s26, 0
      %p152 = por %p150, %p151
      %p153 = scmp.ne.s32.totalorder %s141, %s142
      %p154 = scmp.eq.s32.totalorder %s27, 1
      %p155 = por %p153, %p154
      %p157 = scmp.ne.s32.totalorder %s142, %s156
      %p158 = scmp.eq.s32.totalorder %s27, 0
      %p159 = por %p157, %p158
      %s160 = ssub.s32 %s21, %s28
      %p161 = scmp.eq.s32.totalorder %s160, 0
      %s163 = sadd.s32 %s162, 1
      %s164 = scalar_select %p161, %s162, %s163
      %p167 = pneg %p161
      %p168 = scmp.eq.s32.totalorder %s21, 1
      %p169 = por %p167, %p168
      %p170 = scmp.ne.s32.totalorder %s162, %s165
      %p171 = scmp.eq.s32.totalorder %s21, 0
      %p172 = por %p170, %p171
      %p173 = scmp.ne.s32.totalorder %s162, %s165
      %p174 = scmp.eq.s32.totalorder %s26, 1
      %p175 = por %p173, %p174
      %p176 = scmp.ne.s32.totalorder %s165, %s166
      %p177 = scmp.eq.s32.totalorder %s26, 0
      %p178 = por %p176, %p177
      %p179 = scmp.ne.s32.totalorder %s165, %s166
      %p180 = scmp.eq.s32.totalorder %s27, 1
      %p181 = por %p179, %p180
      %p183 = scmp.ne.s32.totalorder %s166, %s182
      %p184 = scmp.eq.s32.totalorder %s27, 0
      %p185 = por %p183, %p184
      %p186 = scmp.le.s32.totalorder 1, %s21
      %p187 = scmp.lt.s32.totalorder %s21, 3
      %p188 = pnand %p186, %p187
      %p189 = pneg %p188
      // Predicated region
      $region9: #{fsrcnn22_forward.1} parent=5 // pred_check
        _
      $region10: #{fsrcnn22_forward.1} parent=5 // pred_check_branch
        %191 = sbr.rel (%p188) target = $region12
      $region11: #{fsrcnn22_forward.1} parent=5 // pred_region
        %s192 = ssub.s32 %s21, 1
        // Predicated region
        $region13: #{fsrcnn22_forward.1} parent=11 // pred_check
          %p193 = pneg %p68
        $region14: #{fsrcnn22_forward.1} parent=11 // pred_check_branch
          %195 = sbr.rel (%p193) target = $region16
        $region15: #{fsrcnn22_forward.1} parent=11 // pred_region
          %s197 = ssub.s32 1024, 1024
          %198 = vsyncadd [#allocation10], %s197
          %s199 = sshll.u32 [#allocation9], 4
          %s200 = int_to_ptr.vmem [resolvable:$true] %s199
          %205 = dma.hbm_to_vmem [thread:$0]  %s1, 1024, %s200, [#allocation10], 256, 256, 16
        $region16: #{fsrcnn22_forward.1} parent=11 // pred_fallthru
          _
        // Predicated region
        $region17: #{fsrcnn22_forward.1} parent=11 // pred_check
          %p206 = pneg %p89
        $region18: #{fsrcnn22_forward.1} parent=11 // pred_check_branch
          %208 = sbr.rel (%p206) target = $region20
        $region19: #{fsrcnn22_forward.1} parent=11 // pred_region
          %s210 = ssub.s32 512, 512
          %211 = vsyncadd [#allocation10], %s210
          %s212 = sshll.u32 [#allocation11], 4
          %s213 = int_to_ptr.vmem [resolvable:$true] %s212
          %218 = dma.hbm_to_vmem [thread:$0]  %s2, 512, %s213, [#allocation10], 256, 256, 16
        $region20: #{fsrcnn22_forward.1} parent=11 // pred_fallthru
          _
        // Predicated region
        $region21: #{fsrcnn22_forward.1} parent=11 // pred_check
          %p219 = pneg %p110
        $region22: #{fsrcnn22_forward.1} parent=11 // pred_check_branch
          %221 = sbr.rel (%p219) target = $region24
        $region23: #{fsrcnn22_forward.1} parent=11 // pred_region
          %s223 = ssub.s32 6144, 6144
          %224 = vsyncadd [#allocation13], %s223
          %s225 = sshll.u32 [#allocation12], 4
          %s226 = int_to_ptr.vmem [resolvable:$true] %s225
          %231 = dma.hbm_to_vmem [thread:$0]  %s3, 6144, %s226, [#allocation13], 256, 256, 16
        $region24: #{fsrcnn22_forward.1} parent=11 // pred_fallthru
          _
        // Predicated region
        $region25: #{fsrcnn22_forward.1} parent=11 // pred_check
          %p232 = pneg %p131
        $region26: #{fsrcnn22_forward.1} parent=11 // pred_check_branch
          %234 = sbr.rel (%p232) target = $region28
        $region27: #{fsrcnn22_forward.1} parent=11 // pred_region
          %s236 = ssub.s32 2048, 2048
          %237 = vsyncadd [#allocation13], %s236
          %s238 = sshll.u32 [#allocation14], 4
          %s239 = int_to_ptr.vmem [resolvable:$true] %s238
          %244 = dma.hbm_to_vmem [thread:$0]  %s4, 2048, %s239, [#allocation13], 128, 128, 8
        $region28: #{fsrcnn22_forward.1} parent=11 // pred_fallthru
          _
        // Predicated region
        $region29: #{fsrcnn22_forward.1} parent=11 // pred_check
          %p245 = pneg %p152
        $region30: #{fsrcnn22_forward.1} parent=11 // pred_check_branch
          %247 = sbr.rel (%p245) target = $region32
        $region31: #{fsrcnn22_forward.1} parent=11 // pred_region
          %s249 = ssub.s32 16, 16
          %250 = vsyncadd [#allocation8], %s249
          %253 = dma.hbm_to_smem %s5, 16, [#allocation15], [#allocation8]
        $region32: #{fsrcnn22_forward.1} parent=11 // pred_fallthru
          _
      $region12: #{fsrcnn22_forward.1} parent=5 // pred_fallthru
        _
      %p254 = scmp.lt.s32.totalorder %s21, 2
      // Predicated region
      $region33: #{fsrcnn22_forward.1} parent=5 // pred_check
        %p255 = pneg %p254
      $region34: #{fsrcnn22_forward.1} parent=5 // pred_check_branch
        %257 = sbr.rel (%p255) target = $region36
      $region35: #{fsrcnn22_forward.1} parent=5 // pred_region
        // Predicated region
        $region37: #{fsrcnn22_forward.1} parent=35 // pred_check
          %p258 = pneg %p41
        $region38: #{fsrcnn22_forward.1} parent=35 // pred_check_branch
          %260 = sbr.rel (%p258) target = $region40
        $region39: #{fsrcnn22_forward.1} parent=35 // pred_region
          %s261 = sand.u32 %s31, 1
          %s262 = scalar_lea.sflag [#allocation6], %s261
          %s263 = sand.u32 %s31, 1
          %s264 = smul.addr %s263, 8
          %s265 = scalar_lea.vmem [#allocation5], %s264
          %s267 = ssub.s32 128, 128
          %268 = vsyncadd %s262, %s267
          %s269 = smul.addr %s21, 2
          %s270 = smul.addr %s269, 64
          %s271 = scalar_lea.hbm %s0, %s270
          %s273 = sshll.u32 %s265, 4
          %s274 = int_to_ptr.vmem [resolvable:$true] %s273
          %276 = dma.hbm_to_vmem [thread:$0]  %s271, 128, %s274, %s262
        $region40: #{fsrcnn22_forward.1} parent=35 // pred_fallthru
          _
      $region36: #{fsrcnn22_forward.1} parent=5 // pred_fallthru
        _
      %p277 = scmp.le.s32.totalorder 1, %s21
      %p278 = scmp.lt.s32.totalorder %s21, 3
      %p279 = pnand %p277, %p278
      %p280 = pneg %p279
      // Predicated region
      $region41: #{fsrcnn22_forward.1} parent=5 // pred_check
        _
      $region42: #{fsrcnn22_forward.1} parent=5 // pred_check_branch
        %282 = sbr.rel (%p279) target = $region44
      $region43: #{fsrcnn22_forward.1} parent=5 // pred_region
        %s283 = ssub.s32 %s21, 1
        %s284 = sand.u32 %s34, 1
        %s285 = scalar_lea.sflag [#allocation6], %s284
        %s286 = sand.u32 %s34, 1
        %s287 = smul.addr %s286, 8
        %s288 = scalar_lea.vmem [#allocation5], %s287
        // Predicated region
        $region45: #{fsrcnn22_forward.1} parent=43 // pred_check
          %p289 = pneg %p47
        $region46: #{fsrcnn22_forward.1} parent=43 // pred_check_branch
          %291 = sbr.rel (%p289) target = $region48
        $region47: #{fsrcnn22_forward.1} parent=43 // pred_region
          %292 = dma.done %s285, 128
        $region48: #{fsrcnn22_forward.1} parent=43 // pred_fallthru
          _
        // Predicated region
        $region49: #{fsrcnn22_forward.1} parent=43 // pred_check
          %p293 = pneg %p68
        $region50: #{fsrcnn22_forward.1} parent=43 // pred_check_branch
          %295 = sbr.rel (%p293) target = $region52
        $region51: #{fsrcnn22_forward.1} parent=43 // pred_region
          %296 = dma.done [#allocation10], 1024
        $region52: #{fsrcnn22_forward.1} parent=43 // pred_fallthru
          _
        // Predicated region
        $region53: #{fsrcnn22_forward.1} parent=43 // pred_check
          %p297 = pneg %p89
        $region54: #{fsrcnn22_forward.1} parent=43 // pred_check_branch
          %299 = sbr.rel (%p297) target = $region56
        $region55: #{fsrcnn22_forward.1} parent=43 // pred_region
          %300 = dma.done [#allocation10], 512
        $region56: #{fsrcnn22_forward.1} parent=43 // pred_fallthru
          _
        // Predicated region
        $region57: #{fsrcnn22_forward.1} parent=43 // pred_check
          %p301 = pneg %p110
        $region58: #{fsrcnn22_forward.1} parent=43 // pred_check_branch
          %303 = sbr.rel (%p301) target = $region60
        $region59: #{fsrcnn22_forward.1} parent=43 // pred_region
          %304 = dma.done [#allocation13], 6144
        $region60: #{fsrcnn22_forward.1} parent=43 // pred_fallthru
          _
        // Predicated region
        $region61: #{fsrcnn22_forward.1} parent=43 // pred_check
          %p305 = pneg %p131
        $region62: #{fsrcnn22_forward.1} parent=43 // pred_check_branch
          %307 = sbr.rel (%p305) target = $region64
        $region63: #{fsrcnn22_forward.1} parent=43 // pred_region
          %308 = dma.done [#allocation13], 2048
        $region64: #{fsrcnn22_forward.1} parent=43 // pred_fallthru
          _
        // Predicated region
        $region65: #{fsrcnn22_forward.1} parent=43 // pred_check
          %p309 = pneg %p152
        $region66: #{fsrcnn22_forward.1} parent=43 // pred_check_branch
          %311 = sbr.rel (%p309) target = $region68
        $region67: #{fsrcnn22_forward.1} parent=43 // pred_region
          %312 = dma.done [#allocation8], 16
        $region68: #{fsrcnn22_forward.1} parent=43 // pred_fallthru
          _
        %313 = sfence
        %s314 = sand.u32 %s34, 1
        %s315 = scalar_lea.sflag [#allocation6], %s314
        %s316 = sand.u32 %s34, 1
        %s317 = smul.addr %s316, 8
        %s318 = scalar_lea.vmem [#allocation5], %s317
        %p319 = pneg %p47
        %p320 = pneg %p44
        %p321 = pneg %p68
        %p322 = pneg %p65
        %p323 = pneg %p89
        %p324 = pneg %p86
        %p325 = pneg %p110
        %p326 = pneg %p107
        %p327 = pneg %p131
        %p328 = pneg %p128
        %p329 = pneg %p152
        %p330 = pneg %p149
        %p331 = pneg %p178
        %p332 = pneg %p175
        %s333 = sand.u32 %s165, 1
        %s334 = scalar_lea.sflag [#allocation7], %s333
        %s335 = sand.u32 %s165, 1
        %s336 = smul.addr %s335, 32
        %s337 = scalar_lea.vmem [#allocation16], %s336
        %v338 = vld [vmem:[%s288] sm:$0x77]
        %339 = vst [vmem:[#allocation2] sm:$0xff] 0.0
        %340 = vst [vmem:[#allocation2 + $0x8] sm:$0xff] 0.0
        %341 = vst [vmem:[#allocation2 + $0x10] sm:$0xff] 0.0
        %342 = vst [vmem:[#allocation2 + $0x18] sm:$0xff] 0.0
        %v344 = vcombine.high %v338, %v338
        %346 = vst [vmem:[#allocation2 + $0x8] sm:$0x7] %v338
        %347 = vst [vmem:[#allocation2 + $0x10] sm:$0x7] %v344
        %v348 = vld [vmem:[#allocation2] sm:$0xff]
        %v349 = vld [vmem:[#allocation2 + $0x8] sm:$0xff]
        %v350 = vld [vmem:[#allocation2 + $0x10] sm:$0xff]
        %v351 = vld [vmem:[#allocation9] ss:$8 sm:$0x3]
        %v353 = vlaneseq
        %v354 = vshrl.u32 %v353, 7
        %v355 = vsub.s32 0, %v354
        %v356 = vrot.slane %v351, %v355
        %v357 = vlaneseq
        %v358 = vshrl.u32 %v357, 7
        %v359 = vsub.s32 1, %v358
        %v360 = vrot.slane %v351, %v359
        %361 = vrot.lane.b32.xlu0 %v356, 94
        %v362 = vpop.permute.xlu0 %361
        %363 = vrot.lane.b32.xlu0 %v360, 94
        %v364 = vpop.permute.xlu0 %363
        %vm365 = vcmask 769024
        %v366 = vsel %vm365, %v362, %v364
        %v370 = vmul.f32 %v348, %v362
        %v371 = vmul.f32 %v349, %v366
        %v372 = vmul.f32 %v350, %v364
        %376 = vrot.lane.b32.xlu0 %v370, 34
        %v377 = vpop.permute.xlu0 %376
        %378 = vrot.lane.b32.xlu0 %v371, 34
        %v379 = vpop.permute.xlu0 %378
        %380 = vrot.lane.b32.xlu0 %v372, 34
        %v381 = vpop.permute.xlu0 %380
        %vm382 = vcmask 277504
        %v383 = vsel %vm382, %v377, %v379
        %v384 = vsel %vm382, %v379, %v381
        %387 = vst [vmem:[#allocation3] sm:$0xff] %v383
        %388 = vst [vmem:[#allocation3 + $0x8] sm:$0xff] %v384
        %v389 = vld [vmem:[#allocation2] sm:$0xff]
        %v390 = vld [vmem:[#allocation2 + $0x8] sm:$0xff]
        %v391 = vld [vmem:[#allocation2 + $0x10] sm:$0xff]
        %s392 = scalar_lea.vmem [#allocation9], 1
        %v393 = vld [vmem:[%s392] ss:$8 sm:$0x3]
        %v395 = vlaneseq
        %v396 = vshrl.u32 %v395, 7
        %v397 = vsub.s32 0, %v396
        %v398 = vrot.slane %v393, %v397
        %v399 = vlaneseq
        %v400 = vshrl.u32 %v399, 7
        %v401 = vsub.s32 1, %v400
        %v402 = vrot.slane %v393, %v401
        %403 = vrot.lane.b32.xlu0 %v398, 95
        %v404 = vpop.permute.xlu0 %403
        %405 = vrot.lane.b32.xlu0 %v402, 95
        %v406 = vpop.permute.xlu0 %405
        %vm407 = vcmask 777216
        %v408 = vsel %vm407, %v404, %v406
        %v412 = vmul.f32 %v389, %v404
        %v413 = vmul.f32 %v390, %v408
        %v414 = vmul.f32 %v391, %v406
        %418 = vrot.lane.b32.xlu0 %v412, 33
        %v419 = vpop.permute.xlu0 %418
        %420 = vrot.lane.b32.xlu0 %v413, 33
        %v421 = vpop.permute.xlu0 %420
        %422 = vrot.lane.b32.xlu0 %v414, 33
        %v423 = vpop.permute.xlu0 %422
        %vm424 = vcmask 269312
        %v425 = vsel %vm424, %v419, %v421
        %v426 = vsel %vm424, %v421, %v423
        %429 = vst [vmem:[#allocation3 + $0x10] sm:$0xff] %v425
        %430 = vst [vmem:[#allocation3 + $0x18] sm:$0xff] %v426
        %v431 = vld [vmem:[#allocation2] sm:$0xff]
        %v432 = vld [vmem:[#allocation2 + $0x8] sm:$0xff]
        %v433 = vld [vmem:[#allocation2 + $0x10] sm:$0xff]
        %s434 = scalar_lea.vmem [#allocation9], 2
        %v435 = vld [vmem:[%s434] ss:$8 sm:$0x3]
        %v437 = vlaneseq
        %v438 = vshrl.u32 %v437, 7
        %v439 = vsub.s32 0, %v438
        %v440 = vrot.slane %v435, %v439
        %v441 = vlaneseq
        %v442 = vshrl.u32 %v441, 7
        %v443 = vsub.s32 1, %v442
        %v444 = vrot.slane %v435, %v443
        %445 = vrot.lane.b32.xlu0 %v440, 96
        %v446 = vpop.permute.xlu0 %445
        %447 = vrot.lane.b32.xlu0 %v444, 96
        %v448 = vpop.permute.xlu0 %447
        %vm449 = vcmask 785408
        %v450 = vsel %vm449, %v446, %v448
        %v454 = vmul.f32 %v431, %v446
        %v455 = vmul.f32 %v432, %v450
        %v456 = vmul.f32 %v433, %v448
        %460 = vrot.lane.b32.xlu0 %v454, 32
        %v461 = vpop.permute.xlu0 %460
        %462 = vrot.lane.b32.xlu0 %v455, 32
        %v463 = vpop.permute.xlu0 %462
        %464 = vrot.lane.b32.xlu0 %v456, 32
        %v465 = vpop.permute.xlu0 %464
        %vm466 = vcmask 261120
        %v467 = vsel %vm466, %v461, %v463
        %v468 = vsel %vm466, %v463, %v465
        %471 = vst [vmem:[#allocation3 + $0x20] sm:$0xff] %v467
        %472 = vst [vmem:[#allocation3 + $0x28] sm:$0xff] %v468
        %v473 = vld [vmem:[#allocation2] sm:$0xff]
        %v474 = vld [vmem:[#allocation2 + $0x8] sm:$0xff]
        %v475 = vld [vmem:[#allocation2 + $0x10] sm:$0xff]
        %s476 = scalar_lea.vmem [#allocation9], 3
        %v477 = vld [vmem:[%s476] ss:$8 sm:$0x3]
        %v479 = vlaneseq
        %v480 = vshrl.u32 %v479, 7
        %v481 = vsub.s32 0, %v480
        %v482 = vrot.slane %v477, %v481
        %v483 = vlaneseq
        %v484 = vshrl.u32 %v483, 7
        %v485 = vsub.s32 1, %v484
        %v486 = vrot.slane %v477, %v485
        %487 = vrot.lane.b32.xlu0 %v482, 97
        %v488 = vpop.permute.xlu0 %487
        %489 = vrot.lane.b32.xlu0 %v486, 97
        %v490 = vpop.permute.xlu0 %489
        %vm491 = vcmask 793600
        %v492 = vsel %vm491, %v488, %v490
        %v496 = vmul.f32 %v473, %v488
        %v497 = vmul.f32 %v474, %v492
        %v498 = vmul.f32 %v475, %v490
        %502 = vrot.lane.b32.xlu0 %v496, 31
        %v503 = vpop.permute.xlu0 %502
        %504 = vrot.lane.b32.xlu0 %v497, 31
        %v505 = vpop.permute.xlu0 %504
        %506 = vrot.lane.b32.xlu0 %v498, 31
        %v507 = vpop.permute.xlu0 %506
        %vm508 = vcmask 252928
        %v509 = vsel %vm508, %v503, %v505
        %v510 = vsel %vm508, %v505, %v507
        %513 = vst [vmem:[#allocation3 + $0x30] sm:$0xff] %v509
        %514 = vst [vmem:[#allocation3 + $0x38] sm:$0xff] %v510
        %v515 = vld [vmem:[#allocation2] sm:$0xff]
        %v516 = vld [vmem:[#allocation2 + $0x8] sm:$0xff]
        %v517 = vld [vmem:[#allocation2 + $0x10] sm:$0xff]
        %s518 = scalar_lea.vmem [#allocation9], 4
        %v519 = vld [vmem:[%s518] ss:$8 sm:$0x3]
        %v521 = vlaneseq
        %v522 = vshrl.u32 %v521, 7
        %v523 = vsub.s32 0, %v522
        %v524 = vrot.slane %v519, %v523
        %v525 = vlaneseq
        %v526 = vshrl.u32 %v525, 7
        %v527 = vsub.s32 1, %v526
        %v528 = vrot.slane %v519, %v527
        %529 = vrot.lane.b32.xlu0 %v524, 98
        %v530 = vpop.permute.xlu0 %529
        %531 = vrot.lane.b32.xlu0 %v528, 98
        %v532 = vpop.permute.xlu0 %531
        %vm533 = vcmask 801792
        %v534 = vsel %vm533, %v530, %v532
        %v538 = vmul.f32 %v515, %v530
        %v539 = vmul.f32 %v516, %v534
        %v540 = vmul.f32 %v517, %v532
        %544 = vrot.lane.b32.xlu0 %v538, 30
        %v545 = vpop.permute.xlu0 %544
        %546 = vrot.lane.b32.xlu0 %v539, 30
        %v547 = vpop.permute.xlu0 %546
        %548 = vrot.lane.b32.xlu0 %v540, 30
        %v549 = vpop.permute.xlu0 %548
        %vm550 = vcmask 244736
        %v551 = vsel %vm550, %v545, %v547
        %v552 = vsel %vm550, %v547, %v549
        %555 = vst [vmem:[#allocation3 + $0x40] sm:$0xff] %v551
        %556 = vst [vmem:[#allocation3 + $0x48] sm:$0xff] %v552
        %v557 = vld [vmem:[#allocation2] sm:$0xff]
        %v558 = vld [vmem:[#allocation2 + $0x8] sm:$0xff]
        %v559 = vld [vmem:[#allocation2 + $0x10] sm:$0xff]
        %s560 = scalar_lea.vmem [#allocation9], 5
        %v561 = vld [vmem:[%s560] ss:$8 sm:$0x3]
        %v563 = vlaneseq
        %v564 = vshrl.u32 %v563, 7
        %v565 = vsub.s32 0, %v564
        %v566 = vrot.slane %v561, %v565
        %v567 = vlaneseq
        %v568 = vshrl.u32 %v567, 7
        %v569 = vsub.s32 1, %v568
        %v570 = vrot.slane %v561, %v569
        %571 = vrot.lane.b32.xlu0 %v566, 110
        %v572 = vpop.permute.xlu0 %571
        %573 = vrot.lane.b32.xlu0 %v570, 110
        %v574 = vpop.permute.xlu0 %573
        %vm575 = vcmask 900096
        %v576 = vsel %vm575, %v572, %v574
        %v580 = vmul.f32 %v557, %v572
        %v581 = vmul.f32 %v558, %v576
        %v582 = vmul.f32 %v559, %v574
        %586 = vrot.lane.b32.xlu0 %v580, 18
        %v587 = vpop.permute.xlu0 %586
        %588 = vrot.lane.b32.xlu0 %v581, 18
        %v589 = vpop.permute.xlu0 %588
        %590 = vrot.lane.b32.xlu0 %v582, 18
        %v591 = vpop.permute.xlu0 %590
        %vm592 = vcmask 146432
        %v593 = vsel %vm592, %v587, %v589
        %v594 = vsel %vm592, %v589, %v591
        %597 = vst [vmem:[#allocation3 + $0x50] sm:$0xff] %v593
        %598 = vst [vmem:[#allocation3 + $0x58] sm:$0xff] %v594
        %v599 = vld [vmem:[#allocation2] sm:$0xff]
        %v600 = vld [vmem:[#allocation2 + $0x8] sm:$0xff]
        %v601 = vld [vmem:[#allocation2 + $0x10] sm:$0xff]
        %s602 = scalar_lea.vmem [#allocation9], 6
        %v603 = vld [vmem:[%s602] ss:$8 sm:$0x3]
        %v605 = vlaneseq
        %v606 = vshrl.u32 %v605, 7
        %v607 = vsub.s32 0, %v606
        %v608 = vrot.slane %v603, %v607
        %v609 = vlaneseq
        %v610 = vshrl.u32 %v609, 7
        %v611 = vsub.s32 1, %v610
        %v612 = vrot.slane %v603, %v611
        %613 = vrot.lane.b32.xlu0 %v608, 111
        %v614 = vpop.permute.xlu0 %613
        %615 = vrot.lane.b32.xlu0 %v612, 111
        %v616 = vpop.permute.xlu0 %615
        %vm617 = vcmask 908288
        %v618 = vsel %vm617, %v614, %v616
        %v622 = vmul.f32 %v599, %v614
        %v623 = vmul.f32 %v600, %v618
        %v624 = vmul.f32 %v601, %v616
        %628 = vrot.lane.b32.xlu0 %v622, 17
        %v629 = vpop.permute.xlu0 %628
        %630 = vrot.lane.b32.xlu0 %v623, 17
        %v631 = vpop.permute.xlu0 %630
        %632 = vrot.lane.b32.xlu0 %v624, 17
        %v633 = vpop.permute.xlu0 %632
        %vm634 = vcmask 138240
        %v635 = vsel %vm634, %v629, %v631
        %v636 = vsel %vm634, %v631, %v633
        %639 = vst [vmem:[#allocation3 + $0x60] sm:$0xff] %v635
        %640 = vst [vmem:[#allocation3 + $0x68] sm:$0xff] %v636
        %v641 = vld [vmem:[#allocation2] sm:$0xff]
        %v642 = vld [vmem:[#allocation2 + $0x8] sm:$0xff]
        %v643 = vld [vmem:[#allocation2 + $0x10] sm:$0xff]
        %s644 = scalar_lea.vmem [#allocation9], 7
        %v645 = vld [vmem:[%s644] ss:$8 sm:$0x3]
        %v647 = vlaneseq
        %v648 = vshrl.u32 %v647, 7
        %v649 = vsub.s32 0, %v648
        %v650 = vrot.slane %v645, %v649
        %v651 = vlaneseq
        %v652 = vshrl.u32 %v651, 7
        %v653 = vsub.s32 1, %v652
        %v654 = vrot.slane %v645, %v653
        %655 = vrot.lane.b32.xlu0 %v650, 112
        %v656 = vpop.permute.xlu0 %655
        %657 = vrot.lane.b32.xlu0 %v654, 112
        %v658 = vpop.permute.xlu0 %657
        %vm659 = vcmask 916480
        %v660 = vsel %vm659, %v656, %v658
        %v664 = vmul.f32 %v641, %v656
        %v665 = vmul.f32 %v642, %v660
        %v666 = vmul.f32 %v643, %v658
        %670 = vrot.lane.b32.xlu0 %v664, 16
        %v671 = vpop.permute.xlu0 %670
        %672 = vrot.lane.b32.xlu0 %v665, 16
        %v673 = vpop.permute.xlu0 %672
        %674 = vrot.lane.b32.xlu0 %v666, 16
        %v675 = vpop.permute.xlu0 %674
        %vm676 = vcmask 130048
        %v677 = vsel %vm676, %v671, %v673
        %v678 = vsel %vm676, %v673, %v675
        %681 = vst [vmem:[#allocation3 + $0x70] sm:$0xff] %v677
        %682 = vst [vmem:[#allocation3 + $0x78] sm:$0xff] %v678
        %v683 = vld [vmem:[#allocation2] sm:$0xff]
        %v684 = vld [vmem:[#allocation2 + $0x8] sm:$0xff]
        %v685 = vld [vmem:[#allocation2 + $0x10] sm:$0xff]
        %s686 = scalar_lea.vmem [#allocation9], 16
        %v687 = vld [vmem:[%s686] ss:$8 sm:$0x3]
        %v689 = vlaneseq
        %v690 = vshrl.u32 %v689, 7
        %v691 = vsub.s32 0, %v690
        %v692 = vrot.slane %v687, %v691
        %v693 = vlaneseq
        %v694 = vshrl.u32 %v693, 7
        %v695 = vsub.s32 1, %v694
        %v696 = vrot.slane %v687, %v695
        %697 = vrot.lane.b32.xlu0 %v692, 113
        %v698 = vpop.permute.xlu0 %697
        %699 = vrot.lane.b32.xlu0 %v696, 113
        %v700 = vpop.permute.xlu0 %699
        %vm701 = vcmask 924672
        %v702 = vsel %vm701, %v698, %v700
        %v706 = vmul.f32 %v683, %v698
        %v707 = vmul.f32 %v684, %v702
        %v708 = vmul.f32 %v685, %v700
        %712 = vrot.lane.b32.xlu0 %v706, 15
        %v713 = vpop.permute.xlu0 %712
        %714 = vrot.lane.b32.xlu0 %v707, 15
        %v715 = vpop.permute.xlu0 %714
        %716 = vrot.lane.b32.xlu0 %v708, 15
        %v717 = vpop.permute.xlu0 %716
        %vm718 = vcmask 121856
        %v719 = vsel %vm718, %v713, %v715
        %v720 = vsel %vm718, %v715, %v717
        %723 = vst [vmem:[#allocation3 + $0x80] sm:$0xff] %v719
        %724 = vst [vmem:[#allocation3 + $0x88] sm:$0xff] %v720
        %v725 = vld [vmem:[#allocation2] sm:$0xff]
        %v726 = vld [vmem:[#allocation2 + $0x8] sm:$0xff]
        %v727 = vld [vmem:[#allocation2 + $0x10] sm:$0xff]
        %s728 = scalar_lea.vmem [#allocation9], 17
        %v729 = vld [vmem:[%s728] ss:$8 sm:$0x3]
        %v731 = vlaneseq
        %v732 = vshrl.u32 %v731, 7
        %v733 = vsub.s32 0, %v732
        %v734 = vrot.slane %v729, %v733
        %v735 = vlaneseq
        %v736 = vshrl.u32 %v735, 7
        %v737 = vsub.s32 1, %v736
        %v738 = vrot.slane %v729, %v737
        %739 = vrot.lane.b32.xlu0 %v734, 114
        %v740 = vpop.permute.xlu0 %739
        %741 = vrot.lane.b32.xlu0 %v738, 114
        %v742 = vpop.permute.xlu0 %741
        %vm743 = vcmask 932864
        %v744 = vsel %vm743, %v740, %v742
        %v748 = vmul.f32 %v725, %v740
        %v749 = vmul.f32 %v726, %v744
        %v750 = vmul.f32 %v727, %v742
        %754 = vrot.lane.b32.xlu0 %v748, 14
        %v755 = vpop.permute.xlu0 %754
        %756 = vrot.lane.b32.xlu0 %v749, 14
        %v757 = vpop.permute.xlu0 %756
        %758 = vrot.lane.b32.xlu0 %v750, 14
        %v759 = vpop.permute.xlu0 %758
        %vm760 = vcmask 113664
        %v761 = vsel %vm760, %v755, %v757
        %v762 = vsel %vm760, %v757, %v759
        %765 = vst [vmem:[#allocation3 + $0x90] sm:$0xff] %v761
        %766 = vst [vmem:[#allocation3 + $0x98] sm:$0xff] %v762
        %v767 = vld [vmem:[#allocation2] sm:$0xff]
        %v768 = vld [vmem:[#allocation2 + $0x8] sm:$0xff]
        %v769 = vld [vmem:[#allocation2 + $0x10] sm:$0xff]
        %s770 = scalar_lea.vmem [#allocation9], 18
        %v771 = vld [vmem:[%s770] ss:$8 sm:$0x3]
        %v773 = vlaneseq
        %v774 = vshrl.u32 %v773, 7
        %v775 = vsub.s32 0, %v774
        %v776 = vrot.slane %v771, %v775
        %v777 = vlaneseq
        %v778 = vshrl.u32 %v777, 7
        %v779 = vsub.s32 1, %v778
        %v780 = vrot.slane %v771, %v779
        %781 = vrot.lane.b32.xlu0 %v776, 126
        %v782 = vpop.permute.xlu0 %781
        %783 = vrot.lane.b32.xlu0 %v780, 126
        %v784 = vpop.permute.xlu0 %783
        %vm785 = vcmask 1031168
        %v786 = vsel %vm785, %v782, %v784
        %v790 = vmul.f32 %v767, %v782
        %v791 = vmul.f32 %v768, %v786
        %v792 = vmul.f32 %v769, %v784
        %796 = vrot.lane.b32.xlu0 %v790, 2
        %v797 = vpop.permute.xlu0 %796
        %798 = vrot.lane.b32.xlu0 %v791, 2
        %v799 = vpop.permute.xlu0 %798
        %800 = vrot.lane.b32.xlu0 %v792, 2
        %v801 = vpop.permute.xlu0 %800
        %vm802 = vcmask 15360
        %v803 = vsel %vm802, %v797, %v799
        %v804 = vsel %vm802, %v799, %v801
        %807 = vst [vmem:[#allocation3 + $0xa0] sm:$0xff] %v803
        %808 = vst [vmem:[#allocation3 + $0xa8] sm:$0xff] %v804
        %v809 = vld [vmem:[#allocation2] sm:$0xff]
        %v810 = vld [vmem:[#allocation2 + $0x8] sm:$0xff]
        %v811 = vld [vmem:[#allocation2 + $0x10] sm:$0xff]
        %s812 = scalar_lea.vmem [#allocation9], 19
        %v813 = vld [vmem:[%s812] ss:$8 sm:$0x3]
        %v815 = vlaneseq
        %v816 = vshrl.u32 %v815, 7
        %v817 = vsub.s32 0, %v816
        %v818 = vrot.slane %v813, %v817
        %v819 = vlaneseq
        %v820 = vshrl.u32 %v819, 7
        %v821 = vsub.s32 1, %v820
        %v822 = vrot.slane %v813, %v821
        %823 = vrot.lane.b32.xlu0 %v818, 127
        %v824 = vpop.permute.xlu0 %823
        %825 = vrot.lane.b32.xlu0 %v822, 127
        %v826 = vpop.permute.xlu0 %825
        %vm827 = vcmask 1039360
        %v828 = vsel %vm827, %v824, %v826
        %v832 = vmul.f32 %v809, %v824
        %v833 = vmul.f32 %v810, %v828
        %v834 = vmul.f32 %v811, %v826
        %838 = vrot.lane.b32.xlu0 %v832, 1
        %v839 = vpop.permute.xlu0 %838
        %840 = vrot.lane.b32.xlu0 %v833, 1
        %v841 = vpop.permute.xlu0 %840
        %842 = vrot.lane.b32.xlu0 %v834, 1
        %v843 = vpop.permute.xlu0 %842
        %vm844 = vcmask 7168
        %v845 = vsel %vm844, %v839, %v841
        %v846 = vsel %vm844, %v841, %v843
        %849 = vst [vmem:[#allocation3 + $0xb0] sm:$0xff] %v845
        %850 = vst [vmem:[#allocation3 + $0xb8] sm:$0xff] %v846
        %v851 = vld [vmem:[#allocation2 + $0x8] sm:$0xff]
        %v852 = vld [vmem:[#allocation2 + $0x10] sm:$0xff]
        %s853 = scalar_lea.vmem [#allocation9], 20
        %v854 = vld [vmem:[%s853] ss:$8 sm:$0x3]
        %v856 = vlaneseq
        %v857 = vshrl.u32 %v856, 7
        %v858 = vsub.s32 0, %v857
        %v859 = vrot.slane %v854, %v858
        %v860 = vlaneseq
        %v861 = vshrl.u32 %v860, 7
        %v862 = vsub.s32 1, %v861
        %v863 = vrot.slane %v854, %v862
        %v866 = vmul.f32 %v851, %v859
        %v867 = vmul.f32 %v852, %v863
        %868 = vst [vmem:[#allocation3 + $0xc0] sm:$0xff] %v866
        %869 = vst [vmem:[#allocation3 + $0xc8] sm:$0xff] %v867
        %v870 = vld [vmem:[#allocation2 + $0x8] sm:$0xff]
        %v871 = vld [vmem:[#allocation2 + $0x10] sm:$0xff]
        %v872 = vld [vmem:[#allocation2 + $0x18] sm:$0xff]
        %s873 = scalar_lea.vmem [#allocation9], 21
        %v874 = vld [vmem:[%s873] ss:$8 sm:$0x3]
        %v876 = vlaneseq
        %v877 = vshrl.u32 %v876, 7
        %v878 = vsub.s32 0, %v877
        %v879 = vrot.slane %v874, %v878
        %v880 = vlaneseq
        %v881 = vshrl.u32 %v880, 7
        %v882 = vsub.s32 1, %v881
        %v883 = vrot.slane %v874, %v882
        %884 = vrot.lane.b32.xlu0 %v879, 1
        %v885 = vpop.permute.xlu0 %884
        %886 = vrot.lane.b32.xlu0 %v883, 1
        %v887 = vpop.permute.xlu0 %886
        %v888 = vsel %vm844, %v885, %v887
        %v892 = vmul.f32 %v870, %v885
        %v893 = vmul.f32 %v871, %v888
        %v894 = vmul.f32 %v872, %v887
        %898 = vrot.lane.b32.xlu0 %v892, 127
        %v899 = vpop.permute.xlu0 %898
        %900 = vrot.lane.b32.xlu0 %v893, 127
        %v901 = vpop.permute.xlu0 %900
        %902 = vrot.lane.b32.xlu0 %v894, 127
        %v903 = vpop.permute.xlu0 %902
        %v904 = vsel %vm827, %v899, %v901
        %v905 = vsel %vm827, %v901, %v903
        %908 = vst [vmem:[#allocation3 + $0xd0] sm:$0xff] %v904
        %909 = vst [vmem:[#allocation3 + $0xd8] sm:$0xff] %v905
        %v910 = vld [vmem:[#allocation2 + $0x8] sm:$0xff]
        %v911 = vld [vmem:[#allocation2 + $0x10] sm:$0xff]
        %v912 = vld [vmem:[#allocation2 + $0x18] sm:$0xff]
        %s913 = scalar_lea.vmem [#allocation9], 22
        %v914 = vld [vmem:[%s913] ss:$8 sm:$0x3]
        %v916 = vlaneseq
        %v917 = vshrl.u32 %v916, 7
        %v918 = vsub.s32 0, %v917
        %v919 = vrot.slane %v914, %v918
        %v920 = vlaneseq
        %v921 = vshrl.u32 %v920, 7
        %v922 = vsub.s32 1, %v921
        %v923 = vrot.slane %v914, %v922
        %924 = vrot.lane.b32.xlu0 %v919, 2
        %v925 = vpop.permute.xlu0 %924
        %926 = vrot.lane.b32.xlu0 %v923, 2
        %v927 = vpop.permute.xlu0 %926
        %v928 = vsel %vm802, %v925, %v927
        %v932 = vmul.f32 %v910, %v925
        %v933 = vmul.f32 %v911, %v928
        %v934 = vmul.f32 %v912, %v927
        %938 = vrot.lane.b32.xlu0 %v932, 126
        %v939 = vpop.permute.xlu0 %938
        %940 = vrot.lane.b32.xlu0 %v933, 126
        %v941 = vpop.permute.xlu0 %940
        %942 = vrot.lane.b32.xlu0 %v934, 126
        %v943 = vpop.permute.xlu0 %942
        %v944 = vsel %vm785, %v939, %v941
        %v945 = vsel %vm785, %v941, %v943
        %948 = vst [vmem:[#allocation3 + $0xe0] sm:$0xff] %v944
        %949 = vst [vmem:[#allocation3 + $0xe8] sm:$0xff] %v945
        %v950 = vld [vmem:[#allocation2 + $0x8] sm:$0xff]
        %v951 = vld [vmem:[#allocation2 + $0x10] sm:$0xff]
        %v952 = vld [vmem:[#allocation2 + $0x18] sm:$0xff]
        %s953 = scalar_lea.vmem [#allocation9], 23
        %v954 = vld [vmem:[%s953] ss:$8 sm:$0x3]
        %v956 = vlaneseq
        %v957 = vshrl.u32 %v956, 7
        %v958 = vsub.s32 0, %v957
        %v959 = vrot.slane %v954, %v958
        %v960 = vlaneseq
        %v961 = vshrl.u32 %v960, 7
        %v962 = vsub.s32 1, %v961
        %v963 = vrot.slane %v954, %v962
        %964 = vrot.lane.b32.xlu0 %v959, 14
        %v965 = vpop.permute.xlu0 %964
        %966 = vrot.lane.b32.xlu0 %v963, 14
        %v967 = vpop.permute.xlu0 %966
        %v968 = vsel %vm760, %v965, %v967
        %v972 = vmul.f32 %v950, %v965
        %v973 = vmul.f32 %v951, %v968
        %v974 = vmul.f32 %v952, %v967
        %978 = vrot.lane.b32.xlu0 %v972, 114
        %v979 = vpop.permute.xlu0 %978
        %980 = vrot.lane.b32.xlu0 %v973, 114
        %v981 = vpop.permute.xlu0 %980
        %982 = vrot.lane.b32.xlu0 %v974, 114
        %v983 = vpop.permute.xlu0 %982
        %v984 = vsel %vm743, %v979, %v981
        %v985 = vsel %vm743, %v981, %v983
        %988 = vst [vmem:[#allocation3 + $0xf0] sm:$0xff] %v984
        %989 = vst [vmem:[#allocation3 + $0xf8] sm:$0xff] %v985
        %v990 = vld [vmem:[#allocation2 + $0x8] sm:$0xff]
        %v991 = vld [vmem:[#allocation2 + $0x10] sm:$0xff]
        %v992 = vld [vmem:[#allocation2 + $0x18] sm:$0xff]
        %s993 = scalar_lea.vmem [#allocation9], 32
        %v994 = vld [vmem:[%s993] ss:$8 sm:$0x3]
        %v996 = vlaneseq
        %v997 = vshrl.u32 %v996, 7
        %v998 = vsub.s32 0, %v997
        %v999 = vrot.slane %v994, %v998
        %v1000 = vlaneseq
        %v1001 = vshrl.u32 %v1000, 7
        %v1002 = vsub.s32 1, %v1001
        %v1003 = vrot.slane %v994, %v1002
        %1004 = vrot.lane.b32.xlu0 %v999, 15
        %v1005 = vpop.permute.xlu0 %1004
        %1006 = vrot.lane.b32.xlu0 %v1003, 15
        %v1007 = vpop.permute.xlu0 %1006
        %v1008 = vsel %vm718, %v1005, %v1007
        %v1012 = vmul.f32 %v990, %v1005
        %v1013 = vmul.f32 %v991, %v1008
        %v1014 = vmul.f32 %v992, %v1007
        %1018 = vrot.lane.b32.xlu0 %v1012, 113
        %v1019 = vpop.permute.xlu0 %1018
        %1020 = vrot.lane.b32.xlu0 %v1013, 113
        %v1021 = vpop.permute.xlu0 %1020
        %1022 = vrot.lane.b32.xlu0 %v1014, 113
        %v1023 = vpop.permute.xlu0 %1022
        %v1024 = vsel %vm701, %v1019, %v1021
        %v1025 = vsel %vm701, %v1021, %v1023
        %1028 = vst [vmem:[#allocation3 + $0x100] sm:$0xff] %v1024
        %1029 = vst [vmem:[#allocation3 + $0x108] sm:$0xff] %v1025
        %v1030 = vld [vmem:[#allocation2 + $0x8] sm:$0xff]
        %v1031 = vld [vmem:[#allocation2 + $0x10] sm:$0xff]
        %v1032 = vld [vmem:[#allocation2 + $0x18] sm:$0xff]
        %s1033 = scalar_lea.vmem [#allocation9], 33
        %v1034 = vld [vmem:[%s1033] ss:$8 sm:$0x3]
        %v1036 = vlaneseq
        %v1037 = vshrl.u32 %v1036, 7
        %v1038 = vsub.s32 0, %v1037
        %v1039 = vrot.slane %v1034, %v1038
        %v1040 = vlaneseq
        %v1041 = vshrl.u32 %v1040, 7
        %v1042 = vsub.s32 1, %v1041
        %v1043 = vrot.slane %v1034, %v1042
        %1044 = vrot.lane.b32.xlu0 %v1039, 16
        %v1045 = vpop.permute.xlu0 %1044
        %1046 = vrot.lane.b32.xlu0 %v1043, 16
        %v1047 = vpop.permute.xlu0 %1046
        %v1048 = vsel %vm676, %v1045, %v1047
        %v1052 = vmul.f32 %v1030, %v1045
        %v1053 = vmul.f32 %v1031, %v1048
        %v1054 = vmul.f32 %v1032, %v1047
        %1058 = vrot.lane.b32.xlu0 %v1052, 112
        %v1059 = vpop.permute.xlu0 %1058
        %1060 = vrot.lane.b32.xlu0 %v1053, 112
        %v1061 = vpop.permute.xlu0 %1060
        %1062 = vrot.lane.b32.xlu0 %v1054, 112
        %v1063 = vpop.permute.xlu0 %1062
        %v1064 = vsel %vm659, %v1059, %v1061
        %v1065 = vsel %vm659, %v1061, %v1063
        %1068 = vst [vmem:[#allocation3 + $0x110] sm:$0xff] %v1064
        %1069 = vst [vmem:[#allocation3 + $0x118] sm:$0xff] %v1065
        %v1070 = vld [vmem:[#allocation2 + $0x8] sm:$0xff]
        %v1071 = vld [vmem:[#allocation2 + $0x10] sm:$0xff]
        %v1072 = vld [vmem:[#allocation2 + $0x18] sm:$0xff]
        %s1073 = scalar_lea.vmem [#allocation9], 34
        %v1074 = vld [vmem:[%s1073] ss:$8 sm:$0x3]
        %v1076 = vlaneseq
        %v1077 = vshrl.u32 %v1076, 7
        %v1078 = vsub.s32 0, %v1077
        %v1079 = vrot.slane %v1074, %v1078
        %v1080 = vlaneseq
        %v1081 = vshrl.u32 %v1080, 7
        %v1082 = vsub.s32 1, %v1081
        %v1083 = vrot.slane %v1074, %v1082
        %1084 = vrot.lane.b32.xlu0 %v1079, 17
        %v1085 = vpop.permute.xlu0 %1084
        %1086 = vrot.lane.b32.xlu0 %v1083, 17
        %v1087 = vpop.permute.xlu0 %1086
        %v1088 = vsel %vm634, %v1085, %v1087
        %v1092 = vmul.f32 %v1070, %v1085
        %v1093 = vmul.f32 %v1071, %v1088
        %v1094 = vmul.f32 %v1072, %v1087
        %1098 = vrot.lane.b32.xlu0 %v1092, 111
        %v1099 = vpop.permute.xlu0 %1098
        %1100 = vrot.lane.b32.xlu0 %v1093, 111
        %v1101 = vpop.permute.xlu0 %1100
        %1102 = vrot.lane.b32.xlu0 %v1094, 111
        %v1103 = vpop.permute.xlu0 %1102
        %v1104 = vsel %vm617, %v1099, %v1101
        %v1105 = vsel %vm617, %v1101, %v1103
        %1108 = vst [vmem:[#allocation3 + $0x120] sm:$0xff] %v1104
        %1109 = vst [vmem:[#allocation3 + $0x128] sm:$0xff] %v1105
        %v1110 = vld [vmem:[#allocation2 + $0x8] sm:$0xff]
        %v1111 = vld [vmem:[#allocation2 + $0x10] sm:$0xff]
        %v1112 = vld [vmem:[#allocation2 + $0x18] sm:$0xff]
        %s1113 = scalar_lea.vmem [#allocation9], 35
        %v1114 = vld [vmem:[%s1113] ss:$8 sm:$0x3]
        %v1116 = vlaneseq
        %v1117 = vshrl.u32 %v1116, 7
        %v1118 = vsub.s32 0, %v1117
        %v1119 = vrot.slane %v1114, %v1118
        %v1120 = vlaneseq
        %v1121 = vshrl.u32 %v1120, 7
        %v1122 = vsub.s32 1, %v1121
        %v1123 = vrot.slane %v1114, %v1122
        %1124 = vrot.lane.b32.xlu0 %v1119, 18
        %v1125 = vpop.permute.xlu0 %1124
        %1126 = vrot.lane.b32.xlu0 %v1123, 18
        %v1127 = vpop.permute.xlu0 %1126
        %v1128 = vsel %vm592, %v1125, %v1127
        %v1132 = vmul.f32 %v1110, %v1125
        %v1133 = vmul.f32 %v1111, %v1128
        %v1134 = vmul.f32 %v1112, %v1127
        %1138 = vrot.lane.b32.xlu0 %v1132, 110
        %v1139 = vpop.permute.xlu0 %1138
        %1140 = vrot.lane.b32.xlu0 %v1133, 110
        %v1141 = vpop.permute.xlu0 %1140
        %1142 = vrot.lane.b32.xlu0 %v1134, 110
        %v1143 = vpop.permute.xlu0 %1142
        %v1144 = vsel %vm575, %v1139, %v1141
        %v1145 = vsel %vm575, %v1141, %v1143
        %1148 = vst [vmem:[#allocation3 + $0x130] sm:$0xff] %v1144
        %1149 = vst [vmem:[#allocation3 + $0x138] sm:$0xff] %v1145
        %v1150 = vld [vmem:[#allocation2 + $0x8] sm:$0xff]
        %v1151 = vld [vmem:[#allocation2 + $0x10] sm:$0xff]
        %v1152 = vld [vmem:[#allocation2 + $0x18] sm:$0xff]
        %s1153 = scalar_lea.vmem [#allocation9], 36
        %v1154 = vld [vmem:[%s1153] ss:$8 sm:$0x3]
        %v1156 = vlaneseq
        %v1157 = vshrl.u32 %v1156, 7
        %v1158 = vsub.s32 0, %v1157
        %v1159 = vrot.slane %v1154, %v1158
        %v1160 = vlaneseq
        %v1161 = vshrl.u32 %v1160, 7
        %v1162 = vsub.s32 1, %v1161
        %v1163 = vrot.slane %v1154, %v1162
        %1164 = vrot.lane.b32.xlu0 %v1159, 30
        %v1165 = vpop.permute.xlu0 %1164
        %1166 = vrot.lane.b32.xlu0 %v1163, 30
        %v1167 = vpop.permute.xlu0 %1166
        %v1168 = vsel %vm550, %v1165, %v1167
        %v1172 = vmul.f32 %v1150, %v1165
        %v1173 = vmul.f32 %v1151, %v1168
        %v1174 = vmul.f32 %v1152, %v1167
        %1178 = vrot.lane.b32.xlu0 %v1172, 98
        %v1179 = vpop.permute.xlu0 %1178
        %1180 = vrot.lane.b32.xlu0 %v1173, 98
        %v1181 = vpop.permute.xlu0 %1180
        %1182 = vrot.lane.b32.xlu0 %v1174, 98
        %v1183 = vpop.permute.xlu0 %1182
        %v1184 = vsel %vm533, %v1179, %v1181
        %v1185 = vsel %vm533, %v1181, %v1183
        %1188 = vst [vmem:[#allocation3 + $0x140] sm:$0xff] %v1184
        %1189 = vst [vmem:[#allocation3 + $0x148] sm:$0xff] %v1185
        %v1190 = vld [vmem:[#allocation2 + $0x8] sm:$0xff]
        %v1191 = vld [vmem:[#allocation2 + $0x10] sm:$0xff]
        %v1192 = vld [vmem:[#allocation2 + $0x18] sm:$0xff]
        %s1193 = scalar_lea.vmem [#allocation9], 37
        %v1194 = vld [vmem:[%s1193] ss:$8 sm:$0x3]
        %v1196 = vlaneseq
        %v1197 = vshrl.u32 %v1196, 7
        %v1198 = vsub.s32 0, %v1197
        %v1199 = vrot.slane %v1194, %v1198
        %v1200 = vlaneseq
        %v1201 = vshrl.u32 %v1200, 7
        %v1202 = vsub.s32 1, %v1201
        %v1203 = vrot.slane %v1194, %v1202
        %1204 = vrot.lane.b32.xlu0 %v1199, 31
        %v1205 = vpop.permute.xlu0 %1204
        %1206 = vrot.lane.b32.xlu0 %v1203, 31
        %v1207 = vpop.permute.xlu0 %1206
        %v1208 = vsel %vm508, %v1205, %v1207
        %v1212 = vmul.f32 %v1190, %v1205
        %v1213 = vmul.f32 %v1191, %v1208
        %v1214 = vmul.f32 %v1192, %v1207
        %1218 = vrot.lane.b32.xlu0 %v1212, 97
        %v1219 = vpop.permute.xlu0 %1218
        %1220 = vrot.lane.b32.xlu0 %v1213, 97
        %v1221 = vpop.permute.xlu0 %1220
        %1222 = vrot.lane.b32.xlu0 %v1214, 97
        %v1223 = vpop.permute.xlu0 %1222
        %v1224 = vsel %vm491, %v1219, %v1221
        %v1225 = vsel %vm491, %v1221, %v1223
        %1228 = vst [vmem:[#allocation3 + $0x150] sm:$0xff] %v1224
        %1229 = vst [vmem:[#allocation3 + $0x158] sm:$0xff] %v1225
        %v1230 = vld [vmem:[#allocation2 + $0x8] sm:$0xff]
        %v1231 = vld [vmem:[#allocation2 + $0x10] sm:$0xff]
        %v1232 = vld [vmem:[#allocation2 + $0x18] sm:$0xff]
        %s1233 = scalar_lea.vmem [#allocation9], 38
        %v1234 = vld [vmem:[%s1233] ss:$8 sm:$0x3]
        %v1236 = vlaneseq
        %v1237 = vshrl.u32 %v1236, 7
        %v1238 = vsub.s32 0, %v1237
        %v1239 = vrot.slane %v1234, %v1238
        %v1240 = vlaneseq
        %v1241 = vshrl.u32 %v1240, 7
        %v1242 = vsub.s32 1, %v1241
        %v1243 = vrot.slane %v1234, %v1242
        %1244 = vrot.lane.b32.xlu0 %v1239, 32
        %v1245 = vpop.permute.xlu0 %1244
        %1246 = vrot.lane.b32.xlu0 %v1243, 32
        %v1247 = vpop.permute.xlu0 %1246
        %v1248 = vsel %vm466, %v1245, %v1247
        %v1252 = vmul.f32 %v1230, %v1245
        %v1253 = vmul.f32 %v1231, %v1248
        %v1254 = vmul.f32 %v1232, %v1247
        %1258 = vrot.lane.b32.xlu0 %v1252, 96
        %v1259 = vpop.permute.xlu0 %1258
        %1260 = vrot.lane.b32.xlu0 %v1253, 96
        %v1261 = vpop.permute.xlu0 %1260
        %1262 = vrot.lane.b32.xlu0 %v1254, 96
        %v1263 = vpop.permute.xlu0 %1262
        %v1264 = vsel %vm449, %v1259, %v1261
        %v1265 = vsel %vm449, %v1261, %v1263
        %1268 = vst [vmem:[#allocation3 + $0x160] sm:$0xff] %v1264
        %1269 = vst [vmem:[#allocation3 + $0x168] sm:$0xff] %v1265
        %v1270 = vld [vmem:[#allocation2 + $0x8] sm:$0xff]
        %v1271 = vld [vmem:[#allocation2 + $0x10] sm:$0xff]
        %v1272 = vld [vmem:[#allocation2 + $0x18] sm:$0xff]
        %s1273 = scalar_lea.vmem [#allocation9], 39
        %v1274 = vld [vmem:[%s1273] ss:$8 sm:$0x3]
        %v1276 = vlaneseq
        %v1277 = vshrl.u32 %v1276, 7
        %v1278 = vsub.s32 0, %v1277
        %v1279 = vrot.slane %v1274, %v1278
        %v1280 = vlaneseq
        %v1281 = vshrl.u32 %v1280, 7
        %v1282 = vsub.s32 1, %v1281
        %v1283 = vrot.slane %v1274, %v1282
        %1284 = vrot.lane.b32.xlu0 %v1279, 33
        %v1285 = vpop.permute.xlu0 %1284
        %1286 = vrot.lane.b32.xlu0 %v1283, 33
        %v1287 = vpop.permute.xlu0 %1286
        %v1288 = vsel %vm424, %v1285, %v1287
        %v1292 = vmul.f32 %v1270, %v1285
        %v1293 = vmul.f32 %v1271, %v1288
        %v1294 = vmul.f32 %v1272, %v1287
        %1298 = vrot.lane.b32.xlu0 %v1292, 95
        %v1299 = vpop.permute.xlu0 %1298
        %1300 = vrot.lane.b32.xlu0 %v1293, 95
        %v1301 = vpop.permute.xlu0 %1300
        %1302 = vrot.lane.b32.xlu0 %v1294, 95
        %v1303 = vpop.permute.xlu0 %1302
        %v1304 = vsel %vm407, %v1299, %v1301
        %v1305 = vsel %vm407, %v1301, %v1303
        %1308 = vst [vmem:[#allocation3 + $0x170] sm:$0xff] %v1304
        %1309 = vst [vmem:[#allocation3 + $0x178] sm:$0xff] %v1305
        %v1310 = vld [vmem:[#allocation2 + $0x8] sm:$0xff]
        %v1311 = vld [vmem:[#allocation2 + $0x10] sm:$0xff]
        %v1312 = vld [vmem:[#allocation2 + $0x18] sm:$0xff]
        %s1313 = scalar_lea.vmem [#allocation9], 48
        %v1314 = vld [vmem:[%s1313] ss:$8 sm:$0x3]
        %v1316 = vlaneseq
        %v1317 = vshrl.u32 %v1316, 7
        %v1318 = vsub.s32 0, %v1317
        %v1319 = vrot.slane %v1314, %v1318
        %v1320 = vlaneseq
        %v1321 = vshrl.u32 %v1320, 7
        %v1322 = vsub.s32 1, %v1321
        %v1323 = vrot.slane %v1314, %v1322
        %1324 = vrot.lane.b32.xlu0 %v1319, 34
        %v1325 = vpop.permute.xlu0 %1324
        %1326 = vrot.lane.b32.xlu0 %v1323, 34
        %v1327 = vpop.permute.xlu0 %1326
        %v1328 = vsel %vm382, %v1325, %v1327
        %v1332 = vmul.f32 %v1310, %v1325
        %v1333 = vmul.f32 %v1311, %v1328
        %v1334 = vmul.f32 %v1312, %v1327
        %1338 = vrot.lane.b32.xlu0 %v1332, 94
        %v1339 = vpop.permute.xlu0 %1338
        %1340 = vrot.lane.b32.xlu0 %v1333, 94
        %v1341 = vpop.permute.xlu0 %1340
        %1342 = vrot.lane.b32.xlu0 %v1334, 94
        %v1343 = vpop.permute.xlu0 %1342
        %v1344 = vsel %vm365, %v1339, %v1341
        %v1345 = vsel %vm365, %v1341, %v1343
        %1348 = vst [vmem:[#allocation3 + $0x180] sm:$0xff] %v1344
        %1349 = vst [vmem:[#allocation3 + $0x188] sm:$0xff] %v1345
        %v1350 = vld [vmem:[#allocation12] sm:$0xff]
        %v1351 = vld [vmem:[#allocation12 + $0x8] sm:$0xff]
        %v1352 = vld [vmem:[#allocation12 + $0x10] sm:$0xff]
        %v1353 = vld [vmem:[#allocation12 + $0x18] sm:$0xff]
        %v1354 = vld [vmem:[#allocation12 + $0x20] sm:$0xff]
        %v1355 = vld [vmem:[#allocation12 + $0x28] sm:$0xff]
        %v1356 = vld [vmem:[#allocation12 + $0x30] sm:$0xff]
        %v1357 = vld [vmem:[#allocation12 + $0x38] sm:$0xff]
        %v1358 = vld [vmem:[#allocation3] sm:$0xff]
        %v1359 = vld [vmem:[#allocation3 + $0x8] sm:$0xff]
        %v1360 = vld [vmem:[#allocation3 + $0x10] sm:$0xff]
        %v1361 = vld [vmem:[#allocation3 + $0x18] sm:$0xff]
        %v1362 = vld [vmem:[#allocation3 + $0x20] sm:$0xff]
        %v1363 = vld [vmem:[#allocation3 + $0x28] sm:$0xff]
        %v1364 = vld [vmem:[#allocation3 + $0x30] sm:$0xff]
        %v1365 = vld [vmem:[#allocation3 + $0x38] sm:$0xff]
        %v1366 = vld [vmem:[#allocation3 + $0x40] sm:$0xff]
        %v1367 = vld [vmem:[#allocation3 + $0x48] sm:$0xff]
        %v1368 = vld [vmem:[#allocation3 + $0x50] sm:$0xff]
        %v1369 = vld [vmem:[#allocation3 + $0x58] sm:$0xff]
        %v1370 = vld [vmem:[#allocation3 + $0x60] sm:$0xff]
        %v1371 = vld [vmem:[#allocation3 + $0x68] sm:$0xff]
        %v1372 = vld [vmem:[#allocation3 + $0x70] sm:$0xff]
        %v1373 = vld [vmem:[#allocation3 + $0x78] sm:$0xff]
        %v1374 = vld [vmem:[#allocation3 + $0x80] sm:$0xff]
        %v1375 = vld [vmem:[#allocation3 + $0x88] sm:$0xff]
        %v1376 = vld [vmem:[#allocation3 + $0x90] sm:$0xff]
        %v1377 = vld [vmem:[#allocation3 + $0x98] sm:$0xff]
        %v1378 = vld [vmem:[#allocation3 + $0xa0] sm:$0xff]
        %v1379 = vld [vmem:[#allocation3 + $0xa8] sm:$0xff]
        %v1380 = vld [vmem:[#allocation3 + $0xb0] sm:$0xff]
        %v1381 = vld [vmem:[#allocation3 + $0xb8] sm:$0xff]
        %v1382 = vld [vmem:[#allocation3 + $0xc0] sm:$0xff]
        %v1383 = vld [vmem:[#allocation3 + $0xc8] sm:$0xff]
        %v1384 = vld [vmem:[#allocation3 + $0xd0] sm:$0xff]
        %v1385 = vld [vmem:[#allocation3 + $0xd8] sm:$0xff]
        %v1386 = vld [vmem:[#allocation3 + $0xe0] sm:$0xff]
        %v1387 = vld [vmem:[#allocation3 + $0xe8] sm:$0xff]
        %v1388 = vld [vmem:[#allocation3 + $0xf0] sm:$0xff]
        %v1389 = vld [vmem:[#allocation3 + $0xf8] sm:$0xff]
        %v1390 = vld [vmem:[#allocation3 + $0x100] sm:$0xff]
        %v1391 = vld [vmem:[#allocation3 + $0x108] sm:$0xff]
        %v1392 = vld [vmem:[#allocation3 + $0x110] sm:$0xff]
        %v1393 = vld [vmem:[#allocation3 + $0x118] sm:$0xff]
        %v1394 = vld [vmem:[#allocation3 + $0x120] sm:$0xff]
        %v1395 = vld [vmem:[#allocation3 + $0x128] sm:$0xff]
        %v1396 = vld [vmem:[#allocation3 + $0x130] sm:$0xff]
        %v1397 = vld [vmem:[#allocation3 + $0x138] sm:$0xff]
        %v1398 = vld [vmem:[#allocation3 + $0x140] sm:$0xff]
        %v1399 = vld [vmem:[#allocation3 + $0x148] sm:$0xff]
        %v1400 = vld [vmem:[#allocation3 + $0x150] sm:$0xff]
        %v1401 = vld [vmem:[#allocation3 + $0x158] sm:$0xff]
        %v1402 = vld [vmem:[#allocation3 + $0x160] sm:$0xff]
        %v1403 = vld [vmem:[#allocation3 + $0x168] sm:$0xff]
        %v1404 = vld [vmem:[#allocation3 + $0x170] sm:$0xff]
        %v1405 = vld [vmem:[#allocation3 + $0x178] sm:$0xff]
        %v1406 = vld [vmem:[#allocation3 + $0x180] sm:$0xff]
        %v1407 = vld [vmem:[#allocation3 + $0x188] sm:$0xff]
        %v1408 = vld [vmem:[#allocation14] sm:$0xff]
        %v1409 = vld [vmem:[#allocation14 + $0x8] sm:$0xff]
        %v1410 = vld [vmem:[#allocation14 + $0x10] sm:$0xff]
        %v1411 = vld [vmem:[#allocation14 + $0x18] sm:$0xff]
        %1413 = vset.pattern.permute.xlu0 0
        %1414 = vperm.xlu0 %1413, %v1408
        %v1415 = vpop.permute.xlu0 %1414
        %1418 = vset.pattern.permute.xlu0 0
        %1419 = vperm.xlu0 %1418, %v1409
        %v1420 = vpop.permute.xlu0 %1419
        %1423 = vset.pattern.permute.xlu0 0
        %1424 = vperm.xlu0 %1423, %v1410
        %v1425 = vpop.permute.xlu0 %1424
        %1428 = vset.pattern.permute.xlu0 0
        %1429 = vperm.xlu0 %1428, %v1411
        %v1430 = vpop.permute.xlu0 %1429
        %vm1432 = vcmask 588800
        %v1434 = vsel %vm1432, %v1351, 0
        %v1437 = vsel %vm1432, %v1353, 0
        %v1440 = vsel %vm1432, %v1355, 0
        %v1443 = vsel %vm1432, %v1357, 0
        %1445 = vmatprep.subr.mxu0 %v1359
        %1446 = vmatpush1.msra.mxu0 %v1358
        %1447 = vmatprep.subr.mxu0 %v1361
        %1448 = vmatpush1.msra.mxu0 %v1360
        %1449 = vmatprep.subr.mxu0 %v1363
        %1450 = vmatpush1.msra.mxu0 %v1362
        %1451 = vmatprep.subr.mxu0 %v1365
        %1452 = vmatpush1.msra.mxu0 %v1364
        %1453 = vmatprep.subr.mxu0 %v1367
        %1454 = vmatpush1.msra.mxu0 %v1366
        %1455 = vmatprep.subr.mxu0 %v1369
        %1456 = vmatpush1.msra.mxu0 %v1368
        %1457 = vmatprep.subr.mxu0 %v1371
        %1458 = vmatpush1.msra.mxu0 %v1370
        %1459 = vmatprep.subr.mxu0 %v1373
        %1460 = vmatpush1.msra.mxu0 %v1372
        %1461 = vmatprep.subr.mxu0 %v1375
        %1462 = vmatpush1.msra.mxu0 %v1374
        %1463 = vmatprep.subr.mxu0 %v1377
        %1464 = vmatpush1.msra.mxu0 %v1376
        %1465 = vmatprep.subr.mxu0 %v1379
        %1466 = vmatpush1.msra.mxu0 %v1378
        %1467 = vmatprep.subr.mxu0 %v1381
        %1468 = vmatpush1.msra.mxu0 %v1380
        %1469 = vmatprep.subr.mxu0 %v1383
        %1470 = vmatpush1.msra.mxu0 %v1382
        %1471 = vmatprep.subr.mxu0 %v1385
        %1472 = vmatpush1.msra.mxu0 %v1384
        %1473 = vmatprep.subr.mxu0 %v1387
        %1474 = vmatpush1.msra.mxu0 %v1386
        %1475 = vmatprep.subr.mxu0 %v1389
        %1476 = vmatpush1.msra.mxu0 %v1388
        %1477 = vmatprep.subr.mxu0 %v1391
        %1478 = vmatpush1.msra.mxu0 %v1390
        %1479 = vmatprep.subr.mxu0 %v1393
        %1480 = vmatpush1.msra.mxu0 %v1392
        %1481 = vmatprep.subr.mxu0 %v1395
        %1482 = vmatpush1.msra.mxu0 %v1394
        %1483 = vmatprep.subr.mxu0 %v1397
        %1484 = vmatpush1.msra.mxu0 %v1396
        %1485 = vmatprep.subr.mxu0 %v1399
        %1486 = vmatpush1.msra.mxu0 %v1398
        %1487 = vmatprep.subr.mxu0 %v1401
        %1488 = vmatpush1.msra.mxu0 %v1400
        %1489 = vmatprep.subr.mxu0 %v1403
        %1490 = vmatpush1.msra.mxu0 %v1402
        %1491 = vmatprep.subr.mxu0 %v1405
        %1492 = vmatpush1.msra.mxu0 %v1404
        %1493 = vmatprep.subr.mxu0 %v1407
        %1494 = vmatpush1.msra.mxu0 %v1406
        %1495 = vmatprep.subr.mxu0 0.0
        %1496 = vmatpush1.msra.mxu0 0.0
        %1497 = vmatprep.subr.mxu0 0.0
        %1498 = vmatpush1.msra.mxu0 0.0
        %1499 = vmatprep.subr.mxu0 0.0
        %1500 = vmatpush1.msra.mxu0 0.0
        %1501 = vmatprep.subr.mxu0 0.0
        %1502 = vmatpush1.msra.mxu0 0.0
        %1503 = vmatprep.subr.mxu0 0.0
        %1504 = vmatpush1.msra.mxu0 0.0
        %1505 = vmatprep.subr.mxu0 0.0
        %1506 = vmatpush1.msra.mxu0 0.0
        %1507 = vmatprep.subr.mxu0 0.0
        %1508 = vmatpush1.msra.mxu0 0.0
        %1509 = vmatprep.mubr.f32.mxu0 %v1434
        %1510 = vmatmul.mubr.f32.gmra.mrb[0].mxu0 %v1350
        %v1511 = vpop.f32.mrb[0].mxu0
        %v1512 = vadd.f32 %v1415, %v1511
        %v1513 = vpop.f32.mrb[0].mxu0
        %v1514 = vadd.f32 %v1415, %v1513
        %1515 = vmatprep.mubr.f32.mxu0 %v1437
        %1516 = vmatmul.mubr.f32.gmra.mrb[0].mxu0 %v1352
        %v1517 = vpop.f32.mrb[0].mxu0
        %v1518 = vadd.f32 %v1420, %v1517
        %v1519 = vpop.f32.mrb[0].mxu0
        %v1520 = vadd.f32 %v1420, %v1519
        %1521 = vmatprep.mubr.f32.mxu0 %v1440
        %1522 = vmatmul.mubr.f32.gmra.mrb[0].mxu0 %v1354
        %v1523 = vpop.f32.mrb[0].mxu0
        %v1524 = vadd.f32 %v1425, %v1523
        %v1525 = vpop.f32.mrb[0].mxu0
        %v1526 = vadd.f32 %v1425, %v1525
        %1527 = vmatprep.mubr.f32.mxu0 %v1443
        %1528 = vmatmul.mubr.f32.gmra.mrb[0].mxu0 %v1356
        %v1529 = vpop.f32.mrb[0].mxu0
        %v1530 = vadd.f32 %v1430, %v1529
        %v1531 = vpop.f32.mrb[0].mxu0
        %v1532 = vadd.f32 %v1430, %v1531
        %1533 = vdwg.mxu0
        %s1534 = sld [smem:[#allocation15]]
        %vm1535 = vcmp.ge.f32.partialorder %v1512, 0.0
        %vm1536 = vcmp.ge.f32.partialorder %v1514, 0.0
        %vm1537 = vcmp.ge.f32.partialorder %v1518, 0.0
        %vm1538 = vcmp.ge.f32.partialorder %v1520, 0.0
        %vm1539 = vcmp.ge.f32.partialorder %v1524, 0.0
        %vm1540 = vcmp.ge.f32.partialorder %v1526, 0.0
        %vm1541 = vcmp.ge.f32.partialorder %v1530, 0.0
        %vm1542 = vcmp.ge.f32.partialorder %v1532, 0.0
        %v1543 = vstv %s1534
        %v1544 = vmul.f32 %v1543, %v1512
        %v1545 = vmul.f32 %v1543, %v1514
        %v1546 = vmul.f32 %v1543, %v1518
        %v1547 = vmul.f32 %v1543, %v1520
        %v1548 = vmul.f32 %v1543, %v1524
        %v1549 = vmul.f32 %v1543, %v1526
        %v1550 = vmul.f32 %v1543, %v1530
        %v1551 = vmul.f32 %v1543, %v1532
        %v1552 = vsel %vm1535, %v1512, %v1544
        %v1553 = vsel %vm1536, %v1514, %v1545
        %v1554 = vsel %vm1537, %v1518, %v1546
        %v1555 = vsel %vm1538, %v1520, %v1547
        %v1556 = vsel %vm1539, %v1524, %v1548
        %v1557 = vsel %vm1540, %v1526, %v1549
        %v1558 = vsel %vm1541, %v1530, %v1550
        %v1559 = vsel %vm1542, %v1532, %v1551
        %v1560 = vld [vmem:[#allocation12 + $0x40] sm:$0xff]
        %v1561 = vld [vmem:[#allocation14 + $0x20] sm:$0xff]
        %1563 = vset.pattern.permute.xlu0 0
        %1564 = vperm.xlu0 %1563, %v1561
        %v1565 = vpop.permute.xlu0 %1564
        %v1568 = vsel %vm466, %v1560, 0
        %1570 = vmatprep.subr.mxu0 %v1553
        %1571 = vmatpush1.msra.mxu0 %v1552
        %1572 = vmatprep.subr.mxu0 %v1555
        %1573 = vmatpush1.msra.mxu0 %v1554
        %1574 = vmatprep.subr.mxu0 %v1557
        %1575 = vmatpush1.msra.mxu0 %v1556
        %1576 = vmatprep.subr.mxu0 %v1559
        %1577 = vmatpush1.msra.mxu0 %v1558
        %1578 = vmatprep.subr.mxu0 0.0
        %1579 = vmatpush1.msra.mxu0 0.0
        %1580 = vmatprep.subr.mxu0 0.0
        %1581 = vmatpush1.msra.mxu0 0.0
        %1582 = vmatprep.subr.mxu0 0.0
        %1583 = vmatpush1.msra.mxu0 0.0
        %1584 = vmatprep.subr.mxu0 0.0
        %1585 = vmatpush1.msra.mxu0 0.0
        %1586 = vmatprep.subr.mxu0 0.0
        %1587 = vmatpush1.msra.mxu0 0.0
        %1588 = vmatprep.subr.mxu0 0.0
        %1589 = vmatpush1.msra.mxu0 0.0
        %1590 = vmatprep.subr.mxu0 0.0
        %1591 = vmatpush1.msra.mxu0 0.0
        %1592 = vmatprep.subr.mxu0 0.0
        %1593 = vmatpush1.msra.mxu0 0.0
        %1594 = vmatprep.subr.mxu0 0.0
        %1595 = vmatpush1.msra.mxu0 0.0
        %1596 = vmatprep.subr.mxu0 0.0
        %1597 = vmatpush1.msra.mxu0 0.0
        %1598 = vmatprep.subr.mxu0 0.0
        %1599 = vmatpush1.msra.mxu0 0.0
        %1600 = vmatprep.subr.mxu0 0.0
        %1601 = vmatpush1.msra.mxu0 0.0
        %1602 = vmatprep.subr.mxu0 0.0
        %1603 = vmatpush1.msra.mxu0 0.0
        %1604 = vmatprep.subr.mxu0 0.0
        %1605 = vmatpush1.msra.mxu0 0.0
        %1606 = vmatprep.subr.mxu0 0.0
        %1607 = vmatpush1.msra.mxu0 0.0
        %1608 = vmatprep.subr.mxu0 0.0
        %1609 = vmatpush1.msra.mxu0 0.0
        %1610 = vmatprep.subr.mxu0 0.0
        %1611 = vmatpush1.msra.mxu0 0.0
        %1612 = vmatprep.subr.mxu0 0.0
        %1613 = vmatpush1.msra.mxu0 0.0
        %1614 = vmatprep.subr.mxu0 0.0
        %1615 = vmatpush1.msra.mxu0 0.0
        %1616 = vmatprep.subr.mxu0 0.0
        %1617 = vmatpush1.msra.mxu0 0.0
        %1618 = vmatprep.subr.mxu0 0.0
        %1619 = vmatpush1.msra.mxu0 0.0
        %1620 = vmatprep.subr.mxu0 0.0
        %1621 = vmatpush1.msra.mxu0 0.0
        %1622 = vmatprep.subr.mxu0 0.0
        %1623 = vmatpush1.msra.mxu0 0.0
        %1624 = vmatprep.subr.mxu0 0.0
        %1625 = vmatpush1.msra.mxu0 0.0
        %1626 = vmatprep.subr.mxu0 0.0
        %1627 = vmatpush1.msra.mxu0 0.0
        %1628 = vmatprep.subr.mxu0 0.0
        %1629 = vmatpush1.msra.mxu0 0.0
        %1630 = vmatprep.subr.mxu0 0.0
        %1631 = vmatpush1.msra.mxu0 0.0
        %1632 = vmatprep.subr.mxu0 0.0
        %1633 = vmatpush1.msra.mxu0 0.0
        %1634 = vmatprep.mubr.f32.mxu0 0.0
        %1635 = vmatmul.mubr.f32.gmra.mrb[0].mxu0 %v1568
        %v1636 = vpop.f32.mrb[0].mxu0
        %v1637 = vadd.f32 %v1565, %v1636
        %v1638 = vpop.f32.mrb[0].mxu0
        %v1639 = vadd.f32 %v1565, %v1638
        %1640 = vdwg.mxu0
        %s1641 = sld [smem:[#allocation15 + $0x1]]
        %vm1642 = vcmp.ge.f32.partialorder %v1637, 0.0
        %vm1643 = vcmp.ge.f32.partialorder %v1639, 0.0
        %v1644 = vstv %s1641
        %v1645 = vmul.f32 %v1644, %v1637
        %v1646 = vmul.f32 %v1644, %v1639
        %v1647 = vsel %vm1642, %v1637, %v1645
        %v1648 = vsel %vm1643, %v1639, %v1646
        %1649 = vst [vmem:[#allocation4] sm:$0xff] 0.0
        %1650 = vst [vmem:[#allocation4 + $0x8] sm:$0xff] 0.0
        %1651 = vst [vmem:[#allocation4 + $0x10] sm:$0xff] 0.0
        %1652 = vst [vmem:[#allocation4 + $0x18] sm:$0xff] 0.0
        %1653 = vst [vmem:[#allocation4 + $0x8] sm:$0xff] %v1647
        %1654 = vst [vmem:[#allocation4 + $0x10] sm:$0xff] %v1648
        %v1655 = vld [vmem:[#allocation4] sm:$0xff]
        %v1656 = vld [vmem:[#allocation4 + $0x8] sm:$0xff]
        %v1657 = vld [vmem:[#allocation4 + $0x10] sm:$0xff]
        %v1658 = vld [vmem:[#allocation11] ss:$8 sm:$0x3]
        %v1660 = vlaneseq
        %v1661 = vshrl.u32 %v1660, 7
        %v1662 = vsub.s32 0, %v1661
        %v1663 = vrot.slane %v1658, %v1662
        %v1664 = vlaneseq
        %v1665 = vshrl.u32 %v1664, 7
        %v1666 = vsub.s32 1, %v1665
        %v1667 = vrot.slane %v1658, %v1666
        %1668 = vrot.lane.b32.xlu0 %v1663, 111
        %v1669 = vpop.permute.xlu0 %1668
        %1670 = vrot.lane.b32.xlu0 %v1667, 111
        %v1671 = vpop.permute.xlu0 %1670
        %v1672 = vsel %vm617, %v1669, %v1671
        %v1676 = vmul.f32 %v1655, %v1669
        %v1677 = vmul.f32 %v1656, %v1672
        %v1678 = vmul.f32 %v1657, %v1671
        %v1679 = vld [vmem:[#allocation12 + $0x50] sm:$0xff]
        %s1680 = scalar_lea.vmem [#allocation11], 1
        %v1681 = vld [vmem:[%s1680] ss:$8 sm:$0x3]
        %v1683 = vlaneseq
        %v1684 = vshrl.u32 %v1683, 7
        %v1685 = vsub.s32 0, %v1684
        %v1686 = vrot.slane %v1681, %v1685
        %v1687 = vlaneseq
        %v1688 = vshrl.u32 %v1687, 7
        %v1689 = vsub.s32 1, %v1688
        %v1690 = vrot.slane %v1681, %v1689
        %1691 = vrot.lane.b32.xlu0 %v1686, 112
        %v1692 = vpop.permute.xlu0 %1691
        %1693 = vrot.lane.b32.xlu0 %v1690, 112
        %v1694 = vpop.permute.xlu0 %1693
        %v1695 = vsel %vm659, %v1692, %v1694
        %v1699 = vmul.f32 %v1655, %v1692
        %v1700 = vmul.f32 %v1656, %v1695
        %v1701 = vmul.f32 %v1657, %v1694
        %v1702 = vld [vmem:[#allocation12 + $0x60] sm:$0xff]
        %1706 = vrot.lane.b32.xlu0 %v1699, 16
        %v1707 = vpop.permute.xlu0 %1706
        %1708 = vrot.lane.b32.xlu0 %v1700, 16
        %v1709 = vpop.permute.xlu0 %1708
        %1710 = vrot.lane.b32.xlu0 %v1701, 16
        %v1711 = vpop.permute.xlu0 %1710
        %v1712 = vsel %vm676, %v1707, %v1709
        %v1713 = vsel %vm676, %v1709, %v1711
        %vm1716 = vcmask 64512
        %v1718 = vsel %vm1716, %v1702, 0
        %1720 = vmatprep.subr.mxu0 %v1713
        %1721 = vmatpush1.msra.mxu0 %v1712
        %1722 = vmatprep.subr.mxu0 0.0
        %1723 = vmatpush1.msra.mxu0 0.0
        %1724 = vmatprep.subr.mxu0 0.0
        %1725 = vmatpush1.msra.mxu0 0.0
        %1726 = vmatprep.subr.mxu0 0.0
        %1727 = vmatpush1.msra.mxu0 0.0
        %1728 = vmatprep.subr.mxu0 0.0
        %1729 = vmatpush1.msra.mxu0 0.0
        %1730 = vmatprep.subr.mxu0 0.0
        %1731 = vmatpush1.msra.mxu0 0.0
        %1732 = vmatprep.subr.mxu0 0.0
        %1733 = vmatpush1.msra.mxu0 0.0
        %1734 = vmatprep.subr.mxu0 0.0
        %1735 = vmatpush1.msra.mxu0 0.0
        %1736 = vmatprep.subr.mxu0 0.0
        %1737 = vmatpush1.msra.mxu0 0.0
        %1738 = vmatprep.subr.mxu0 0.0
        %1739 = vmatpush1.msra.mxu0 0.0
        %1740 = vmatprep.subr.mxu0 0.0
        %1741 = vmatpush1.msra.mxu0 0.0
        %1742 = vmatprep.subr.mxu0 0.0
        %1743 = vmatpush1.msra.mxu0 0.0
        %1744 = vmatprep.subr.mxu0 0.0
        %1745 = vmatpush1.msra.mxu0 0.0
        %1746 = vmatprep.subr.mxu0 0.0
        %1747 = vmatpush1.msra.mxu0 0.0
        %1748 = vmatprep.subr.mxu0 0.0
        %1749 = vmatpush1.msra.mxu0 0.0
        %1750 = vmatprep.subr.mxu0 0.0
        %1751 = vmatpush1.msra.mxu0 0.0
        %1752 = vmatprep.subr.mxu0 0.0
        %1753 = vmatpush1.msra.mxu0 0.0
        %1754 = vmatprep.subr.mxu0 0.0
        %1755 = vmatpush1.msra.mxu0 0.0
        %1756 = vmatprep.subr.mxu0 0.0
        %1757 = vmatpush1.msra.mxu0 0.0
        %1758 = vmatprep.subr.mxu0 0.0
        %1759 = vmatpush1.msra.mxu0 0.0
        %1760 = vmatprep.subr.mxu0 0.0
        %1761 = vmatpush1.msra.mxu0 0.0
        %1762 = vmatprep.subr.mxu0 0.0
        %1763 = vmatpush1.msra.mxu0 0.0
        %1764 = vmatprep.subr.mxu0 0.0
        %1765 = vmatpush1.msra.mxu0 0.0
        %1766 = vmatprep.subr.mxu0 0.0
        %1767 = vmatpush1.msra.mxu0 0.0
        %1768 = vmatprep.subr.mxu0 0.0
        %1769 = vmatpush1.msra.mxu0 0.0
        %1770 = vmatprep.subr.mxu0 0.0
        %1771 = vmatpush1.msra.mxu0 0.0
        %1772 = vmatprep.subr.mxu0 0.0
        %1773 = vmatpush1.msra.mxu0 0.0
        %1774 = vmatprep.subr.mxu0 0.0
        %1775 = vmatpush1.msra.mxu0 0.0
        %1776 = vmatprep.subr.mxu0 0.0
        %1777 = vmatpush1.msra.mxu0 0.0
        %1778 = vmatprep.subr.mxu0 0.0
        %1779 = vmatpush1.msra.mxu0 0.0
        %1780 = vmatprep.subr.mxu0 0.0
        %1781 = vmatpush1.msra.mxu0 0.0
        %1782 = vmatprep.subr.mxu0 0.0
        %1783 = vmatpush1.msra.mxu0 0.0
        %1784 = vmatprep.mubr.f32.mxu0 0.0
        %1785 = vmatmul.mubr.f32.gmra.mrb[0].mxu0 %v1718
        %v1786 = vpop.f32.mrb[0].mxu0
        %v1787 = vadd.f32 0.0, %v1786
        %v1788 = vpop.f32.mrb[0].mxu0
        %v1789 = vadd.f32 0.0, %v1788
        %1790 = vdwg.mxu0
        %1794 = vrot.lane.b32.xlu0 %v1676, 17
        %v1795 = vpop.permute.xlu0 %1794
        %1796 = vrot.lane.b32.xlu0 %v1677, 17
        %v1797 = vpop.permute.xlu0 %1796
        %1798 = vrot.lane.b32.xlu0 %v1678, 17
        %v1799 = vpop.permute.xlu0 %1798
        %v1800 = vsel %vm634, %v1795, %v1797
        %v1801 = vsel %vm634, %v1797, %v1799
        %v1805 = vsel %vm1716, %v1679, 0
        %1807 = vmatprep.subr.mxu0 %v1801
        %1808 = vmatpush1.msra.mxu0 %v1800
        %1809 = vmatprep.subr.mxu0 0.0
        %1810 = vmatpush1.msra.mxu0 0.0
        %1811 = vmatprep.subr.mxu0 0.0
        %1812 = vmatpush1.msra.mxu0 0.0
        %1813 = vmatprep.subr.mxu0 0.0
        %1814 = vmatpush1.msra.mxu0 0.0
        %1815 = vmatprep.subr.mxu0 0.0
        %1816 = vmatpush1.msra.mxu0 0.0
        %1817 = vmatprep.subr.mxu0 0.0
        %1818 = vmatpush1.msra.mxu0 0.0
        %1819 = vmatprep.subr.mxu0 0.0
        %1820 = vmatpush1.msra.mxu0 0.0
        %1821 = vmatprep.subr.mxu0 0.0
        %1822 = vmatpush1.msra.mxu0 0.0
        %1823 = vmatprep.subr.mxu0 0.0
        %1824 = vmatpush1.msra.mxu0 0.0
        %1825 = vmatprep.subr.mxu0 0.0
        %1826 = vmatpush1.msra.mxu0 0.0
        %1827 = vmatprep.subr.mxu0 0.0
        %1828 = vmatpush1.msra.mxu0 0.0
        %1829 = vmatprep.subr.mxu0 0.0
        %1830 = vmatpush1.msra.mxu0 0.0
        %1831 = vmatprep.subr.mxu0 0.0
        %1832 = vmatpush1.msra.mxu0 0.0
        %1833 = vmatprep.subr.mxu0 0.0
        %1834 = vmatpush1.msra.mxu0 0.0
        %1835 = vmatprep.subr.mxu0 0.0
        %1836 = vmatpush1.msra.mxu0 0.0
        %1837 = vmatprep.subr.mxu0 0.0
        %1838 = vmatpush1.msra.mxu0 0.0
        %1839 = vmatprep.subr.mxu0 0.0
        %1840 = vmatpush1.msra.mxu0 0.0
        %1841 = vmatprep.subr.mxu0 0.0
        %1842 = vmatpush1.msra.mxu0 0.0
        %1843 = vmatprep.subr.mxu0 0.0
        %1844 = vmatpush1.msra.mxu0 0.0
        %1845 = vmatprep.subr.mxu0 0.0
        %1846 = vmatpush1.msra.mxu0 0.0
        %1847 = vmatprep.subr.mxu0 0.0
        %1848 = vmatpush1.msra.mxu0 0.0
        %1849 = vmatprep.subr.mxu0 0.0
        %1850 = vmatpush1.msra.mxu0 0.0
        %1851 = vmatprep.subr.mxu0 0.0
        %1852 = vmatpush1.msra.mxu0 0.0
        %1853 = vmatprep.subr.mxu0 0.0
        %1854 = vmatpush1.msra.mxu0 0.0
        %1855 = vmatprep.subr.mxu0 0.0
        %1856 = vmatpush1.msra.mxu0 0.0
        %1857 = vmatprep.subr.mxu0 0.0
        %1858 = vmatpush1.msra.mxu0 0.0
        %1859 = vmatprep.subr.mxu0 0.0
        %1860 = vmatpush1.msra.mxu0 0.0
        %1861 = vmatprep.subr.mxu0 0.0
        %1862 = vmatpush1.msra.mxu0 0.0
        %1863 = vmatprep.subr.mxu0 0.0
        %1864 = vmatpush1.msra.mxu0 0.0
        %1865 = vmatprep.subr.mxu0 0.0
        %1866 = vmatpush1.msra.mxu0 0.0
        %1867 = vmatprep.subr.mxu0 0.0
        %1868 = vmatpush1.msra.mxu0 0.0
        %1869 = vmatprep.subr.mxu0 0.0
        %1870 = vmatpush1.msra.mxu0 0.0
        %1871 = vmatprep.mubr.f32.mxu0 0.0
        %1872 = vmatmul.mubr.f32.gmra.mrb[0].mxu0 %v1805
        %v1873 = vpop.f32.mrb[0].mxu0
        %v1874 = vadd.f32 %v1787, %v1873
        %v1875 = vpop.f32.mrb[0].mxu0
        %v1876 = vadd.f32 %v1789, %v1875
        %1877 = vdwg.mxu0
        %s1878 = scalar_lea.vmem [#allocation11], 2
        %v1879 = vld [vmem:[%s1878] ss:$8 sm:$0x3]
        %v1881 = vlaneseq
        %v1882 = vshrl.u32 %v1881, 7
        %v1883 = vsub.s32 0, %v1882
        %v1884 = vrot.slane %v1879, %v1883
        %v1885 = vlaneseq
        %v1886 = vshrl.u32 %v1885, 7
        %v1887 = vsub.s32 1, %v1886
        %v1888 = vrot.slane %v1879, %v1887
        %1889 = vrot.lane.b32.xlu0 %v1884, 113
        %v1890 = vpop.permute.xlu0 %1889
        %1891 = vrot.lane.b32.xlu0 %v1888, 113
        %v1892 = vpop.permute.xlu0 %1891
        %v1893 = vsel %vm701, %v1890, %v1892
        %v1897 = vmul.f32 %v1655, %v1890
        %v1898 = vmul.f32 %v1656, %v1893
        %v1899 = vmul.f32 %v1657, %v1892
        %v1900 = vld [vmem:[#allocation12 + $0x70] sm:$0xff]
        %1904 = vrot.lane.b32.xlu0 %v1897, 15
        %v1905 = vpop.permute.xlu0 %1904
        %1906 = vrot.lane.b32.xlu0 %v1898, 15
        %v1907 = vpop.permute.xlu0 %1906
        %1908 = vrot.lane.b32.xlu0 %v1899, 15
        %v1909 = vpop.permute.xlu0 %1908
        %v1910 = vsel %vm718, %v1905, %v1907
        %v1911 = vsel %vm718, %v1907, %v1909
        %v1915 = vsel %vm1716, %v1900, 0
        %1917 = vmatprep.subr.mxu0 %v1911
        %1918 = vmatpush1.msra.mxu0 %v1910
        %1919 = vmatprep.subr.mxu0 0.0
        %1920 = vmatpush1.msra.mxu0 0.0
        %1921 = vmatprep.subr.mxu0 0.0
        %1922 = vmatpush1.msra.mxu0 0.0
        %1923 = vmatprep.subr.mxu0 0.0
        %1924 = vmatpush1.msra.mxu0 0.0
        %1925 = vmatprep.subr.mxu0 0.0
        %1926 = vmatpush1.msra.mxu0 0.0
        %1927 = vmatprep.subr.mxu0 0.0
        %1928 = vmatpush1.msra.mxu0 0.0
        %1929 = vmatprep.subr.mxu0 0.0
        %1930 = vmatpush1.msra.mxu0 0.0
        %1931 = vmatprep.subr.mxu0 0.0
        %1932 = vmatpush1.msra.mxu0 0.0
        %1933 = vmatprep.subr.mxu0 0.0
        %1934 = vmatpush1.msra.mxu0 0.0
        %1935 = vmatprep.subr.mxu0 0.0
        %1936 = vmatpush1.msra.mxu0 0.0
        %1937 = vmatprep.subr.mxu0 0.0
        %1938 = vmatpush1.msra.mxu0 0.0
        %1939 = vmatprep.subr.mxu0 0.0
        %1940 = vmatpush1.msra.mxu0 0.0
        %1941 = vmatprep.subr.mxu0 0.0
        %1942 = vmatpush1.msra.mxu0 0.0
        %1943 = vmatprep.subr.mxu0 0.0
        %1944 = vmatpush1.msra.mxu0 0.0
        %1945 = vmatprep.subr.mxu0 0.0
        %1946 = vmatpush1.msra.mxu0 0.0
        %1947 = vmatprep.subr.mxu0 0.0
        %1948 = vmatpush1.msra.mxu0 0.0
        %1949 = vmatprep.subr.mxu0 0.0
        %1950 = vmatpush1.msra.mxu0 0.0
        %1951 = vmatprep.subr.mxu0 0.0
        %1952 = vmatpush1.msra.mxu0 0.0
        %1953 = vmatprep.subr.mxu0 0.0
        %1954 = vmatpush1.msra.mxu0 0.0
        %1955 = vmatprep.subr.mxu0 0.0
        %1956 = vmatpush1.msra.mxu0 0.0
        %1957 = vmatprep.subr.mxu0 0.0
        %1958 = vmatpush1.msra.mxu0 0.0
        %1959 = vmatprep.subr.mxu0 0.0
        %1960 = vmatpush1.msra.mxu0 0.0
        %1961 = vmatprep.subr.mxu0 0.0
        %1962 = vmatpush1.msra.mxu0 0.0
        %1963 = vmatprep.subr.mxu0 0.0
        %1964 = vmatpush1.msra.mxu0 0.0
        %1965 = vmatprep.subr.mxu0 0.0
        %1966 = vmatpush1.msra.mxu0 0.0
        %1967 = vmatprep.subr.mxu0 0.0
        %1968 = vmatpush1.msra.mxu0 0.0
        %1969 = vmatprep.subr.mxu0 0.0
        %1970 = vmatpush1.msra.mxu0 0.0
        %1971 = vmatprep.subr.mxu0 0.0
        %1972 = vmatpush1.msra.mxu0 0.0
        %1973 = vmatprep.subr.mxu0 0.0
        %1974 = vmatpush1.msra.mxu0 0.0
        %1975 = vmatprep.subr.mxu0 0.0
        %1976 = vmatpush1.msra.mxu0 0.0
        %1977 = vmatprep.subr.mxu0 0.0
        %1978 = vmatpush1.msra.mxu0 0.0
        %1979 = vmatprep.subr.mxu0 0.0
        %1980 = vmatpush1.msra.mxu0 0.0
        %1981 = vmatprep.mubr.f32.mxu0 0.0
        %1982 = vmatmul.mubr.f32.gmra.mrb[0].mxu0 %v1915
        %v1983 = vpop.f32.mrb[0].mxu0
        %v1984 = vadd.f32 0.0, %v1983
        %v1985 = vpop.f32.mrb[0].mxu0
        %v1986 = vadd.f32 0.0, %v1985
        %1987 = vdwg.mxu0
        %v1988 = vadd.f32 %v1874, %v1984
        %v1989 = vadd.f32 %v1876, %v1986
        %s1990 = scalar_lea.vmem [#allocation11], 3
        %v1991 = vld [vmem:[%s1990] ss:$8 sm:$0x3]
        %v1993 = vlaneseq
        %v1994 = vshrl.u32 %v1993, 7
        %v1995 = vsub.s32 0, %v1994
        %v1996 = vrot.slane %v1991, %v1995
        %v1997 = vlaneseq
        %v1998 = vshrl.u32 %v1997, 7
        %v1999 = vsub.s32 1, %v1998
        %v2000 = vrot.slane %v1991, %v1999
        %2001 = vrot.lane.b32.xlu0 %v1996, 127
        %v2002 = vpop.permute.xlu0 %2001
        %2003 = vrot.lane.b32.xlu0 %v2000, 127
        %v2004 = vpop.permute.xlu0 %2003
        %v2005 = vsel %vm827, %v2002, %v2004
        %v2009 = vmul.f32 %v1655, %v2002
        %v2010 = vmul.f32 %v1656, %v2005
        %v2011 = vmul.f32 %v1657, %v2004
        %v2012 = vld [vmem:[#allocation12 + $0x80] sm:$0xff]
        %2016 = vrot.lane.b32.xlu0 %v2009, 1
        %v2017 = vpop.permute.xlu0 %2016
        %2018 = vrot.lane.b32.xlu0 %v2010, 1
        %v2019 = vpop.permute.xlu0 %2018
        %2020 = vrot.lane.b32.xlu0 %v2011, 1
        %v2021 = vpop.permute.xlu0 %2020
        %v2022 = vsel %vm844, %v2017, %v2019
        %v2023 = vsel %vm844, %v2019, %v2021
        %v2027 = vsel %vm1716, %v2012, 0
        %2029 = vmatprep.subr.mxu0 %v2023
        %2030 = vmatpush1.msra.mxu0 %v2022
        %2031 = vmatprep.subr.mxu0 0.0
        %2032 = vmatpush1.msra.mxu0 0.0
        %2033 = vmatprep.subr.mxu0 0.0
        %2034 = vmatpush1.msra.mxu0 0.0
        %2035 = vmatprep.subr.mxu0 0.0
        %2036 = vmatpush1.msra.mxu0 0.0
        %2037 = vmatprep.subr.mxu0 0.0
        %2038 = vmatpush1.msra.mxu0 0.0
        %2039 = vmatprep.subr.mxu0 0.0
        %2040 = vmatpush1.msra.mxu0 0.0
        %2041 = vmatprep.subr.mxu0 0.0
        %2042 = vmatpush1.msra.mxu0 0.0
        %2043 = vmatprep.subr.mxu0 0.0
        %2044 = vmatpush1.msra.mxu0 0.0
        %2045 = vmatprep.subr.mxu0 0.0
        %2046 = vmatpush1.msra.mxu0 0.0
        %2047 = vmatprep.subr.mxu0 0.0
        %2048 = vmatpush1.msra.mxu0 0.0
        %2049 = vmatprep.subr.mxu0 0.0
        %2050 = vmatpush1.msra.mxu0 0.0
        %2051 = vmatprep.subr.mxu0 0.0
        %2052 = vmatpush1.msra.mxu0 0.0
        %2053 = vmatprep.subr.mxu0 0.0
        %2054 = vmatpush1.msra.mxu0 0.0
        %2055 = vmatprep.subr.mxu0 0.0
        %2056 = vmatpush1.msra.mxu0 0.0
        %2057 = vmatprep.subr.mxu0 0.0
        %2058 = vmatpush1.msra.mxu0 0.0
        %2059 = vmatprep.subr.mxu0 0.0
        %2060 = vmatpush1.msra.mxu0 0.0
        %2061 = vmatprep.subr.mxu0 0.0
        %2062 = vmatpush1.msra.mxu0 0.0
        %2063 = vmatprep.subr.mxu0 0.0
        %2064 = vmatpush1.msra.mxu0 0.0
        %2065 = vmatprep.subr.mxu0 0.0
        %2066 = vmatpush1.msra.mxu0 0.0
        %2067 = vmatprep.subr.mxu0 0.0
        %2068 = vmatpush1.msra.mxu0 0.0
        %2069 = vmatprep.subr.mxu0 0.0
        %2070 = vmatpush1.msra.mxu0 0.0
        %2071 = vmatprep.subr.mxu0 0.0
        %2072 = vmatpush1.msra.mxu0 0.0
        %2073 = vmatprep.subr.mxu0 0.0
        %2074 = vmatpush1.msra.mxu0 0.0
        %2075 = vmatprep.subr.mxu0 0.0
        %2076 = vmatpush1.msra.mxu0 0.0
        %2077 = vmatprep.subr.mxu0 0.0
        %2078 = vmatpush1.msra.mxu0 0.0
        %2079 = vmatprep.subr.mxu0 0.0
        %2080 = vmatpush1.msra.mxu0 0.0
        %2081 = vmatprep.subr.mxu0 0.0
        %2082 = vmatpush1.msra.mxu0 0.0
        %2083 = vmatprep.subr.mxu0 0.0
        %2084 = vmatpush1.msra.mxu0 0.0
        %2085 = vmatprep.subr.mxu0 0.0
        %2086 = vmatpush1.msra.mxu0 0.0
        %2087 = vmatprep.subr.mxu0 0.0
        %2088 = vmatpush1.msra.mxu0 0.0
        %2089 = vmatprep.subr.mxu0 0.0
        %2090 = vmatpush1.msra.mxu0 0.0
        %2091 = vmatprep.subr.mxu0 0.0
        %2092 = vmatpush1.msra.mxu0 0.0
        %2093 = vmatprep.mubr.f32.mxu0 0.0
        %2094 = vmatmul.mubr.f32.gmra.mrb[0].mxu0 %v2027
        %v2095 = vpop.f32.mrb[0].mxu0
        %v2096 = vadd.f32 0.0, %v2095
        %v2097 = vpop.f32.mrb[0].mxu0
        %v2098 = vadd.f32 0.0, %v2097
        %2099 = vdwg.mxu0
        %v2100 = vadd.f32 %v1988, %v2096
        %v2101 = vadd.f32 %v1989, %v2098
        %s2102 = scalar_lea.vmem [#allocation11], 4
        %v2103 = vld [vmem:[%s2102] ss:$8 sm:$0x3]
        %v2105 = vlaneseq
        %v2106 = vshrl.u32 %v2105, 7
        %v2107 = vsub.s32 0, %v2106
        %v2108 = vrot.slane %v2103, %v2107
        %v2109 = vlaneseq
        %v2110 = vshrl.u32 %v2109, 7
        %v2111 = vsub.s32 1, %v2110
        %v2112 = vrot.slane %v2103, %v2111
        %v2115 = vmul.f32 %v1656, %v2108
        %v2116 = vmul.f32 %v1657, %v2112
        %v2117 = vld [vmem:[#allocation12 + $0x90] sm:$0xff]
        %v2119 = vsel %vm1716, %v2117, 0
        %2121 = vmatprep.subr.mxu0 %v2116
        %2122 = vmatpush1.msra.mxu0 %v2115
        %2123 = vmatprep.subr.mxu0 0.0
        %2124 = vmatpush1.msra.mxu0 0.0
        %2125 = vmatprep.subr.mxu0 0.0
        %2126 = vmatpush1.msra.mxu0 0.0
        %2127 = vmatprep.subr.mxu0 0.0
        %2128 = vmatpush1.msra.mxu0 0.0
        %2129 = vmatprep.subr.mxu0 0.0
        %2130 = vmatpush1.msra.mxu0 0.0
        %2131 = vmatprep.subr.mxu0 0.0
        %2132 = vmatpush1.msra.mxu0 0.0
        %2133 = vmatprep.subr.mxu0 0.0
        %2134 = vmatpush1.msra.mxu0 0.0
        %2135 = vmatprep.subr.mxu0 0.0
        %2136 = vmatpush1.msra.mxu0 0.0
        %2137 = vmatprep.subr.mxu0 0.0
        %2138 = vmatpush1.msra.mxu0 0.0
        %2139 = vmatprep.subr.mxu0 0.0
        %2140 = vmatpush1.msra.mxu0 0.0
        %2141 = vmatprep.subr.mxu0 0.0
        %2142 = vmatpush1.msra.mxu0 0.0
        %2143 = vmatprep.subr.mxu0 0.0
        %2144 = vmatpush1.msra.mxu0 0.0
        %2145 = vmatprep.subr.mxu0 0.0
        %2146 = vmatpush1.msra.mxu0 0.0
        %2147 = vmatprep.subr.mxu0 0.0
        %2148 = vmatpush1.msra.mxu0 0.0
        %2149 = vmatprep.subr.mxu0 0.0
        %2150 = vmatpush1.msra.mxu0 0.0
        %2151 = vmatprep.subr.mxu0 0.0
        %2152 = vmatpush1.msra.mxu0 0.0
        %2153 = vmatprep.subr.mxu0 0.0
        %2154 = vmatpush1.msra.mxu0 0.0
        %2155 = vmatprep.subr.mxu0 0.0
        %2156 = vmatpush1.msra.mxu0 0.0
        %2157 = vmatprep.subr.mxu0 0.0
        %2158 = vmatpush1.msra.mxu0 0.0
        %2159 = vmatprep.subr.mxu0 0.0
        %2160 = vmatpush1.msra.mxu0 0.0
        %2161 = vmatprep.subr.mxu0 0.0
        %2162 = vmatpush1.msra.mxu0 0.0
        %2163 = vmatprep.subr.mxu0 0.0
        %2164 = vmatpush1.msra.mxu0 0.0
        %2165 = vmatprep.subr.mxu0 0.0
        %2166 = vmatpush1.msra.mxu0 0.0
        %2167 = vmatprep.subr.mxu0 0.0
        %2168 = vmatpush1.msra.mxu0 0.0
        %2169 = vmatprep.subr.mxu0 0.0
        %2170 = vmatpush1.msra.mxu0 0.0
        %2171 = vmatprep.subr.mxu0 0.0
        %2172 = vmatpush1.msra.mxu0 0.0
        %2173 = vmatprep.subr.mxu0 0.0
        %2174 = vmatpush1.msra.mxu0 0.0
        %2175 = vmatprep.subr.mxu0 0.0
        %2176 = vmatpush1.msra.mxu0 0.0
        %2177 = vmatprep.subr.mxu0 0.0
        %2178 = vmatpush1.msra.mxu0 0.0
        %2179 = vmatprep.subr.mxu0 0.0
        %2180 = vmatpush1.msra.mxu0 0.0
        %2181 = vmatprep.subr.mxu0 0.0
        %2182 = vmatpush1.msra.mxu0 0.0
        %2183 = vmatprep.subr.mxu0 0.0
        %2184 = vmatpush1.msra.mxu0 0.0
        %2185 = vmatprep.mubr.f32.mxu0 0.0
        %2186 = vmatmul.mubr.f32.gmra.mrb[0].mxu0 %v2119
        %v2187 = vpop.f32.mrb[0].mxu0
        %v2188 = vadd.f32 0.0, %v2187
        %v2189 = vpop.f32.mrb[0].mxu0
        %v2190 = vadd.f32 0.0, %v2189
        %2191 = vdwg.mxu0
        %v2192 = vadd.f32 %v2100, %v2188
        %v2193 = vadd.f32 %v2101, %v2190
        %v2194 = vld [vmem:[#allocation4 + $0x8] sm:$0xff]
        %v2195 = vld [vmem:[#allocation4 + $0x10] sm:$0xff]
        %v2196 = vld [vmem:[#allocation4 + $0x18] sm:$0xff]
        %s2197 = scalar_lea.vmem [#allocation11], 5
        %v2198 = vld [vmem:[%s2197] ss:$8 sm:$0x3]
        %v2200 = vlaneseq
        %v2201 = vshrl.u32 %v2200, 7
        %v2202 = vsub.s32 0, %v2201
        %v2203 = vrot.slane %v2198, %v2202
        %v2204 = vlaneseq
        %v2205 = vshrl.u32 %v2204, 7
        %v2206 = vsub.s32 1, %v2205
        %v2207 = vrot.slane %v2198, %v2206
        %2208 = vrot.lane.b32.xlu0 %v2203, 1
        %v2209 = vpop.permute.xlu0 %2208
        %2210 = vrot.lane.b32.xlu0 %v2207, 1
        %v2211 = vpop.permute.xlu0 %2210
        %v2212 = vsel %vm844, %v2209, %v2211
        %v2216 = vmul.f32 %v2194, %v2209
        %v2217 = vmul.f32 %v2195, %v2212
        %v2218 = vmul.f32 %v2196, %v2211
        %v2219 = vld [vmem:[#allocation12 + $0xa0] sm:$0xff]
        %2223 = vrot.lane.b32.xlu0 %v2216, 127
        %v2224 = vpop.permute.xlu0 %2223
        %2225 = vrot.lane.b32.xlu0 %v2217, 127
        %v2226 = vpop.permute.xlu0 %2225
        %2227 = vrot.lane.b32.xlu0 %v2218, 127
        %v2228 = vpop.permute.xlu0 %2227
        %v2229 = vsel %vm827, %v2224, %v2226
        %v2230 = vsel %vm827, %v2226, %v2228
        %v2234 = vsel %vm1716, %v2219, 0
        %2236 = vmatprep.subr.mxu0 %v2230
        %2237 = vmatpush1.msra.mxu0 %v2229
        %2238 = vmatprep.subr.mxu0 0.0
        %2239 = vmatpush1.msra.mxu0 0.0
        %2240 = vmatprep.subr.mxu0 0.0
        %2241 = vmatpush1.msra.mxu0 0.0
        %2242 = vmatprep.subr.mxu0 0.0
        %2243 = vmatpush1.msra.mxu0 0.0
        %2244 = vmatprep.subr.mxu0 0.0
        %2245 = vmatpush1.msra.mxu0 0.0
        %2246 = vmatprep.subr.mxu0 0.0
        %2247 = vmatpush1.msra.mxu0 0.0
        %2248 = vmatprep.subr.mxu0 0.0
        %2249 = vmatpush1.msra.mxu0 0.0
        %2250 = vmatprep.subr.mxu0 0.0
        %2251 = vmatpush1.msra.mxu0 0.0
        %2252 = vmatprep.subr.mxu0 0.0
        %2253 = vmatpush1.msra.mxu0 0.0
        %2254 = vmatprep.subr.mxu0 0.0
        %2255 = vmatpush1.msra.mxu0 0.0
        %2256 = vmatprep.subr.mxu0 0.0
        %2257 = vmatpush1.msra.mxu0 0.0
        %2258 = vmatprep.subr.mxu0 0.0
        %2259 = vmatpush1.msra.mxu0 0.0
        %2260 = vmatprep.subr.mxu0 0.0
        %2261 = vmatpush1.msra.mxu0 0.0
        %2262 = vmatprep.subr.mxu0 0.0
        %2263 = vmatpush1.msra.mxu0 0.0
        %2264 = vmatprep.subr.mxu0 0.0
        %2265 = vmatpush1.msra.mxu0 0.0
        %2266 = vmatprep.subr.mxu0 0.0
        %2267 = vmatpush1.msra.mxu0 0.0
        %2268 = vmatprep.subr.mxu0 0.0
        %2269 = vmatpush1.msra.mxu0 0.0
        %2270 = vmatprep.subr.mxu0 0.0
        %2271 = vmatpush1.msra.mxu0 0.0
        %2272 = vmatprep.subr.mxu0 0.0
        %2273 = vmatpush1.msra.mxu0 0.0
        %2274 = vmatprep.subr.mxu0 0.0
        %2275 = vmatpush1.msra.mxu0 0.0
        %2276 = vmatprep.subr.mxu0 0.0
        %2277 = vmatpush1.msra.mxu0 0.0
        %2278 = vmatprep.subr.mxu0 0.0
        %2279 = vmatpush1.msra.mxu0 0.0
        %2280 = vmatprep.subr.mxu0 0.0
        %2281 = vmatpush1.msra.mxu0 0.0
        %2282 = vmatprep.subr.mxu0 0.0
        %2283 = vmatpush1.msra.mxu0 0.0
        %2284 = vmatprep.subr.mxu0 0.0
        %2285 = vmatpush1.msra.mxu0 0.0
        %2286 = vmatprep.subr.mxu0 0.0
        %2287 = vmatpush1.msra.mxu0 0.0
        %2288 = vmatprep.subr.mxu0 0.0
        %2289 = vmatpush1.msra.mxu0 0.0
        %2290 = vmatprep.subr.mxu0 0.0
        %2291 = vmatpush1.msra.mxu0 0.0
        %2292 = vmatprep.subr.mxu0 0.0
        %2293 = vmatpush1.msra.mxu0 0.0
        %2294 = vmatprep.subr.mxu0 0.0
        %2295 = vmatpush1.msra.mxu0 0.0
        %2296 = vmatprep.subr.mxu0 0.0
        %2297 = vmatpush1.msra.mxu0 0.0
        %2298 = vmatprep.subr.mxu0 0.0
        %2299 = vmatpush1.msra.mxu0 0.0
        %2300 = vmatprep.mubr.f32.mxu0 0.0
        %2301 = vmatmul.mubr.f32.gmra.mrb[0].mxu0 %v2234
        %v2302 = vpop.f32.mrb[0].mxu0
        %v2303 = vadd.f32 0.0, %v2302
        %v2304 = vpop.f32.mrb[0].mxu0
        %v2305 = vadd.f32 0.0, %v2304
        %2306 = vdwg.mxu0
        %v2307 = vadd.f32 %v2192, %v2303
        %v2308 = vadd.f32 %v2193, %v2305
        %s2309 = scalar_lea.vmem [#allocation11], 6
        %v2310 = vld [vmem:[%s2309] ss:$8 sm:$0x3]
        %v2312 = vlaneseq
        %v2313 = vshrl.u32 %v2312, 7
        %v2314 = vsub.s32 0, %v2313
        %v2315 = vrot.slane %v2310, %v2314
        %v2316 = vlaneseq
        %v2317 = vshrl.u32 %v2316, 7
        %v2318 = vsub.s32 1, %v2317
        %v2319 = vrot.slane %v2310, %v2318
        %2320 = vrot.lane.b32.xlu0 %v2315, 15
        %v2321 = vpop.permute.xlu0 %2320
        %2322 = vrot.lane.b32.xlu0 %v2319, 15
        %v2323 = vpop.permute.xlu0 %2322
        %v2324 = vsel %vm718, %v2321, %v2323
        %v2328 = vmul.f32 %v2194, %v2321
        %v2329 = vmul.f32 %v2195, %v2324
        %v2330 = vmul.f32 %v2196, %v2323
        %v2331 = vld [vmem:[#allocation12 + $0xb0] sm:$0xff]
        %2335 = vrot.lane.b32.xlu0 %v2328, 113
        %v2336 = vpop.permute.xlu0 %2335
        %2337 = vrot.lane.b32.xlu0 %v2329, 113
        %v2338 = vpop.permute.xlu0 %2337
        %2339 = vrot.lane.b32.xlu0 %v2330, 113
        %v2340 = vpop.permute.xlu0 %2339
        %v2341 = vsel %vm701, %v2336, %v2338
        %v2342 = vsel %vm701, %v2338, %v2340
        %v2346 = vsel %vm1716, %v2331, 0
        %2348 = vmatprep.subr.mxu0 %v2342
        %2349 = vmatpush1.msra.mxu0 %v2341
        %2350 = vmatprep.subr.mxu0 0.0
        %2351 = vmatpush1.msra.mxu0 0.0
        %2352 = vmatprep.subr.mxu0 0.0
        %2353 = vmatpush1.msra.mxu0 0.0
        %2354 = vmatprep.subr.mxu0 0.0
        %2355 = vmatpush1.msra.mxu0 0.0
        %2356 = vmatprep.subr.mxu0 0.0
        %2357 = vmatpush1.msra.mxu0 0.0
        %2358 = vmatprep.subr.mxu0 0.0
        %2359 = vmatpush1.msra.mxu0 0.0
        %2360 = vmatprep.subr.mxu0 0.0
        %2361 = vmatpush1.msra.mxu0 0.0
        %2362 = vmatprep.subr.mxu0 0.0
        %2363 = vmatpush1.msra.mxu0 0.0
        %2364 = vmatprep.subr.mxu0 0.0
        %2365 = vmatpush1.msra.mxu0 0.0
        %2366 = vmatprep.subr.mxu0 0.0
        %2367 = vmatpush1.msra.mxu0 0.0
        %2368 = vmatprep.subr.mxu0 0.0
        %2369 = vmatpush1.msra.mxu0 0.0
        %2370 = vmatprep.subr.mxu0 0.0
        %2371 = vmatpush1.msra.mxu0 0.0
        %2372 = vmatprep.subr.mxu0 0.0
        %2373 = vmatpush1.msra.mxu0 0.0
        %2374 = vmatprep.subr.mxu0 0.0
        %2375 = vmatpush1.msra.mxu0 0.0
        %2376 = vmatprep.subr.mxu0 0.0
        %2377 = vmatpush1.msra.mxu0 0.0
        %2378 = vmatprep.subr.mxu0 0.0
        %2379 = vmatpush1.msra.mxu0 0.0
        %2380 = vmatprep.subr.mxu0 0.0
        %2381 = vmatpush1.msra.mxu0 0.0
        %2382 = vmatprep.subr.mxu0 0.0
        %2383 = vmatpush1.msra.mxu0 0.0
        %2384 = vmatprep.subr.mxu0 0.0
        %2385 = vmatpush1.msra.mxu0 0.0
        %2386 = vmatprep.subr.mxu0 0.0
        %2387 = vmatpush1.msra.mxu0 0.0
        %2388 = vmatprep.subr.mxu0 0.0
        %2389 = vmatpush1.msra.mxu0 0.0
        %2390 = vmatprep.subr.mxu0 0.0
        %2391 = vmatpush1.msra.mxu0 0.0
        %2392 = vmatprep.subr.mxu0 0.0
        %2393 = vmatpush1.msra.mxu0 0.0
        %2394 = vmatprep.subr.mxu0 0.0
        %2395 = vmatpush1.msra.mxu0 0.0
        %2396 = vmatprep.subr.mxu0 0.0
        %2397 = vmatpush1.msra.mxu0 0.0
        %2398 = vmatprep.subr.mxu0 0.0
        %2399 = vmatpush1.msra.mxu0 0.0
        %2400 = vmatprep.subr.mxu0 0.0
        %2401 = vmatpush1.msra.mxu0 0.0
        %2402 = vmatprep.subr.mxu0 0.0
        %2403 = vmatpush1.msra.mxu0 0.0
        %2404 = vmatprep.subr.mxu0 0.0
        %2405 = vmatpush1.msra.mxu0 0.0
        %2406 = vmatprep.subr.mxu0 0.0
        %2407 = vmatpush1.msra.mxu0 0.0
        %2408 = vmatprep.subr.mxu0 0.0
        %2409 = vmatpush1.msra.mxu0 0.0
        %2410 = vmatprep.subr.mxu0 0.0
        %2411 = vmatpush1.msra.mxu0 0.0
        %2412 = vmatprep.mubr.f32.mxu0 0.0
        %2413 = vmatmul.mubr.f32.gmra.mrb[0].mxu0 %v2346
        %v2414 = vpop.f32.mrb[0].mxu0
        %v2415 = vadd.f32 0.0, %v2414
        %v2416 = vpop.f32.mrb[0].mxu0
        %v2417 = vadd.f32 0.0, %v2416
        %2418 = vdwg.mxu0
        %v2419 = vadd.f32 %v2307, %v2415
        %v2420 = vadd.f32 %v2308, %v2417
        %s2421 = scalar_lea.vmem [#allocation11], 7
        %v2422 = vld [vmem:[%s2421] ss:$8 sm:$0x3]
        %v2424 = vlaneseq
        %v2425 = vshrl.u32 %v2424, 7
        %v2426 = vsub.s32 0, %v2425
        %v2427 = vrot.slane %v2422, %v2426
        %v2428 = vlaneseq
        %v2429 = vshrl.u32 %v2428, 7
        %v2430 = vsub.s32 1, %v2429
        %v2431 = vrot.slane %v2422, %v2430
        %2432 = vrot.lane.b32.xlu0 %v2427, 16
        %v2433 = vpop.permute.xlu0 %2432
        %2434 = vrot.lane.b32.xlu0 %v2431, 16
        %v2435 = vpop.permute.xlu0 %2434
        %v2436 = vsel %vm676, %v2433, %v2435
        %v2440 = vmul.f32 %v2194, %v2433
        %v2441 = vmul.f32 %v2195, %v2436
        %v2442 = vmul.f32 %v2196, %v2435
        %v2443 = vld [vmem:[#allocation12 + $0xc0] sm:$0xff]
        %2447 = vrot.lane.b32.xlu0 %v2440, 112
        %v2448 = vpop.permute.xlu0 %2447
        %2449 = vrot.lane.b32.xlu0 %v2441, 112
        %v2450 = vpop.permute.xlu0 %2449
        %2451 = vrot.lane.b32.xlu0 %v2442, 112
        %v2452 = vpop.permute.xlu0 %2451
        %v2453 = vsel %vm659, %v2448, %v2450
        %v2454 = vsel %vm659, %v2450, %v2452
        %v2458 = vsel %vm1716, %v2443, 0
        %2460 = vmatprep.subr.mxu0 %v2454
        %2461 = vmatpush1.msra.mxu0 %v2453
        %2462 = vmatprep.subr.mxu0 0.0
        %2463 = vmatpush1.msra.mxu0 0.0
        %2464 = vmatprep.subr.mxu0 0.0
        %2465 = vmatpush1.msra.mxu0 0.0
        %2466 = vmatprep.subr.mxu0 0.0
        %2467 = vmatpush1.msra.mxu0 0.0
        %2468 = vmatprep.subr.mxu0 0.0
        %2469 = vmatpush1.msra.mxu0 0.0
        %2470 = vmatprep.subr.mxu0 0.0
        %2471 = vmatpush1.msra.mxu0 0.0
        %2472 = vmatprep.subr.mxu0 0.0
        %2473 = vmatpush1.msra.mxu0 0.0
        %2474 = vmatprep.subr.mxu0 0.0
        %2475 = vmatpush1.msra.mxu0 0.0
        %2476 = vmatprep.subr.mxu0 0.0
        %2477 = vmatpush1.msra.mxu0 0.0
        %2478 = vmatprep.subr.mxu0 0.0
        %2479 = vmatpush1.msra.mxu0 0.0
        %2480 = vmatprep.subr.mxu0 0.0
        %2481 = vmatpush1.msra.mxu0 0.0
        %2482 = vmatprep.subr.mxu0 0.0
        %2483 = vmatpush1.msra.mxu0 0.0
        %2484 = vmatprep.subr.mxu0 0.0
        %2485 = vmatpush1.msra.mxu0 0.0
        %2486 = vmatprep.subr.mxu0 0.0
        %2487 = vmatpush1.msra.mxu0 0.0
        %2488 = vmatprep.subr.mxu0 0.0
        %2489 = vmatpush1.msra.mxu0 0.0
        %2490 = vmatprep.subr.mxu0 0.0
        %2491 = vmatpush1.msra.mxu0 0.0
        %2492 = vmatprep.subr.mxu0 0.0
        %2493 = vmatpush1.msra.mxu0 0.0
        %2494 = vmatprep.subr.mxu0 0.0
        %2495 = vmatpush1.msra.mxu0 0.0
        %2496 = vmatprep.subr.mxu0 0.0
        %2497 = vmatpush1.msra.mxu0 0.0
        %2498 = vmatprep.subr.mxu0 0.0
        %2499 = vmatpush1.msra.mxu0 0.0
        %2500 = vmatprep.subr.mxu0 0.0
        %2501 = vmatpush1.msra.mxu0 0.0
        %2502 = vmatprep.subr.mxu0 0.0
        %2503 = vmatpush1.msra.mxu0 0.0
        %2504 = vmatprep.subr.mxu0 0.0
        %2505 = vmatpush1.msra.mxu0 0.0
        %2506 = vmatprep.subr.mxu0 0.0
        %2507 = vmatpush1.msra.mxu0 0.0
        %2508 = vmatprep.subr.mxu0 0.0
        %2509 = vmatpush1.msra.mxu0 0.0
        %2510 = vmatprep.subr.mxu0 0.0
        %2511 = vmatpush1.msra.mxu0 0.0
        %2512 = vmatprep.subr.mxu0 0.0
        %2513 = vmatpush1.msra.mxu0 0.0
        %2514 = vmatprep.subr.mxu0 0.0
        %2515 = vmatpush1.msra.mxu0 0.0
        %2516 = vmatprep.subr.mxu0 0.0
        %2517 = vmatpush1.msra.mxu0 0.0
        %2518 = vmatprep.subr.mxu0 0.0
        %2519 = vmatpush1.msra.mxu0 0.0
        %2520 = vmatprep.subr.mxu0 0.0
        %2521 = vmatpush1.msra.mxu0 0.0
        %2522 = vmatprep.subr.mxu0 0.0
        %2523 = vmatpush1.msra.mxu0 0.0
        %2524 = vmatprep.mubr.f32.mxu0 0.0
        %2525 = vmatmul.mubr.f32.gmra.mrb[0].mxu0 %v2458
        %v2526 = vpop.f32.mrb[0].mxu0
        %v2527 = vadd.f32 0.0, %v2526
        %v2528 = vpop.f32.mrb[0].mxu0
        %v2529 = vadd.f32 0.0, %v2528
        %2530 = vdwg.mxu0
        %v2531 = vadd.f32 %v2419, %v2527
        %v2532 = vadd.f32 %v2420, %v2529
        %s2533 = scalar_lea.vmem [#allocation11], 16
        %v2534 = vld [vmem:[%s2533] ss:$8 sm:$0x3]
        %v2536 = vlaneseq
        %v2537 = vshrl.u32 %v2536, 7
        %v2538 = vsub.s32 0, %v2537
        %v2539 = vrot.slane %v2534, %v2538
        %v2540 = vlaneseq
        %v2541 = vshrl.u32 %v2540, 7
        %v2542 = vsub.s32 1, %v2541
        %v2543 = vrot.slane %v2534, %v2542
        %2544 = vrot.lane.b32.xlu0 %v2539, 17
        %v2545 = vpop.permute.xlu0 %2544
        %2546 = vrot.lane.b32.xlu0 %v2543, 17
        %v2547 = vpop.permute.xlu0 %2546
        %v2548 = vsel %vm634, %v2545, %v2547
        %v2552 = vmul.f32 %v2194, %v2545
        %v2553 = vmul.f32 %v2195, %v2548
        %v2554 = vmul.f32 %v2196, %v2547
        %v2555 = vld [vmem:[#allocation12 + $0xd0] sm:$0xff]
        %2559 = vrot.lane.b32.xlu0 %v2552, 111
        %v2560 = vpop.permute.xlu0 %2559
        %2561 = vrot.lane.b32.xlu0 %v2553, 111
        %v2562 = vpop.permute.xlu0 %2561
        %2563 = vrot.lane.b32.xlu0 %v2554, 111
        %v2564 = vpop.permute.xlu0 %2563
        %v2565 = vsel %vm617, %v2560, %v2562
        %v2566 = vsel %vm617, %v2562, %v2564
        %v2570 = vsel %vm1716, %v2555, 0
        %2572 = vmatprep.subr.mxu0 %v2566
        %2573 = vmatpush1.msra.mxu0 %v2565
        %2574 = vmatprep.subr.mxu0 0.0
        %2575 = vmatpush1.msra.mxu0 0.0
        %2576 = vmatprep.subr.mxu0 0.0
        %2577 = vmatpush1.msra.mxu0 0.0
        %2578 = vmatprep.subr.mxu0 0.0
        %2579 = vmatpush1.msra.mxu0 0.0
        %2580 = vmatprep.subr.mxu0 0.0
        %2581 = vmatpush1.msra.mxu0 0.0
        %2582 = vmatprep.subr.mxu0 0.0
        %2583 = vmatpush1.msra.mxu0 0.0
        %2584 = vmatprep.subr.mxu0 0.0
        %2585 = vmatpush1.msra.mxu0 0.0
        %2586 = vmatprep.subr.mxu0 0.0
        %2587 = vmatpush1.msra.mxu0 0.0
        %2588 = vmatprep.subr.mxu0 0.0
        %2589 = vmatpush1.msra.mxu0 0.0
        %2590 = vmatprep.subr.mxu0 0.0
        %2591 = vmatpush1.msra.mxu0 0.0
        %2592 = vmatprep.subr.mxu0 0.0
        %2593 = vmatpush1.msra.mxu0 0.0
        %2594 = vmatprep.subr.mxu0 0.0
        %2595 = vmatpush1.msra.mxu0 0.0
        %2596 = vmatprep.subr.mxu0 0.0
        %2597 = vmatpush1.msra.mxu0 0.0
        %2598 = vmatprep.subr.mxu0 0.0
        %2599 = vmatpush1.msra.mxu0 0.0
        %2600 = vmatprep.subr.mxu0 0.0
        %2601 = vmatpush1.msra.mxu0 0.0
        %2602 = vmatprep.subr.mxu0 0.0
        %2603 = vmatpush1.msra.mxu0 0.0
        %2604 = vmatprep.subr.mxu0 0.0
        %2605 = vmatpush1.msra.mxu0 0.0
        %2606 = vmatprep.subr.mxu0 0.0
        %2607 = vmatpush1.msra.mxu0 0.0
        %2608 = vmatprep.subr.mxu0 0.0
        %2609 = vmatpush1.msra.mxu0 0.0
        %2610 = vmatprep.subr.mxu0 0.0
        %2611 = vmatpush1.msra.mxu0 0.0
        %2612 = vmatprep.subr.mxu0 0.0
        %2613 = vmatpush1.msra.mxu0 0.0
        %2614 = vmatprep.subr.mxu0 0.0
        %2615 = vmatpush1.msra.mxu0 0.0
        %2616 = vmatprep.subr.mxu0 0.0
        %2617 = vmatpush1.msra.mxu0 0.0
        %2618 = vmatprep.subr.mxu0 0.0
        %2619 = vmatpush1.msra.mxu0 0.0
        %2620 = vmatprep.subr.mxu0 0.0
        %2621 = vmatpush1.msra.mxu0 0.0
        %2622 = vmatprep.subr.mxu0 0.0
        %2623 = vmatpush1.msra.mxu0 0.0
        %2624 = vmatprep.subr.mxu0 0.0
        %2625 = vmatpush1.msra.mxu0 0.0
        %2626 = vmatprep.subr.mxu0 0.0
        %2627 = vmatpush1.msra.mxu0 0.0
        %2628 = vmatprep.subr.mxu0 0.0
        %2629 = vmatpush1.msra.mxu0 0.0
        %2630 = vmatprep.subr.mxu0 0.0
        %2631 = vmatpush1.msra.mxu0 0.0
        %2632 = vmatprep.subr.mxu0 0.0
        %2633 = vmatpush1.msra.mxu0 0.0
        %2634 = vmatprep.subr.mxu0 0.0
        %2635 = vmatpush1.msra.mxu0 0.0
        %2636 = vmatprep.mubr.f32.mxu0 0.0
        %2637 = vmatmul.mubr.f32.gmra.mrb[0].mxu0 %v2570
        %v2638 = vpop.f32.mrb[0].mxu0
        %v2639 = vadd.f32 0.0, %v2638
        %v2640 = vpop.f32.mrb[0].mxu0
        %v2641 = vadd.f32 0.0, %v2640
        %2642 = vdwg.mxu0
        %v2643 = vadd.f32 %v2531, %v2639
        %v2644 = vadd.f32 %v2532, %v2641
        %v2645 = vld [vmem:[#allocation14 + $0x28] sm:$0xff]
        %2647 = vset.pattern.permute.xlu0 0
        %2648 = vperm.xlu0 %2647, %v2645
        %v2649 = vpop.permute.xlu0 %2648
        %v2651 = vadd.f32 %v2643, %v2649
        %v2652 = vadd.f32 %v2644, %v2649
        %s2653 = sld [smem:[#allocation15 + $0x2]]
        %vm2654 = vcmp.ge.f32.partialorder %v2651, 0.0
        %vm2655 = vcmp.ge.f32.partialorder %v2652, 0.0
        %v2656 = vstv %s2653
        %v2657 = vmul.f32 %v2656, %v2651
        %v2658 = vmul.f32 %v2656, %v2652
        %v2659 = vsel %vm2654, %v2651, %v2657
        %v2660 = vsel %vm2655, %v2652, %v2658
        %v2661 = vld [vmem:[#allocation12 + $0xe0] sm:$0xff]
        %v2662 = vld [vmem:[#allocation12 + $0xf0] sm:$0xff]
        %v2663 = vld [vmem:[#allocation12 + $0x100] sm:$0xff]
        %v2664 = vld [vmem:[#allocation12 + $0x110] sm:$0xff]
        %v2665 = vld [vmem:[#allocation12 + $0x120] sm:$0xff]
        %v2666 = vld [vmem:[#allocation12 + $0x130] sm:$0xff]
        %v2667 = vld [vmem:[#allocation12 + $0x140] sm:$0xff]
        %v2668 = vld [vmem:[#allocation12 + $0x150] sm:$0xff]
        %v2669 = vld [vmem:[#allocation14 + $0x30] sm:$0xff]
        %v2670 = vld [vmem:[#allocation14 + $0x38] sm:$0xff]
        %v2671 = vld [vmem:[#allocation14 + $0x40] sm:$0xff]
        %v2672 = vld [vmem:[#allocation14 + $0x48] sm:$0xff]
        %v2673 = vld [vmem:[#allocation14 + $0x50] sm:$0xff]
        %v2674 = vld [vmem:[#allocation14 + $0x58] sm:$0xff]
        %v2675 = vld [vmem:[#allocation14 + $0x60] sm:$0xff]
        %v2676 = vld [vmem:[#allocation14 + $0x68] sm:$0xff]
        %2678 = vset.pattern.permute.xlu0 0
        %2679 = vperm.xlu0 %2678, %v2669
        %v2680 = vpop.permute.xlu0 %2679
        %2683 = vset.pattern.permute.xlu0 0
        %2684 = vperm.xlu0 %2683, %v2670
        %v2685 = vpop.permute.xlu0 %2684
        %2688 = vset.pattern.permute.xlu0 0
        %2689 = vperm.xlu0 %2688, %v2671
        %v2690 = vpop.permute.xlu0 %2689
        %2693 = vset.pattern.permute.xlu0 0
        %2694 = vperm.xlu0 %2693, %v2672
        %v2695 = vpop.permute.xlu0 %2694
        %2698 = vset.pattern.permute.xlu0 0
        %2699 = vperm.xlu0 %2698, %v2673
        %v2700 = vpop.permute.xlu0 %2699
        %2703 = vset.pattern.permute.xlu0 0
        %2704 = vperm.xlu0 %2703, %v2674
        %v2705 = vpop.permute.xlu0 %2704
        %2708 = vset.pattern.permute.xlu0 0
        %2709 = vperm.xlu0 %2708, %v2675
        %v2710 = vpop.permute.xlu0 %2709
        %2713 = vset.pattern.permute.xlu0 0
        %2714 = vperm.xlu0 %2713, %v2676
        %v2715 = vpop.permute.xlu0 %2714
        %v2718 = vsel %vm1716, %v2661, 0
        %v2721 = vsel %vm1716, %v2662, 0
        %v2724 = vsel %vm1716, %v2663, 0
        %v2727 = vsel %vm1716, %v2664, 0
        %v2730 = vsel %vm1716, %v2665, 0
        %v2733 = vsel %vm1716, %v2666, 0
        %v2736 = vsel %vm1716, %v2667, 0
        %v2739 = vsel %vm1716, %v2668, 0
        %2741 = vmatprep.subr.mxu0 %v2660
        %2742 = vmatpush1.msra.mxu0 %v2659
        %2743 = vmatprep.subr.mxu0 0.0
        %2744 = vmatpush1.msra.mxu0 0.0
        %2745 = vmatprep.subr.mxu0 0.0
        %2746 = vmatpush1.msra.mxu0 0.0
        %2747 = vmatprep.subr.mxu0 0.0
        %2748 = vmatpush1.msra.mxu0 0.0
        %2749 = vmatprep.subr.mxu0 0.0
        %2750 = vmatpush1.msra.mxu0 0.0
        %2751 = vmatprep.subr.mxu0 0.0
        %2752 = vmatpush1.msra.mxu0 0.0
        %2753 = vmatprep.subr.mxu0 0.0
        %2754 = vmatpush1.msra.mxu0 0.0
        %2755 = vmatprep.subr.mxu0 0.0
        %2756 = vmatpush1.msra.mxu0 0.0
        %2757 = vmatprep.subr.mxu0 0.0
        %2758 = vmatpush1.msra.mxu0 0.0
        %2759 = vmatprep.subr.mxu0 0.0
        %2760 = vmatpush1.msra.mxu0 0.0
        %2761 = vmatprep.subr.mxu0 0.0
        %2762 = vmatpush1.msra.mxu0 0.0
        %2763 = vmatprep.subr.mxu0 0.0
        %2764 = vmatpush1.msra.mxu0 0.0
        %2765 = vmatprep.subr.mxu0 0.0
        %2766 = vmatpush1.msra.mxu0 0.0
        %2767 = vmatprep.subr.mxu0 0.0
        %2768 = vmatpush1.msra.mxu0 0.0
        %2769 = vmatprep.subr.mxu0 0.0
        %2770 = vmatpush1.msra.mxu0 0.0
        %2771 = vmatprep.subr.mxu0 0.0
        %2772 = vmatpush1.msra.mxu0 0.0
        %2773 = vmatprep.subr.mxu0 0.0
        %2774 = vmatpush1.msra.mxu0 0.0
        %2775 = vmatprep.subr.mxu0 0.0
        %2776 = vmatpush1.msra.mxu0 0.0
        %2777 = vmatprep.subr.mxu0 0.0
        %2778 = vmatpush1.msra.mxu0 0.0
        %2779 = vmatprep.subr.mxu0 0.0
        %2780 = vmatpush1.msra.mxu0 0.0
        %2781 = vmatprep.subr.mxu0 0.0
        %2782 = vmatpush1.msra.mxu0 0.0
        %2783 = vmatprep.subr.mxu0 0.0
        %2784 = vmatpush1.msra.mxu0 0.0
        %2785 = vmatprep.subr.mxu0 0.0
        %2786 = vmatpush1.msra.mxu0 0.0
        %2787 = vmatprep.subr.mxu0 0.0
        %2788 = vmatpush1.msra.mxu0 0.0
        %2789 = vmatprep.subr.mxu0 0.0
        %2790 = vmatpush1.msra.mxu0 0.0
        %2791 = vmatprep.subr.mxu0 0.0
        %2792 = vmatpush1.msra.mxu0 0.0
        %2793 = vmatprep.subr.mxu0 0.0
        %2794 = vmatpush1.msra.mxu0 0.0
        %2795 = vmatprep.subr.mxu0 0.0
        %2796 = vmatpush1.msra.mxu0 0.0
        %2797 = vmatprep.subr.mxu0 0.0
        %2798 = vmatpush1.msra.mxu0 0.0
        %2799 = vmatprep.subr.mxu0 0.0
        %2800 = vmatpush1.msra.mxu0 0.0
        %2801 = vmatprep.subr.mxu0 0.0
        %2802 = vmatpush1.msra.mxu0 0.0
        %2803 = vmatprep.subr.mxu0 0.0
        %2804 = vmatpush1.msra.mxu0 0.0
        %2805 = vmatprep.mubr.f32.mxu0 0.0
        %2806 = vmatmul.mubr.f32.gmra.mrb[0].mxu0 %v2718
        %v2807 = vpop.f32.mrb[0].mxu0
        %v2808 = vadd.f32 %v2680, %v2807
        %v2809 = vpop.f32.mrb[0].mxu0
        %v2810 = vadd.f32 %v2680, %v2809
        %2811 = vmatprep.mubr.f32.mxu0 0.0
        %2812 = vmatmul.mubr.f32.gmra.mrb[0].mxu0 %v2721
        %v2813 = vpop.f32.mrb[0].mxu0
        %v2814 = vadd.f32 %v2685, %v2813
        %v2815 = vpop.f32.mrb[0].mxu0
        %v2816 = vadd.f32 %v2685, %v2815
        %2817 = vmatprep.mubr.f32.mxu0 0.0
        %2818 = vmatmul.mubr.f32.gmra.mrb[0].mxu0 %v2724
        %v2819 = vpop.f32.mrb[0].mxu0
        %v2820 = vadd.f32 %v2690, %v2819
        %v2821 = vpop.f32.mrb[0].mxu0
        %v2822 = vadd.f32 %v2690, %v2821
        %2823 = vmatprep.mubr.f32.mxu0 0.0
        %2824 = vmatmul.mubr.f32.gmra.mrb[0].mxu0 %v2727
        %v2825 = vpop.f32.mrb[0].mxu0
        %v2826 = vadd.f32 %v2695, %v2825
        %v2827 = vpop.f32.mrb[0].mxu0
        %v2828 = vadd.f32 %v2695, %v2827
        %2829 = vmatprep.mubr.f32.mxu0 0.0
        %2830 = vmatmul.mubr.f32.gmra.mrb[0].mxu0 %v2730
        %v2831 = vpop.f32.mrb[0].mxu0
        %v2832 = vadd.f32 %v2700, %v2831
        %v2833 = vpop.f32.mrb[0].mxu0
        %v2834 = vadd.f32 %v2700, %v2833
        %2835 = vmatprep.mubr.f32.mxu0 0.0
        %2836 = vmatmul.mubr.f32.gmra.mrb[0].mxu0 %v2733
        %v2837 = vpop.f32.mrb[0].mxu0
        %v2838 = vadd.f32 %v2705, %v2837
        %v2839 = vpop.f32.mrb[0].mxu0
        %v2840 = vadd.f32 %v2705, %v2839
        %2841 = vmatprep.mubr.f32.mxu0 0.0
        %2842 = vmatmul.mubr.f32.gmra.mrb[0].mxu0 %v2736
        %v2843 = vpop.f32.mrb[0].mxu0
        %v2844 = vadd.f32 %v2710, %v2843
        %v2845 = vpop.f32.mrb[0].mxu0
        %v2846 = vadd.f32 %v2710, %v2845
        %2847 = vmatprep.mubr.f32.mxu0 0.0
        %2848 = vmatmul.mubr.f32.gmra.mrb[0].mxu0 %v2739
        %v2849 = vpop.f32.mrb[0].mxu0
        %v2850 = vadd.f32 %v2715, %v2849
        %v2851 = vpop.f32.mrb[0].mxu0
        %v2852 = vadd.f32 %v2715, %v2851
        %2853 = vdwg.mxu0
        %s2854 = sld [smem:[#allocation15 + $0x3]]
        %vm2855 = vcmp.ge.f32.partialorder %v2808, 0.0
        %vm2856 = vcmp.ge.f32.partialorder %v2810, 0.0
        %vm2857 = vcmp.ge.f32.partialorder %v2814, 0.0
        %vm2858 = vcmp.ge.f32.partialorder %v2816, 0.0
        %vm2859 = vcmp.ge.f32.partialorder %v2820, 0.0
        %vm2860 = vcmp.ge.f32.partialorder %v2822, 0.0
        %vm2861 = vcmp.ge.f32.partialorder %v2826, 0.0
        %vm2862 = vcmp.ge.f32.partialorder %v2828, 0.0
        %vm2863 = vcmp.ge.f32.partialorder %v2832, 0.0
        %vm2864 = vcmp.ge.f32.partialorder %v2834, 0.0
        %vm2865 = vcmp.ge.f32.partialorder %v2838, 0.0
        %vm2866 = vcmp.ge.f32.partialorder %v2840, 0.0
        %vm2867 = vcmp.ge.f32.partialorder %v2844, 0.0
        %vm2868 = vcmp.ge.f32.partialorder %v2846, 0.0
        %vm2869 = vcmp.ge.f32.partialorder %v2850, 0.0
        %vm2870 = vcmp.ge.f32.partialorder %v2852, 0.0
        %v2871 = vstv %s2854
        %v2872 = vmul.f32 %v2871, %v2808
        %v2873 = vmul.f32 %v2871, %v2810
        %v2874 = vmul.f32 %v2871, %v2814
        %v2875 = vmul.f32 %v2871, %v2816
        %v2876 = vmul.f32 %v2871, %v2820
        %v2877 = vmul.f32 %v2871, %v2822
        %v2878 = vmul.f32 %v2871, %v2826
        %v2879 = vmul.f32 %v2871, %v2828
        %v2880 = vmul.f32 %v2871, %v2832
        %v2881 = vmul.f32 %v2871, %v2834
        %v2882 = vmul.f32 %v2871, %v2838
        %v2883 = vmul.f32 %v2871, %v2840
        %v2884 = vmul.f32 %v2871, %v2844
        %v2885 = vmul.f32 %v2871, %v2846
        %v2886 = vmul.f32 %v2871, %v2850
        %v2887 = vmul.f32 %v2871, %v2852
        %v2888 = vsel %vm2855, %v2808, %v2872
        %v2889 = vsel %vm2856, %v2810, %v2873
        %v2890 = vsel %vm2857, %v2814, %v2874
        %v2891 = vsel %vm2858, %v2816, %v2875
        %v2892 = vsel %vm2859, %v2820, %v2876
        %v2893 = vsel %vm2860, %v2822, %v2877
        %v2894 = vsel %vm2861, %v2826, %v2878
        %v2895 = vsel %vm2862, %v2828, %v2879
        %v2896 = vsel %vm2863, %v2832, %v2880
        %v2897 = vsel %vm2864, %v2834, %v2881
        %v2898 = vsel %vm2865, %v2838, %v2882
        %v2899 = vsel %vm2866, %v2840, %v2883
        %v2900 = vsel %vm2867, %v2844, %v2884
        %v2901 = vsel %vm2868, %v2846, %v2885
        %v2902 = vsel %vm2869, %v2850, %v2886
        %v2903 = vsel %vm2870, %v2852, %v2887
        %v2904 = vld [vmem:[#allocation12 + $0x160] sm:$0xff]
        %v2905 = vld [vmem:[#allocation12 + $0x170] sm:$0xff]
        %v2906 = vld [vmem:[#allocation14 + $0x70] sm:$0xff]
        %v2907 = vld [vmem:[#allocation14 + $0x78] sm:$0xff]
        %2909 = vset.pattern.permute.xlu0 0
        %2910 = vperm.xlu0 %2909, %v2906
        %v2911 = vpop.permute.xlu0 %2910
        %2914 = vset.pattern.permute.xlu0 0
        %2915 = vperm.xlu0 %2914, %v2907
        %v2916 = vpop.permute.xlu0 %2915
        %vm2918 = vcmask 523264
        %v2920 = vsel %vm2918, %v2904, 0
        %v2923 = vsel %vm2918, %v2905, 0
        %2925 = vmatprep.subr.mxu0 %v2889
        %2926 = vmatpush1.msra.mxu0 %v2888
        %2927 = vmatprep.subr.mxu0 %v2891
        %2928 = vmatpush1.msra.mxu0 %v2890
        %2929 = vmatprep.subr.mxu0 %v2893
        %2930 = vmatpush1.msra.mxu0 %v2892
        %2931 = vmatprep.subr.mxu0 %v2895
        %2932 = vmatpush1.msra.mxu0 %v2894
        %2933 = vmatprep.subr.mxu0 %v2897
        %2934 = vmatpush1.msra.mxu0 %v2896
        %2935 = vmatprep.subr.mxu0 %v2899
        %2936 = vmatpush1.msra.mxu0 %v2898
        %2937 = vmatprep.subr.mxu0 %v2901
        %2938 = vmatpush1.msra.mxu0 %v2900
        %2939 = vmatprep.subr.mxu0 %v2903
        %2940 = vmatpush1.msra.mxu0 %v2902
        %2941 = vmatprep.subr.mxu0 0.0
        %2942 = vmatpush1.msra.mxu0 0.0
        %2943 = vmatprep.subr.mxu0 0.0
        %2944 = vmatpush1.msra.mxu0 0.0
        %2945 = vmatprep.subr.mxu0 0.0
        %2946 = vmatpush1.msra.mxu0 0.0
        %2947 = vmatprep.subr.mxu0 0.0
        %2948 = vmatpush1.msra.mxu0 0.0
        %2949 = vmatprep.subr.mxu0 0.0
        %2950 = vmatpush1.msra.mxu0 0.0
        %2951 = vmatprep.subr.mxu0 0.0
        %2952 = vmatpush1.msra.mxu0 0.0
        %2953 = vmatprep.subr.mxu0 0.0
        %2954 = vmatpush1.msra.mxu0 0.0
        %2955 = vmatprep.subr.mxu0 0.0
        %2956 = vmatpush1.msra.mxu0 0.0
        %2957 = vmatprep.subr.mxu0 0.0
        %2958 = vmatpush1.msra.mxu0 0.0
        %2959 = vmatprep.subr.mxu0 0.0
        %2960 = vmatpush1.msra.mxu0 0.0
        %2961 = vmatprep.subr.mxu0 0.0
        %2962 = vmatpush1.msra.mxu0 0.0
        %2963 = vmatprep.subr.mxu0 0.0
        %2964 = vmatpush1.msra.mxu0 0.0
        %2965 = vmatprep.subr.mxu0 0.0
        %2966 = vmatpush1.msra.mxu0 0.0
        %2967 = vmatprep.subr.mxu0 0.0
        %2968 = vmatpush1.msra.mxu0 0.0
        %2969 = vmatprep.subr.mxu0 0.0
        %2970 = vmatpush1.msra.mxu0 0.0
        %2971 = vmatprep.subr.mxu0 0.0
        %2972 = vmatpush1.msra.mxu0 0.0
        %2973 = vmatprep.subr.mxu0 0.0
        %2974 = vmatpush1.msra.mxu0 0.0
        %2975 = vmatprep.subr.mxu0 0.0
        %2976 = vmatpush1.msra.mxu0 0.0
        %2977 = vmatprep.subr.mxu0 0.0
        %2978 = vmatpush1.msra.mxu0 0.0
        %2979 = vmatprep.subr.mxu0 0.0
        %2980 = vmatpush1.msra.mxu0 0.0
        %2981 = vmatprep.subr.mxu0 0.0
        %2982 = vmatpush1.msra.mxu0 0.0
        %2983 = vmatprep.subr.mxu0 0.0
        %2984 = vmatpush1.msra.mxu0 0.0
        %2985 = vmatprep.subr.mxu0 0.0
        %2986 = vmatpush1.msra.mxu0 0.0
        %2987 = vmatprep.subr.mxu0 0.0
        %2988 = vmatpush1.msra.mxu0 0.0
        %2989 = vmatprep.mubr.f32.mxu0 0.0
        %2990 = vmatmul.mubr.f32.gmra.mrb[0].mxu0 %v2920
        %v2991 = vpop.f32.mrb[0].mxu0
        %v2992 = vadd.f32 %v2911, %v2991
        %v2993 = vpop.f32.mrb[0].mxu0
        %v2994 = vadd.f32 %v2911, %v2993
        %2995 = vmatprep.mubr.f32.mxu0 0.0
        %2996 = vmatmul.mubr.f32.gmra.mrb[0].mxu0 %v2923
        %v2997 = vpop.f32.mrb[0].mxu0
        %v2998 = vadd.f32 %v2916, %v2997
        %v2999 = vpop.f32.mrb[0].mxu0
        %v3000 = vadd.f32 %v2916, %v2999
        %3001 = vdwg.mxu0
        %v3002 = vsub.f32 0.0, %v2992
        %v3003 = vsub.f32 0.0, %v2994
        %v3004 = vsub.f32 0.0, %v2998
        %v3005 = vsub.f32 0.0, %v3000
        %v3006 = vmul.f32 %v3002, 1.442695
        %v3007 = vpow.pop %v3006
        %v3008 = vmul.f32 %v3003, 1.442695
        %v3009 = vpow.pop %v3008
        %v3010 = vmul.f32 %v3004, 1.442695
        %v3011 = vpow.pop %v3010
        %v3012 = vmul.f32 %v3005, 1.442695
        %v3013 = vpow.pop %v3012
        %v3014 = vadd.f32 %v3007, 1.0
        %v3015 = vadd.f32 %v3009, 1.0
        %v3016 = vadd.f32 %v3011, 1.0
        %v3017 = vadd.f32 %v3013, 1.0
        %v3018 = vrcp.pop %v3014
        %v3019 = vmul.f32 1.0, %v3018
        %v3020 = vrcp.pop %v3015
        %v3021 = vmul.f32 1.0, %v3020
        %v3022 = vrcp.pop %v3016
        %v3023 = vmul.f32 1.0, %v3022
        %v3024 = vrcp.pop %v3017
        %v3025 = vmul.f32 1.0, %v3024
        %3026 = vst [vmem:[%s337] sm:$0xff] %v3019
        %3027 = vst [vmem:[%s337 + $0x8] sm:$0xff] %v3021
        %3028 = vst [vmem:[%s337 + $0x10] sm:$0xff] %v3023
        %3029 = vst [vmem:[%s337 + $0x18] sm:$0xff] %v3025
        %s3030 = sand.u32 %s165, 1
        %s3031 = scalar_lea.sflag [#allocation7], %s3030
        %s3032 = sand.u32 %s165, 1
        %s3033 = smul.addr %s3032, 32
        %s3034 = scalar_lea.vmem [#allocation16], %s3033
        // Predicated region
        $region69: #{fsrcnn22_forward.1} parent=43 // pred_check
          %p3035 = pneg %p175
        $region70: #{fsrcnn22_forward.1} parent=43 // pred_check_branch
          %3037 = sbr.rel (%p3035) target = $region72
        $region71: #{fsrcnn22_forward.1} parent=43 // pred_region
          %s3039 = ssub.s32 512, 512
          %3040 = vsyncadd %s3031, %s3039
          %s3041 = smul.addr %s26, 4
          %s3042 = smul.addr %s3041, 128
          %s3043 = scalar_lea.hbm %s6, %s3042
          %s3044 = sshll.u32 %s3034, 4
          %s3045 = int_to_ptr.vmem [resolvable:$true] %s3044
          %3050 = dma.vmem_to_hbm [thread:$0]  %s3045, 512, %s3043, %s3031, 256, 256, 16
        $region72: #{fsrcnn22_forward.1} parent=43 // pred_fallthru
          _
      $region44: #{fsrcnn22_forward.1} parent=5 // pred_fallthru
        _
      %p3051 = scmp.le.s32.totalorder 2, %s21
      // Predicated region
      $region73: #{fsrcnn22_forward.1} parent=5 // pred_check
        %p3052 = pneg %p3051
      $region74: #{fsrcnn22_forward.1} parent=5 // pred_check_branch
        %3054 = sbr.rel (%p3052) target = $region76
      $region75: #{fsrcnn22_forward.1} parent=5 // pred_region
        %s3055 = ssub.s32 %s21, 2
        // Predicated region
        $region77: #{fsrcnn22_forward.1} parent=75 // pred_check
          %p3056 = pneg %p181
        $region78: #{fsrcnn22_forward.1} parent=75 // pred_check_branch
          %3058 = sbr.rel (%p3056) target = $region80
        $region79: #{fsrcnn22_forward.1} parent=75 // pred_region
          %s3059 = sand.u32 %s166, 1
          %s3060 = scalar_lea.sflag [#allocation7], %s3059
          %s3061 = sand.u32 %s166, 1
          %s3062 = smul.addr %s3061, 32
          %s3063 = scalar_lea.vmem [#allocation16], %s3062
          %3064 = dma.done %s3060, 512
        $region80: #{fsrcnn22_forward.1} parent=75 // pred_fallthru
          _
      $region76: #{fsrcnn22_forward.1} parent=5 // pred_fallthru
        _
    $region6: #{fsrcnn22_forward.1} parent=1 // loop_footer
      %s25 = sadd.s32 1, %s21
    $region7: #{fsrcnn22_forward.1} parent=1 // loop_footer_branch
      %20 = sbr.rel target = $region3
    $region8: #{fsrcnn22_forward.1} parent=1 // loop_exit
      _
    %3065 = vsyncpa [#allocation6], 1
    %s3066 = scalar_lea.sflag [#allocation6], 1
    %3067 = vsyncpa %s3066, 1
    %3068 = vsyncpa [#allocation10], 1
    %3069 = vsyncpa [#allocation13], 1
    %3070 = vsyncpa [#allocation7], 1
    %s3071 = scalar_lea.sflag [#allocation7], 1
    %3072 = vsyncpa %s3071, 1
    %3073 = vsyncpa [#allocation8], 1
    %s3074 = scalar_lea.sflag [#allocation8], 1
    %3075 = vsyncpa %s3074, 1

</llo_original>
